<compile_context>
chip_gen: v7x
topology: tpu7x:2x2x1
jax: 0.10.0
libtpu: 0.0.40
codegen_flags: <defaults>
</compile_context>

<pallas_src>
import functools

import jax
import jax.numpy as jnp
from jax.experimental import pallas as pl
from jax.experimental.pallas import tpu as pltpu


def mha_kernel(q_ref, k_ref, v_ref, mask_ref,
               wqkv_ref, bqkv_ref, wo_ref, bo_ref, gamma_ref, beta_ref,
               out_ref, *rest, n_heads, d_k):
    """One (batch b, query-tile t) grid step.

    `rest` is (attn_ref, kv_scratch) when attention probabilities are returned,
    else (kv_scratch,).
    """
    if len(rest) == 2:
        attn_ref, kv_ref = rest
    else:
        attn_ref = None
        (kv_ref,) = rest

    f32, bf16 = jnp.float32, jnp.bfloat16
    hd = n_heads * d_k

    # ---- K/V projections: computed once per batch element and cached in a
    # persistent bf16 VMEM scratch; reused for every query tile (t > 0). --------
    @pl.when(pl.program_id(1) == 0)
    def _():
        k_all = jnp.dot(k_ref[0], wqkv_ref[1], preferred_element_type=f32) + bqkv_ref[1]
        v_all = jnp.dot(v_ref[0], wqkv_ref[2], preferred_element_type=f32) + bqkv_ref[2]
        kv_ref[0] = k_all.astype(bf16)
        kv_ref[1] = v_all.astype(bf16)

    q_in = q_ref[0]                                    # [tq, d_model] f32 (residual)
    tq = q_in.shape[0]
    S = k_ref.shape[1]

    # Q projection: the 1/sqrt(d_k) scale is already folded into wqkv[0]/bqkv[0].
    q_all = jnp.dot(q_in.astype(bf16), wqkv_ref[0],
                    preferred_element_type=f32) + bqkv_ref[0]          # [tq, hd]

    # ---- head-batched scaled dot-product attention ----------------------------
    q_h = q_all.reshape(tq, n_heads, d_k).transpose(1, 0, 2)           # [H, tq, dk]
    k_h = kv_ref[0].reshape(S, n_heads, d_k).transpose(1, 0, 2)        # [H, S , dk] bf16
    v_h = kv_ref[1].reshape(S, n_heads, d_k).transpose(1, 0, 2)        # [H, S , dk] bf16

    scores = jnp.einsum('hqd,hkd->hqk', q_h.astype(bf16), k_h,
                        preferred_element_type=f32)                    # [H, tq, S] f32
    mask = mask_ref[0]                                 # [H or 1, tq, S] int8 (broadcasts)
    scores = jnp.where(mask != 0, jnp.float32(-1e9), scores)

    m = jnp.max(scores, axis=-1, keepdims=True)
    p = jnp.exp(scores - m)                            # f32 (fully-masked rows -> uniform,
    denom = jnp.sum(p, axis=-1, keepdims=True)         #  matching the reference softmax)

    if attn_ref is not None:
        attn = p / denom                               # exact normalize for returned probs
        attn_ref[0] = attn.astype(attn_ref.dtype)      # single contiguous bf16 store
        ctx = jnp.einsum('hqk,hkd->hqd', attn.astype(bf16), v_h,
                         preferred_element_type=f32)                   # [H, tq, dk]
    else:
        # Deferred normalization: scale the [H,tq,dk] context instead of the
        # [H,tq,S] probabilities (S/d_k less VPU work); approx recip uses the EUP.
        ctx = jnp.einsum('hqk,hkd->hqd', p.astype(bf16), v_h,
                         preferred_element_type=f32)
        ctx = ctx * pl.reciprocal(denom, approx=True)

    context = ctx.transpose(1, 0, 2).reshape(tq, hd)                   # [tq, hd]

    # ---- output projection + residual + LayerNorm (f32) -----------------------
    proj = jnp.dot(context.astype(bf16), wo_ref[...],
                   preferred_element_type=f32) + bo_ref[...]           # [tq, d_model]
    x = proj + q_in
    mean = jnp.mean(x, axis=-1, keepdims=True)
    var = jnp.mean((x - mean) ** 2, axis=-1, keepdims=True)
    xn = (x - mean) * jax.lax.rsqrt(var + 1e-5)
    out_ref[0] = xn * gamma_ref[...] + beta_ref[...]


def pack_mha_params(params, *, d_k):
    """One-time parameter packing (call at setup, NOT per forward pass).

    Stacks the three projections into a single [3, d_model, hd] bf16 weight and
    [3, 1, hd] f32 bias (one DMA + BlockSpec each) and folds the 1/sqrt(d_k)
    attention scale into the Q projection.
    """
    wq, bq, wk, bk, wv, bv, wo, bo, gamma, beta = params
    f32 = jnp.float32
    scale = float(d_k) ** -0.5
    w_qkv = jnp.stack([wq.astype(f32) * scale, wk.astype(f32), wv.astype(f32)],
                      axis=0).astype(jnp.bfloat16)                     # [3, d_model, hd]
    b_qkv = jnp.stack([bq.astype(f32) * scale, bk.astype(f32), bv.astype(f32)],
                      axis=0)                                          # [3, 1, hd] f32
    return (w_qkv, b_qkv, wo.astype(jnp.bfloat16), bo.astype(f32),
            gamma.astype(f32), beta.astype(f32))


def multi_head_attention(Q, K, V, edge_mask, packed_params, *, n_heads, d_k,
                         q_tile=None, return_attn=True,
                         attn_dtype=jnp.bfloat16,
                         single_buffer_invariants=True,
                         vmem_limit_bytes=64 * 1024 * 1024):
    """Q, K, V: [B, S, d_model].  edge_mask: [B, H or 1, S, S] (nonzero = masked).
    packed_params: output of pack_mha_params()."""
    B, S, d_model = Q.shape
    hd = n_heads * d_k
    w_qkv, b_qkv, wo, bo, gamma, beta = packed_params

    Q = Q.astype(jnp.float32)                 # residual / LayerNorm stay f32
    K = K.astype(jnp.bfloat16)                # MXU-operand only -> half the DMA / VMEM
    V = V.astype(jnp.bfloat16)
    if edge_mask.dtype != jnp.int8:
        edge_mask = (edge_mask != 0).astype(jnp.int8)
    Hm = edge_mask.shape[1]
    assert Hm in (1, n_heads) and edge_mask.shape == (B, Hm, S, S)

    if q_tile is None:
        q_tile = S if S <= 512 else 512
    assert S % q_tile == 0, "q_tile must divide the sequence length"
    n_qt = S // q_tile

    kernel = functools.partial(mha_kernel, n_heads=n_heads, d_k=d_k)

    # Grid-invariant / per-batch-only operands gain nothing from double buffering:
    # single-buffer them to halve their VMEM residency (biggest lever on v7x).
    inv = {"pipeline_mode": pl.Buffered(1)} if single_buffer_invariants else {}

    in_specs = [
        pl.BlockSpec((1, q_tile, d_model), lambda b, t: (b, t, 0)),          # Q tile (f32)
        pl.BlockSpec((1, S, d_model), lambda b, t: (b, 0, 0), **inv),        # K (bf16)
        pl.BlockSpec((1, S, d_model), lambda b, t: (b, 0, 0), **inv),        # V (bf16)
        pl.BlockSpec((1, Hm, q_tile, S), lambda b, t: (b, 0, t, 0)),         # mask (int8)
        pl.BlockSpec((3, d_model, hd), lambda b, t: (0, 0, 0), **inv),       # W_qkv (bf16)
        pl.BlockSpec((3, 1, hd), lambda b, t: (0, 0, 0), **inv),             # b_qkv (f32)
        pl.BlockSpec((hd, d_model), lambda b, t: (0, 0), **inv),             # W_out (bf16)
        pl.BlockSpec((1, d_model), lambda b, t: (0, 0), **inv),              # b_out
        pl.BlockSpec((1, d_model), lambda b, t: (0, 0), **inv),              # ln gamma
        pl.BlockSpec((1, d_model), lambda b, t: (0, 0), **inv),              # ln beta
    ]

    out_shapes = [jax.ShapeDtypeStruct((B, S, d_model), jnp.float32)]
    out_specs = [pl.BlockSpec((1, q_tile, d_model), lambda b, t: (b, t, 0))]
    if return_attn:
        out_shapes.append(jax.ShapeDtypeStruct((B, n_heads, S, S), attn_dtype))
        out_specs.append(pl.BlockSpec((1, n_heads, q_tile, S), lambda b, t: (b, 0, t, 0)))

    outs = pl.pallas_call(
        kernel,
        out_shape=tuple(out_shapes),
        grid_spec=pltpu.PrefetchScalarGridSpec(
            num_scalar_prefetch=0,
            grid=(B, n_qt),
            in_specs=in_specs,
            out_specs=tuple(out_specs),
            # Persistent bf16 cache of the K/V projections for the current batch
            # element; written at t == 0, reused by every query tile.
            scratch_shapes=[pltpu.VMEM((2, S, hd), jnp.bfloat16)],
        ),
        compiler_params=pltpu.CompilerParams(
            # The K/V scratch is carried across the query-tile axis, so only the
            # batch axis may be sharded across TensorCores (keep B >= 2 on v7x).
            dimension_semantics=("parallel", "arbitrary"),
            # v5e/v6e have 128 MiB physical VMEM (can raise toward 96-128 MiB for
            # larger q_tile); v7x has 64 MiB -> keep at/below 64 MiB there.
            vmem_limit_bytes=vmem_limit_bytes,
        ),
    )(Q, K, V, edge_mask, w_qkv, b_qkv, wo, bo, gamma, beta)

    if return_attn:
        return outs
    return outs[0], None


def reference_mha(Q, K, V, edge_mask, params, *, n_heads, d_k):
    """Pure-JAX reference mirroring the PyTorch module (bf16 MXU operands / f32
    accumulation like the kernel so tolerances stay tight)."""
    wq, bq, wk, bk, wv, bv, wo, bo, gamma, beta = params
    B, S, d_model = Q.shape
    bf16, f32 = jnp.bfloat16, jnp.float32

    def proj(x, w, b):
        return jnp.einsum('bsd,dh->bsh', x.astype(bf16), w.astype(bf16),
                          preferred_element_type=f32) + b

    def split_heads(x):
        return x.reshape(B, S, n_heads, d_k).transpose(0, 2, 1, 3)     # [B,H,S,dk]

    q_s = split_heads(proj(Q, wq, bq))
    k_s = split_heads(proj(K, wk, bk))
    v_s = split_heads(proj(V, wv, bv))

    scores = jnp.einsum('bhqd,bhkd->bhqk', q_s.astype(bf16), k_s.astype(bf16),
                        preferred_element_type=f32) / jnp.sqrt(f32(d_k))
    scores = jnp.where(edge_mask != 0, -1e9, scores)
    attn = jax.nn.softmax(scores, axis=-1)
    context = jnp.einsum('bhqk,bhkd->bhqd', attn.astype(bf16), v_s.astype(bf16),
                         preferred_element_type=f32)
    context = context.transpose(0, 2, 1, 3).reshape(B, S, n_heads * d_k)
    output = jnp.einsum('bsh,hd->bsd', context.astype(bf16), wo.astype(bf16),
                        preferred_element_type=f32) + bo

    x = output + Q
    mean = jnp.mean(x, axis=-1, keepdims=True)
    var = jnp.mean((x - mean) ** 2, axis=-1, keepdims=True)
    out = (x - mean) / jnp.sqrt(var + 1e-5) * gamma + beta
    return out, attn


def _make_params(key, d_model, n_heads, d_k):
    """Deterministic synthetic parameters.  Projection weights are stored
    [in_features, out_features] (x @ W + b == torch's x @ W^T + b) in bf16;
    biases / LayerNorm params stay f32."""
    hd = n_heads * d_k
    ks = jax.random.split(key, 8)
    wq = (0.1 * jax.random.normal(ks[0], (d_model, hd), jnp.float32)).astype(jnp.bfloat16)
    bq = 0.1 * jax.random.normal(ks[1], (1, hd), jnp.float32)
    wk = (0.1 * jax.random.normal(ks[2], (d_model, hd), jnp.float32)).astype(jnp.bfloat16)
    bk = 0.1 * jax.random.normal(ks[3], (1, hd), jnp.float32)
    wv = (0.1 * jax.random.normal(ks[4], (d_model, hd), jnp.float32)).astype(jnp.bfloat16)
    bv = 0.1 * jax.random.normal(ks[5], (1, hd), jnp.float32)
    wo = (0.1 * jax.random.normal(ks[6], (hd, d_model), jnp.float32)).astype(jnp.bfloat16)
    bo = 0.1 * jax.random.normal(ks[7], (1, d_model), jnp.float32)
    gamma = jnp.ones((1, d_model), jnp.float32)
    beta = jnp.zeros((1, d_model), jnp.float32)
    return (wq, bq, wk, bk, wv, bv, wo, bo, gamma, beta)


if __name__ == "__main__":
    key = jax.random.PRNGKey(0)

    # ---- primary SMALL test (module-consistent shapes) -------------------------
    B, S, d_model, n_heads, d_k = 2, 8, 32, 4, 8
    k_in, k_par = jax.random.split(key)
    kq, kk, kv, km = jax.random.split(k_in, 4)
    Q = jax.random.normal(kq, (B, S, d_model), jnp.float32)
    K = jax.random.normal(kk, (B, S, d_model), jnp.float32)
    V = jax.random.normal(kv, (B, S, d_model), jnp.float32)
    edge_mask = (jax.random.uniform(km, (B, n_heads, S, S)) < 0.2).astype(jnp.int8)
    params = _make_params(k_par, d_model, n_heads, d_k)
    packed = pack_mha_params(params, d_k=d_k)     # one-time; hoisted out of fwd path

    single_buf = True
    try:
        out, attn = multi_head_attention(Q, K, V, edge_mask, packed,
                                         n_heads=n_heads, d_k=d_k,
                                         single_buffer_invariants=True)
        jax.block_until_ready((out, attn))
    except Exception:
        # pl.Buffered(1) single-buffering of grid-invariant operands is a pure
        # VMEM optimization; degrade gracefully if this build rejects it.
        single_buf = False
        out, attn = multi_head_attention(Q, K, V, edge_mask, packed,
                                         n_heads=n_heads, d_k=d_k,
                                         single_buffer_invariants=False)
        jax.block_until_ready((out, attn))

    out_ref, attn_ref = reference_mha(Q, K, V, edge_mask, params,
                                      n_heads=n_heads, d_k=d_k)
    assert jnp.allclose(out, out_ref, atol=1e-2, rtol=1e-2), "small: output mismatch"
    assert jnp.allclose(attn.astype(jnp.float32), attn_ref, atol=1e-2, rtol=5e-2), \
        "small: attn mismatch"

    # return_attn=False path (deferred normalization + approx reciprocal).
    out_na, attn_na = multi_head_attention(Q, K, V, edge_mask, packed,
                                           n_heads=n_heads, d_k=d_k,
                                           return_attn=False,
                                           single_buffer_invariants=single_buf)
    jax.block_until_ready(out_na)
    assert attn_na is None
    assert jnp.allclose(out_na, out_ref, atol=1e-2, rtol=1e-2), "no-attn: output mismatch"

    # ---- realistic-tiling test: S and d_model multiples of 128, n_qt > 1 so the
    # per-batch K/V projection cache is exercised, head-invariant [B,1,S,S] mask.
    B2, S2, d_model2, n_heads2, d_k2 = 2, 256, 128, 4, 32
    k_in2, k_par2 = jax.random.split(jax.random.fold_in(key, 1))
    kq2, kk2, kv2, km2 = jax.random.split(k_in2, 4)
    Q2 = jax.random.normal(kq2, (B2, S2, d_model2), jnp.float32)
    K2 = jax.random.normal(kk2, (B2, S2, d_model2), jnp.float32)
    V2 = jax.random.normal(kv2, (B2, S2, d_model2), jnp.float32)
    mask2 = (jax.random.uniform(km2, (B2, 1, S2, S2)) < 0.2).astype(jnp.int8)
    params2 = _make_params(k_par2, d_model2, n_heads2, d_k2)
    packed2 = pack_mha_params(params2, d_k=d_k2)

    out2, attn2 = multi_head_attention(Q2, K2, V2, mask2, packed2,
                                       n_heads=n_heads2, d_k=d_k2, q_tile=128,
                                       single_buffer_invariants=single_buf)
    jax.block_until_ready((out2, attn2))
    out2_ref, attn2_ref = reference_mha(Q2, K2, V2, mask2, params2,
                                        n_heads=n_heads2, d_k=d_k2)
    # Slack covers bf16 operand rounding, scale-folding reassociation and the
    # bf16-stored attention probabilities.
    assert jnp.allclose(out2, out2_ref, atol=3e-2, rtol=3e-2), "tiled: output mismatch"
    assert jnp.allclose(attn2.astype(jnp.float32), attn2_ref, atol=1e-2, rtol=5e-2), \
        "tiled: attn mismatch"

    print("KERNEL_OK")
</pallas_src>

<mosaic_0001>
module attributes {stable_mosaic.version = 11 : i64} {
  func.func @mha_kernel(%arg0: i32, %arg1: i32, %arg2: memref<1x8x32xf32, #tpu.memory_space<vmem>>, %arg3: memref<1x8x32xbf16, #tpu.memory_space<vmem>>, %arg4: memref<1x8x32xbf16, #tpu.memory_space<vmem>>, %arg5: memref<1x4x8x8xi8, #tpu.memory_space<vmem>>, %arg6: memref<3x32x32xbf16, #tpu.memory_space<vmem>>, %arg7: memref<3x1x32xf32, #tpu.memory_space<vmem>>, %arg8: memref<32x32xbf16, #tpu.memory_space<vmem>>, %arg9: memref<1x32xf32, #tpu.memory_space<vmem>>, %arg10: memref<1x32xf32, #tpu.memory_space<vmem>>, %arg11: memref<1x32xf32, #tpu.memory_space<vmem>>, %arg12: memref<1x8x32xf32, #tpu.memory_space<vmem>>, %arg13: memref<1x4x8x8xbf16, #tpu.memory_space<vmem>>, %arg14: memref<2x8x32xbf16, #tpu.memory_space<vmem>>) attributes {dimension_semantics = [#tpu.dimension_semantics<parallel>, #tpu.dimension_semantics<arbitrary>], iteration_bounds = array<i64: 2, 1>, scalar_prefetch = 0 : i64, scratch_operands = 1 : i64, tpu.core_type = #tpu.core_type<tc>, window_params = [{transform_indices = @transform_0, window_bounds = array<i64: 1, 8, 32>}, {pipeline_mode = #tpu.pipeline_mode<synchronous>, transform_indices = @transform_1, window_bounds = array<i64: 1, 8, 32>}, {pipeline_mode = #tpu.pipeline_mode<synchronous>, transform_indices = @transform_2, window_bounds = array<i64: 1, 8, 32>}, {transform_indices = @transform_3, window_bounds = array<i64: 1, 4, 8, 8>}, {pipeline_mode = #tpu.pipeline_mode<synchronous>, transform_indices = @transform_4, window_bounds = array<i64: 3, 32, 32>}, {pipeline_mode = #tpu.pipeline_mode<synchronous>, transform_indices = @transform_5, window_bounds = array<i64: 3, 1, 32>}, {pipeline_mode = #tpu.pipeline_mode<synchronous>, transform_indices = @transform_6, window_bounds = array<i64: 32, 32>}, {pipeline_mode = #tpu.pipeline_mode<synchronous>, transform_indices = @transform_7, window_bounds = array<i64: 1, 32>}, {pipeline_mode = #tpu.pipeline_mode<synchronous>, transform_indices = @transform_8, window_bounds = array<i64: 1, 32>}, {pipeline_mode = #tpu.pipeline_mode<synchronous>, transform_indices = @transform_9, window_bounds = array<i64: 1, 32>}, {transform_indices = @transform_10, window_bounds = array<i64: 1, 8, 32>}, {transform_indices = @transform_11, window_bounds = array<i64: 1, 4, 8, 8>}]} {
    %c0_i32 = arith.constant 0 : i32
    %0 = arith.cmpi eq, %arg1, %c0_i32 : i32
    %1 = arith.extui %0 : i1 to i32
    %c0_i32_0 = arith.constant 0 : i32
    %2 = arith.cmpi ne, %1, %c0_i32_0 : i32
    scf.if %2 {
      %c0_44 = arith.constant 0 : index
      %c0_45 = arith.constant 0 : index
      %c0_46 = arith.constant 0 : index
      %82 = vector.load %arg3[%c0_44, %c0_45, %c0_46] : memref<1x8x32xbf16, #tpu.memory_space<vmem>>, vector<1x8x32xbf16>
      %83 = vector.shape_cast %82 : vector<1x8x32xbf16> to vector<8x32xbf16>
      %c1_47 = arith.constant 1 : index
      %c0_48 = arith.constant 0 : index
      %c0_49 = arith.constant 0 : index
      %84 = vector.load %arg6[%c1_47, %c0_48, %c0_49] : memref<3x32x32xbf16, #tpu.memory_space<vmem>>, vector<1x32x32xbf16>
      %85 = vector.shape_cast %84 : vector<1x32x32xbf16> to vector<32x32xbf16>
      %cst_50 = arith.constant dense<0.000000e+00> : vector<8x32xf32>
      %86 = tpu.matmul %83, %85, %cst_50 {dimension_numbers = #tpu.dot_dimension_numbers<[1], [0], [0], [1], [0, 0, 1, 1], [], []>} : vector<8x32xbf16>, vector<32x32xbf16>, vector<8x32xf32> -> vector<8x32xf32>
      %c1_51 = arith.constant 1 : index
      %c0_52 = arith.constant 0 : index
      %c0_53 = arith.constant 0 : index
      %87 = vector.load %arg7[%c1_51, %c0_52, %c0_53] : memref<3x1x32xf32, #tpu.memory_space<vmem>>, vector<1x1x32xf32>
      %88 = vector.shape_cast %87 : vector<1x1x32xf32> to vector<1x32xf32>
      %89 = vector.broadcast %88 : vector<1x32xf32> to vector<8x32xf32>
      %90 = arith.addf %86, %89 : vector<8x32xf32>
      %c0_54 = arith.constant 0 : index
      %c0_55 = arith.constant 0 : index
      %c0_56 = arith.constant 0 : index
      %91 = vector.load %arg4[%c0_54, %c0_55, %c0_56] : memref<1x8x32xbf16, #tpu.memory_space<vmem>>, vector<1x8x32xbf16>
      %92 = vector.shape_cast %91 : vector<1x8x32xbf16> to vector<8x32xbf16>
      %c2 = arith.constant 2 : index
      %c0_57 = arith.constant 0 : index
      %c0_58 = arith.constant 0 : index
      %93 = vector.load %arg6[%c2, %c0_57, %c0_58] : memref<3x32x32xbf16, #tpu.memory_space<vmem>>, vector<1x32x32xbf16>
      %94 = vector.shape_cast %93 : vector<1x32x32xbf16> to vector<32x32xbf16>
      %cst_59 = arith.constant dense<0.000000e+00> : vector<8x32xf32>
      %95 = tpu.matmul %92, %94, %cst_59 {dimension_numbers = #tpu.dot_dimension_numbers<[1], [0], [0], [1], [0, 0, 1, 1], [], []>} : vector<8x32xbf16>, vector<32x32xbf16>, vector<8x32xf32> -> vector<8x32xf32>
      %c2_60 = arith.constant 2 : index
      %c0_61 = arith.constant 0 : index
      %c0_62 = arith.constant 0 : index
      %96 = vector.load %arg7[%c2_60, %c0_61, %c0_62] : memref<3x1x32xf32, #tpu.memory_space<vmem>>, vector<1x1x32xf32>
      %97 = vector.shape_cast %96 : vector<1x1x32xf32> to vector<1x32xf32>
      %98 = vector.broadcast %97 : vector<1x32xf32> to vector<8x32xf32>
      %99 = arith.addf %95, %98 : vector<8x32xf32>
      %100 = arith.truncf %90 : vector<8x32xf32> to vector<8x32xbf16>
      %c0_63 = arith.constant 0 : index
      %c0_64 = arith.constant 0 : index
      %c0_65 = arith.constant 0 : index
      %101 = vector.load %arg14[%c0_63, %c0_64, %c0_65] : memref<2x8x32xbf16, #tpu.memory_space<vmem>>, vector<1x8x32xbf16>
      %102 = vector.shape_cast %101 : vector<1x8x32xbf16> to vector<8x32xbf16>
      %103 = vector.shape_cast %100 : vector<8x32xbf16> to vector<1x8x32xbf16>
      tpu.vector_store %arg14[%c0_63, %c0_64, %c0_65], %103 {strides = array<i32>} : memref<2x8x32xbf16, #tpu.memory_space<vmem>>, vector<1x8x32xbf16>,
      %104 = arith.truncf %99 : vector<8x32xf32> to vector<8x32xbf16>
      %c1_66 = arith.constant 1 : index
      %c0_67 = arith.constant 0 : index
      %c0_68 = arith.constant 0 : index
      %105 = vector.load %arg14[%c1_66, %c0_67, %c0_68] : memref<2x8x32xbf16, #tpu.memory_space<vmem>>, vector<1x8x32xbf16>
      %106 = vector.shape_cast %105 : vector<1x8x32xbf16> to vector<8x32xbf16>
      %107 = vector.shape_cast %104 : vector<8x32xbf16> to vector<1x8x32xbf16>
      tpu.vector_store %arg14[%c1_66, %c0_67, %c0_68], %107 {strides = array<i32>} : memref<2x8x32xbf16, #tpu.memory_space<vmem>>, vector<1x8x32xbf16>,
    } else {
    }
    %c0 = arith.constant 0 : index
    %c0_1 = arith.constant 0 : index
    %c0_2 = arith.constant 0 : index
    %3 = vector.load %arg2[%c0, %c0_1, %c0_2] : memref<1x8x32xf32, #tpu.memory_space<vmem>>, vector<1x8x32xf32>
    %4 = vector.shape_cast %3 : vector<1x8x32xf32> to vector<8x32xf32>
    %5 = arith.truncf %4 : vector<8x32xf32> to vector<8x32xbf16>
    %c0_3 = arith.constant 0 : index
    %c0_4 = arith.constant 0 : index
    %c0_5 = arith.constant 0 : index
    %6 = vector.load %arg6[%c0_3, %c0_4, %c0_5] : memref<3x32x32xbf16, #tpu.memory_space<vmem>>, vector<1x32x32xbf16>
    %7 = vector.shape_cast %6 : vector<1x32x32xbf16> to vector<32x32xbf16>
    %cst = arith.constant dense<0.000000e+00> : vector<8x32xf32>
    %8 = tpu.matmul %5, %7, %cst {dimension_numbers = #tpu.dot_dimension_numbers<[1], [0], [0], [1], [0, 0, 1, 1], [], []>} : vector<8x32xbf16>, vector<32x32xbf16>, vector<8x32xf32> -> vector<8x32xf32>
    %c0_6 = arith.constant 0 : index
    %c0_7 = arith.constant 0 : index
    %c0_8 = arith.constant 0 : index
    %9 = vector.load %arg7[%c0_6, %c0_7, %c0_8] : memref<3x1x32xf32, #tpu.memory_space<vmem>>, vector<1x1x32xf32>
    %10 = vector.shape_cast %9 : vector<1x1x32xf32> to vector<1x32xf32>
    %11 = vector.broadcast %10 : vector<1x32xf32> to vector<8x32xf32>
    %12 = arith.addf %8, %11 : vector<8x32xf32>
    %13 = vector.shape_cast %12 : vector<8x32xf32> to vector<8x4x8xf32>
    %14 = tpu.transpose %13, [1, 0, 2] : vector<8x4x8xf32> -> vector<4x8x8xf32>
    %c0_9 = arith.constant 0 : index
    %c0_10 = arith.constant 0 : index
    %c0_11 = arith.constant 0 : index
    %15 = vector.load %arg14[%c0_9, %c0_10, %c0_11] : memref<2x8x32xbf16, #tpu.memory_space<vmem>>, vector<1x8x32xbf16>
    %16 = vector.shape_cast %15 : vector<1x8x32xbf16> to vector<8x32xbf16>
    %17 = vector.shape_cast %16 : vector<8x32xbf16> to vector<8x4x8xbf16>
    %18 = tpu.transpose %17, [1, 0, 2] : vector<8x4x8xbf16> -> vector<4x8x8xbf16>
    %c1 = arith.constant 1 : index
    %c0_12 = arith.constant 0 : index
    %c0_13 = arith.constant 0 : index
    %19 = vector.load %arg14[%c1, %c0_12, %c0_13] : memref<2x8x32xbf16, #tpu.memory_space<vmem>>, vector<1x8x32xbf16>
    %20 = vector.shape_cast %19 : vector<1x8x32xbf16> to vector<8x32xbf16>
    %21 = vector.shape_cast %20 : vector<8x32xbf16> to vector<8x4x8xbf16>
    %22 = tpu.transpose %21, [1, 0, 2] : vector<8x4x8xbf16> -> vector<4x8x8xbf16>
    %23 = arith.truncf %14 : vector<4x8x8xf32> to vector<4x8x8xbf16>
    "tpu.trace_start"() <{level = 10 : i32, message = "hqd,hkd->hqk"}> : () -> ()
    %cst_14 = arith.constant dense<0.000000e+00> : vector<4x8x8xf32>
    %24 = tpu.matmul %23, %18, %cst_14 {dimension_numbers = #tpu.dot_dimension_numbers<[2], [2], [1], [1], [0, 0, 0, 1, 1, 1], [0], [0]>} : vector<4x8x8xbf16>, vector<4x8x8xbf16>, vector<4x8x8xf32> -> vector<4x8x8xf32>
    "tpu.trace_stop"() : () -> ()
    %c0_15 = arith.constant 0 : index
    %c0_16 = arith.constant 0 : index
    %c0_17 = arith.constant 0 : index
    %c0_18 = arith.constant 0 : index
    %25 = vector.load %arg5[%c0_15, %c0_16, %c0_17, %c0_18] : memref<1x4x8x8xi8, #tpu.memory_space<vmem>>, vector<1x4x8x8xi8>
    %26 = vector.shape_cast %25 : vector<1x4x8x8xi8> to vector<4x8x8xi8>
    %c0_i8 = arith.constant 0 : i8
    %27 = vector.broadcast %c0_i8 : i8 to vector<4x8x8xi8>
    %28 = arith.cmpi ne, %26, %27 : vector<4x8x8xi8>
    %cst_19 = arith.constant -1.000000e+09 : f32
    %29 = vector.broadcast %cst_19 : f32 to vector<4x8x8xf32>
    %30 = arith.select %28, %29, %24 : vector<4x8x8xi1>, vector<4x8x8xf32>
    %cst_20 = arith.constant dense<0xFF800000> : vector<4x8xf32>
    %31 = vector.multi_reduction <maximumf>, %30, %cst_20 [2] : vector<4x8x8xf32> to vector<4x8xf32>
    %32 = vector.shape_cast %31 : vector<4x8xf32> to vector<4x8x1xf32>
    %33 = vector.broadcast %32 : vector<4x8x1xf32> to vector<4x8x8xf32>
    %34 = arith.subf %30, %33 : vector<4x8x8xf32>
    %35 = math.exp %34 : vector<4x8x8xf32>
    %cst_21 = arith.constant dense<0.000000e+00> : vector<4x8xf32>
    %36 = vector.multi_reduction <add>, %35, %cst_21 [2] : vector<4x8x8xf32> to vector<4x8xf32>
    %37 = vector.shape_cast %36 : vector<4x8xf32> to vector<4x8x1xf32>
    %38 = vector.broadcast %37 : vector<4x8x1xf32> to vector<4x8x8xf32>
    %39 = arith.divf %35, %38 : vector<4x8x8xf32>
    %40 = arith.truncf %39 : vector<4x8x8xf32> to vector<4x8x8xbf16>
    %c0_22 = arith.constant 0 : index
    %c0_23 = arith.constant 0 : index
    %c0_24 = arith.constant 0 : index
    %c0_25 = arith.constant 0 : index
    %41 = vector.load %arg13[%c0_22, %c0_23, %c0_24, %c0_25] : memref<1x4x8x8xbf16, #tpu.memory_space<vmem>>, vector<1x4x8x8xbf16>
    %42 = vector.shape_cast %41 : vector<1x4x8x8xbf16> to vector<4x8x8xbf16>
    %43 = vector.shape_cast %40 : vector<4x8x8xbf16> to vector<1x4x8x8xbf16>
    tpu.vector_store %arg13[%c0_22, %c0_23, %c0_24, %c0_25], %43 {strides = array<i32>} : memref<1x4x8x8xbf16, #tpu.memory_space<vmem>>, vector<1x4x8x8xbf16>,
    %44 = arith.truncf %39 : vector<4x8x8xf32> to vector<4x8x8xbf16>
    "tpu.trace_start"() <{level = 10 : i32, message = "hqk,hkd->hqd"}> : () -> ()
    %cst_26 = arith.constant dense<0.000000e+00> : vector<4x8x8xf32>
    %45 = tpu.matmul %44, %22, %cst_26 {dimension_numbers = #tpu.dot_dimension_numbers<[2], [1], [1], [2], [0, 0, 0, 1, 1, 2], [0], [0]>} : vector<4x8x8xbf16>, vector<4x8x8xbf16>, vector<4x8x8xf32> -> vector<4x8x8xf32>
    "tpu.trace_stop"() : () -> ()
    %46 = tpu.transpose %45, [1, 0, 2] : vector<4x8x8xf32> -> vector<8x4x8xf32>
    %47 = vector.shape_cast %46 : vector<8x4x8xf32> to vector<8x32xf32>
    %48 = arith.truncf %47 : vector<8x32xf32> to vector<8x32xbf16>
    %c0_27 = arith.constant 0 : index
    %c0_28 = arith.constant 0 : index
    %49 = vector.load %arg8[%c0_27, %c0_28] : memref<32x32xbf16, #tpu.memory_space<vmem>>, vector<32x32xbf16>
    %cst_29 = arith.constant dense<0.000000e+00> : vector<8x32xf32>
    %50 = tpu.matmul %48, %49, %cst_29 {dimension_numbers = #tpu.dot_dimension_numbers<[1], [0], [0], [1], [0, 0, 1, 1], [], []>} : vector<8x32xbf16>, vector<32x32xbf16>, vector<8x32xf32> -> vector<8x32xf32>
    %c0_30 = arith.constant 0 : index
    %c0_31 = arith.constant 0 : index
    %51 = vector.load %arg9[%c0_30, %c0_31] : memref<1x32xf32, #tpu.memory_space<vmem>>, vector<1x32xf32>
    %52 = vector.broadcast %51 : vector<1x32xf32> to vector<8x32xf32>
    %53 = arith.addf %50, %52 : vector<8x32xf32>
    %54 = arith.addf %53, %4 : vector<8x32xf32>
    %cst_32 = arith.constant dense<0.000000e+00> : vector<8xf32>
    %55 = vector.multi_reduction <add>, %54, %cst_32 [1] : vector<8x32xf32> to vector<8xf32>
    %56 = vector.shape_cast %55 : vector<8xf32> to vector<8x1xf32>
    %cst_33 = arith.constant 3.200000e+01 : f32
    %57 = vector.broadcast %cst_33 : f32 to vector<8x1xf32>
    %58 = arith.divf %56, %57 : vector<8x1xf32>
    %59 = vector.broadcast %58 : vector<8x1xf32> to vector<8x32xf32>
    %60 = arith.subf %54, %59 : vector<8x32xf32>
    %61 = arith.mulf %60, %60 : vector<8x32xf32>
    %cst_34 = arith.constant dense<0.000000e+00> : vector<8xf32>
    %62 = vector.multi_reduction <add>, %61, %cst_34 [1] : vector<8x32xf32> to vector<8xf32>
    %63 = vector.shape_cast %62 : vector<8xf32> to vector<8x1xf32>
    %cst_35 = arith.constant 3.200000e+01 : f32
    %64 = vector.broadcast %cst_35 : f32 to vector<8x1xf32>
    %65 = arith.divf %63, %64 : vector<8x1xf32>
    %66 = vector.broadcast %58 : vector<8x1xf32> to vector<8x32xf32>
    %67 = arith.subf %54, %66 : vector<8x32xf32>
    %cst_36 = arith.constant 9.99999974E-6 : f32
    %68 = vector.broadcast %cst_36 : f32 to vector<8x1xf32>
    %69 = arith.addf %65, %68 : vector<8x1xf32>
    %70 = math.rsqrt %69 : vector<8x1xf32>
    %71 = vector.broadcast %70 : vector<8x1xf32> to vector<8x32xf32>
    %72 = arith.mulf %67, %71 : vector<8x32xf32>
    %c0_37 = arith.constant 0 : index
    %c0_38 = arith.constant 0 : index
    %73 = vector.load %arg10[%c0_37, %c0_38] : memref<1x32xf32, #tpu.memory_space<vmem>>, vector<1x32xf32>
    %74 = vector.broadcast %73 : vector<1x32xf32> to vector<8x32xf32>
    %75 = arith.mulf %72, %74 : vector<8x32xf32>
    %c0_39 = arith.constant 0 : index
    %c0_40 = arith.constant 0 : index
    %76 = vector.load %arg11[%c0_39, %c0_40] : memref<1x32xf32, #tpu.memory_space<vmem>>, vector<1x32xf32>
    %77 = vector.broadcast %76 : vector<1x32xf32> to vector<8x32xf32>
    %78 = arith.addf %75, %77 : vector<8x32xf32>
    %c0_41 = arith.constant 0 : index
    %c0_42 = arith.constant 0 : index
    %c0_43 = arith.constant 0 : index
    %79 = vector.load %arg12[%c0_41, %c0_42, %c0_43] : memref<1x8x32xf32, #tpu.memory_space<vmem>>, vector<1x8x32xf32>
    %80 = vector.shape_cast %79 : vector<1x8x32xf32> to vector<8x32xf32>
    %81 = vector.shape_cast %78 : vector<8x32xf32> to vector<1x8x32xf32>
    tpu.vector_store %arg12[%c0_41, %c0_42, %c0_43], %81 {strides = array<i32>} : memref<1x8x32xf32, #tpu.memory_space<vmem>>, vector<1x8x32xf32>,
    return
  }
  func.func @transform_0(%arg0: i32, %arg1: i32) -> (i32, i32, i32) {
    %c0_i32 = arith.constant 0 : i32
    %c0_i32_0 = arith.constant 0 : i32
    return %arg0, %arg1, %c0_i32 : i32, i32, i32
  }
  func.func @transform_1(%arg0: i32, %arg1: i32) -> (i32, i32, i32) {
    %c0_i32 = arith.constant 0 : i32
    %c0_i32_0 = arith.constant 0 : i32
    %c0_i32_1 = arith.constant 0 : i32
    return %arg0, %c0_i32, %c0_i32_0 : i32, i32, i32
  }
  func.func @transform_2(%arg0: i32, %arg1: i32) -> (i32, i32, i32) {
    %c0_i32 = arith.constant 0 : i32
    %c0_i32_0 = arith.constant 0 : i32
    %c0_i32_1 = arith.constant 0 : i32
    return %arg0, %c0_i32, %c0_i32_0 : i32, i32, i32
  }
  func.func @transform_3(%arg0: i32, %arg1: i32) -> (i32, i32, i32, i32) {
    %c0_i32 = arith.constant 0 : i32
    %c0_i32_0 = arith.constant 0 : i32
    %c0_i32_1 = arith.constant 0 : i32
    return %arg0, %c0_i32, %arg1, %c0_i32_0 : i32, i32, i32, i32
  }
  func.func @transform_4(%arg0: i32, %arg1: i32) -> (i32, i32, i32) {
    %c0_i32 = arith.constant 0 : i32
    %c0_i32_0 = arith.constant 0 : i32
    %c0_i32_1 = arith.constant 0 : i32
    %c0_i32_2 = arith.constant 0 : i32
    return %c0_i32, %c0_i32_0, %c0_i32_1 : i32, i32, i32
  }
  func.func @transform_5(%arg0: i32, %arg1: i32) -> (i32, i32, i32) {
    %c0_i32 = arith.constant 0 : i32
    %c0_i32_0 = arith.constant 0 : i32
    %c0_i32_1 = arith.constant 0 : i32
    %c0_i32_2 = arith.constant 0 : i32
    return %c0_i32, %c0_i32_0, %c0_i32_1 : i32, i32, i32
  }
  func.func @transform_6(%arg0: i32, %arg1: i32) -> (i32, i32) {
    %c0_i32 = arith.constant 0 : i32
    %c0_i32_0 = arith.constant 0 : i32
    %c0_i32_1 = arith.constant 0 : i32
    return %c0_i32, %c0_i32_0 : i32, i32
  }
  func.func @transform_7(%arg0: i32, %arg1: i32) -> (i32, i32) {
    %c0_i32 = arith.constant 0 : i32
    %c0_i32_0 = arith.constant 0 : i32
    %c0_i32_1 = arith.constant 0 : i32
    return %c0_i32, %c0_i32_0 : i32, i32
  }
  func.func @transform_8(%arg0: i32, %arg1: i32) -> (i32, i32) {
    %c0_i32 = arith.constant 0 : i32
    %c0_i32_0 = arith.constant 0 : i32
    %c0_i32_1 = arith.constant 0 : i32
    return %c0_i32, %c0_i32_0 : i32, i32
  }
  func.func @transform_9(%arg0: i32, %arg1: i32) -> (i32, i32) {
    %c0_i32 = arith.constant 0 : i32
    %c0_i32_0 = arith.constant 0 : i32
    %c0_i32_1 = arith.constant 0 : i32
    return %c0_i32, %c0_i32_0 : i32, i32
  }
  func.func @transform_10(%arg0: i32, %arg1: i32) -> (i32, i32, i32) {
    %c0_i32 = arith.constant 0 : i32
    %c0_i32_0 = arith.constant 0 : i32
    return %arg0, %arg1, %c0_i32 : i32, i32, i32
  }
  func.func @transform_11(%arg0: i32, %arg1: i32) -> (i32, i32, i32, i32) {
    %c0_i32 = arith.constant 0 : i32
    %c0_i32_0 = arith.constant 0 : i32
    %c0_i32_1 = arith.constant 0 : i32
    return %arg0, %c0_i32, %arg1, %c0_i32_0 : i32, i32, i32, i32
  }
}

module attributes {stable_mosaic.version = 11 : i64} {
  func.func @mha_kernel(%arg0: i32, %arg1: i32, %arg2: memref<1x8x32xf32, #tpu.memory_space<vmem>>, %arg3: memref<1x8x32xbf16, #tpu.memory_space<vmem>>, %arg4: memref<1x8x32xbf16, #tpu.memory_space<vmem>>, %arg5: memref<1x4x8x8xi8, #tpu.memory_space<vmem>>, %arg6: memref<3x32x32xbf16, #tpu.memory_space<vmem>>, %arg7: memref<3x1x32xf32, #tpu.memory_space<vmem>>, %arg8: memref<32x32xbf16, #tpu.memory_space<vmem>>, %arg9: memref<1x32xf32, #tpu.memory_space<vmem>>, %arg10: memref<1x32xf32, #tpu.memory_space<vmem>>, %arg11: memref<1x32xf32, #tpu.memory_space<vmem>>, %arg12: memref<1x8x32xf32, #tpu.memory_space<vmem>>, %arg13: memref<1x4x8x8xbf16, #tpu.memory_space<vmem>>, %arg14: memref<2x8x32xbf16, #tpu.memory_space<vmem>>) attributes {dimension_semantics = [#tpu.dimension_semantics<parallel>, #tpu.dimension_semantics<arbitrary>], iteration_bounds = array<i64: 2, 1>, scalar_prefetch = 0 : i64, scratch_operands = 1 : i64, tpu.core_type = #tpu.core_type<tc>, window_params = [{transform_indices = @transform_0, window_bounds = array<i64: 1, 8, 32>}, {transform_indices = @transform_1, window_bounds = array<i64: 1, 8, 32>}, {transform_indices = @transform_2, window_bounds = array<i64: 1, 8, 32>}, {transform_indices = @transform_3, window_bounds = array<i64: 1, 4, 8, 8>}, {pipeline_mode = #tpu.pipeline_mode<synchronous>, transform_indices = @transform_4, window_bounds = array<i64: 3, 32, 32>}, {pipeline_mode = #tpu.pipeline_mode<synchronous>, transform_indices = @transform_5, window_bounds = array<i64: 3, 1, 32>}, {pipeline_mode = #tpu.pipeline_mode<synchronous>, transform_indices = @transform_6, window_bounds = array<i64: 32, 32>}, {pipeline_mode = #tpu.pipeline_mode<synchronous>, transform_indices = @transform_7, window_bounds = array<i64: 1, 32>}, {pipeline_mode = #tpu.pipeline_mode<synchronous>, transform_indices = @transform_8, window_bounds = array<i64: 1, 32>}, {pipeline_mode = #tpu.pipeline_mode<synchronous>, transform_indices = @transform_9, window_bounds = array<i64: 1, 32>}, {transform_indices = @transform_10, window_bounds = array<i64: 1, 8, 32>}, {transform_indices = @transform_11, window_bounds = array<i64: 1, 4, 8, 8>}]} {
    %c0_i32 = arith.constant 0 : i32
    %0 = arith.cmpi eq, %arg1, %c0_i32 : i32
    %1 = arith.extui %0 : i1 to i32
    %c0_i32_0 = arith.constant 0 : i32
    %2 = arith.cmpi ne, %1, %c0_i32_0 : i32
    scf.if %2 {
      %c0_44 = arith.constant 0 : index
      %c0_45 = arith.constant 0 : index
      %c0_46 = arith.constant 0 : index
      %82 = vector.load %arg3[%c0_44, %c0_45, %c0_46] : memref<1x8x32xbf16, #tpu.memory_space<vmem>>, vector<1x8x32xbf16>
      %83 = vector.shape_cast %82 : vector<1x8x32xbf16> to vector<8x32xbf16>
      %c1_47 = arith.constant 1 : index
      %c0_48 = arith.constant 0 : index
      %c0_49 = arith.constant 0 : index
      %84 = vector.load %arg6[%c1_47, %c0_48, %c0_49] : memref<3x32x32xbf16, #tpu.memory_space<vmem>>, vector<1x32x32xbf16>
      %85 = vector.shape_cast %84 : vector<1x32x32xbf16> to vector<32x32xbf16>
      %cst_50 = arith.constant dense<0.000000e+00> : vector<8x32xf32>
      %86 = tpu.matmul %83, %85, %cst_50 {dimension_numbers = #tpu.dot_dimension_numbers<[1], [0], [0], [1], [0, 0, 1, 1], [], []>} : vector<8x32xbf16>, vector<32x32xbf16>, vector<8x32xf32> -> vector<8x32xf32>
      %c1_51 = arith.constant 1 : index
      %c0_52 = arith.constant 0 : index
      %c0_53 = arith.constant 0 : index
      %87 = vector.load %arg7[%c1_51, %c0_52, %c0_53] : memref<3x1x32xf32, #tpu.memory_space<vmem>>, vector<1x1x32xf32>
      %88 = vector.shape_cast %87 : vector<1x1x32xf32> to vector<1x32xf32>
      %89 = vector.broadcast %88 : vector<1x32xf32> to vector<8x32xf32>
      %90 = arith.addf %86, %89 : vector<8x32xf32>
      %c0_54 = arith.constant 0 : index
      %c0_55 = arith.constant 0 : index
      %c0_56 = arith.constant 0 : index
      %91 = vector.load %arg4[%c0_54, %c0_55, %c0_56] : memref<1x8x32xbf16, #tpu.memory_space<vmem>>, vector<1x8x32xbf16>
      %92 = vector.shape_cast %91 : vector<1x8x32xbf16> to vector<8x32xbf16>
      %c2 = arith.constant 2 : index
      %c0_57 = arith.constant 0 : index
      %c0_58 = arith.constant 0 : index
      %93 = vector.load %arg6[%c2, %c0_57, %c0_58] : memref<3x32x32xbf16, #tpu.memory_space<vmem>>, vector<1x32x32xbf16>
      %94 = vector.shape_cast %93 : vector<1x32x32xbf16> to vector<32x32xbf16>
      %cst_59 = arith.constant dense<0.000000e+00> : vector<8x32xf32>
      %95 = tpu.matmul %92, %94, %cst_59 {dimension_numbers = #tpu.dot_dimension_numbers<[1], [0], [0], [1], [0, 0, 1, 1], [], []>} : vector<8x32xbf16>, vector<32x32xbf16>, vector<8x32xf32> -> vector<8x32xf32>
      %c2_60 = arith.constant 2 : index
      %c0_61 = arith.constant 0 : index
      %c0_62 = arith.constant 0 : index
      %96 = vector.load %arg7[%c2_60, %c0_61, %c0_62] : memref<3x1x32xf32, #tpu.memory_space<vmem>>, vector<1x1x32xf32>
      %97 = vector.shape_cast %96 : vector<1x1x32xf32> to vector<1x32xf32>
      %98 = vector.broadcast %97 : vector<1x32xf32> to vector<8x32xf32>
      %99 = arith.addf %95, %98 : vector<8x32xf32>
      %100 = arith.truncf %90 : vector<8x32xf32> to vector<8x32xbf16>
      %c0_63 = arith.constant 0 : index
      %c0_64 = arith.constant 0 : index
      %c0_65 = arith.constant 0 : index
      %101 = vector.load %arg14[%c0_63, %c0_64, %c0_65] : memref<2x8x32xbf16, #tpu.memory_space<vmem>>, vector<1x8x32xbf16>
      %102 = vector.shape_cast %101 : vector<1x8x32xbf16> to vector<8x32xbf16>
      %103 = vector.shape_cast %100 : vector<8x32xbf16> to vector<1x8x32xbf16>
      tpu.vector_store %arg14[%c0_63, %c0_64, %c0_65], %103 {strides = array<i32>} : memref<2x8x32xbf16, #tpu.memory_space<vmem>>, vector<1x8x32xbf16>,
      %104 = arith.truncf %99 : vector<8x32xf32> to vector<8x32xbf16>
      %c1_66 = arith.constant 1 : index
      %c0_67 = arith.constant 0 : index
      %c0_68 = arith.constant 0 : index
      %105 = vector.load %arg14[%c1_66, %c0_67, %c0_68] : memref<2x8x32xbf16, #tpu.memory_space<vmem>>, vector<1x8x32xbf16>
      %106 = vector.shape_cast %105 : vector<1x8x32xbf16> to vector<8x32xbf16>
      %107 = vector.shape_cast %104 : vector<8x32xbf16> to vector<1x8x32xbf16>
      tpu.vector_store %arg14[%c1_66, %c0_67, %c0_68], %107 {strides = array<i32>} : memref<2x8x32xbf16, #tpu.memory_space<vmem>>, vector<1x8x32xbf16>,
    } else {
    }
    %c0 = arith.constant 0 : index
    %c0_1 = arith.constant 0 : index
    %c0_2 = arith.constant 0 : index
    %3 = vector.load %arg2[%c0, %c0_1, %c0_2] : memref<1x8x32xf32, #tpu.memory_space<vmem>>, vector<1x8x32xf32>
    %4 = vector.shape_cast %3 : vector<1x8x32xf32> to vector<8x32xf32>
    %5 = arith.truncf %4 : vector<8x32xf32> to vector<8x32xbf16>
    %c0_3 = arith.constant 0 : index
    %c0_4 = arith.constant 0 : index
    %c0_5 = arith.constant 0 : index
    %6 = vector.load %arg6[%c0_3, %c0_4, %c0_5] : memref<3x32x32xbf16, #tpu.memory_space<vmem>>, vector<1x32x32xbf16>
    %7 = vector.shape_cast %6 : vector<1x32x32xbf16> to vector<32x32xbf16>
    %cst = arith.constant dense<0.000000e+00> : vector<8x32xf32>
    %8 = tpu.matmul %5, %7, %cst {dimension_numbers = #tpu.dot_dimension_numbers<[1], [0], [0], [1], [0, 0, 1, 1], [], []>} : vector<8x32xbf16>, vector<32x32xbf16>, vector<8x32xf32> -> vector<8x32xf32>
    %c0_6 = arith.constant 0 : index
    %c0_7 = arith.constant 0 : index
    %c0_8 = arith.constant 0 : index
    %9 = vector.load %arg7[%c0_6, %c0_7, %c0_8] : memref<3x1x32xf32, #tpu.memory_space<vmem>>, vector<1x1x32xf32>
    %10 = vector.shape_cast %9 : vector<1x1x32xf32> to vector<1x32xf32>
    %11 = vector.broadcast %10 : vector<1x32xf32> to vector<8x32xf32>
    %12 = arith.addf %8, %11 : vector<8x32xf32>
    %13 = vector.shape_cast %12 : vector<8x32xf32> to vector<8x4x8xf32>
    %14 = tpu.transpose %13, [1, 0, 2] : vector<8x4x8xf32> -> vector<4x8x8xf32>
    %c0_9 = arith.constant 0 : index
    %c0_10 = arith.constant 0 : index
    %c0_11 = arith.constant 0 : index
    %15 = vector.load %arg14[%c0_9, %c0_10, %c0_11] : memref<2x8x32xbf16, #tpu.memory_space<vmem>>, vector<1x8x32xbf16>
    %16 = vector.shape_cast %15 : vector<1x8x32xbf16> to vector<8x32xbf16>
    %17 = vector.shape_cast %16 : vector<8x32xbf16> to vector<8x4x8xbf16>
    %18 = tpu.transpose %17, [1, 0, 2] : vector<8x4x8xbf16> -> vector<4x8x8xbf16>
    %c1 = arith.constant 1 : index
    %c0_12 = arith.constant 0 : index
    %c0_13 = arith.constant 0 : index
    %19 = vector.load %arg14[%c1, %c0_12, %c0_13] : memref<2x8x32xbf16, #tpu.memory_space<vmem>>, vector<1x8x32xbf16>
    %20 = vector.shape_cast %19 : vector<1x8x32xbf16> to vector<8x32xbf16>
    %21 = vector.shape_cast %20 : vector<8x32xbf16> to vector<8x4x8xbf16>
    %22 = tpu.transpose %21, [1, 0, 2] : vector<8x4x8xbf16> -> vector<4x8x8xbf16>
    %23 = arith.truncf %14 : vector<4x8x8xf32> to vector<4x8x8xbf16>
    "tpu.trace_start"() <{level = 10 : i32, message = "hqd,hkd->hqk"}> : () -> ()
    %cst_14 = arith.constant dense<0.000000e+00> : vector<4x8x8xf32>
    %24 = tpu.matmul %23, %18, %cst_14 {dimension_numbers = #tpu.dot_dimension_numbers<[2], [2], [1], [1], [0, 0, 0, 1, 1, 1], [0], [0]>} : vector<4x8x8xbf16>, vector<4x8x8xbf16>, vector<4x8x8xf32> -> vector<4x8x8xf32>
    "tpu.trace_stop"() : () -> ()
    %c0_15 = arith.constant 0 : index
    %c0_16 = arith.constant 0 : index
    %c0_17 = arith.constant 0 : index
    %c0_18 = arith.constant 0 : index
    %25 = vector.load %arg5[%c0_15, %c0_16, %c0_17, %c0_18] : memref<1x4x8x8xi8, #tpu.memory_space<vmem>>, vector<1x4x8x8xi8>
    %26 = vector.shape_cast %25 : vector<1x4x8x8xi8> to vector<4x8x8xi8>
    %c0_i8 = arith.constant 0 : i8
    %27 = vector.broadcast %c0_i8 : i8 to vector<4x8x8xi8>
    %28 = arith.cmpi ne, %26, %27 : vector<4x8x8xi8>
    %cst_19 = arith.constant -1.000000e+09 : f32
    %29 = vector.broadcast %cst_19 : f32 to vector<4x8x8xf32>
    %30 = arith.select %28, %29, %24 : vector<4x8x8xi1>, vector<4x8x8xf32>
    %cst_20 = arith.constant dense<0xFF800000> : vector<4x8xf32>
    %31 = vector.multi_reduction <maximumf>, %30, %cst_20 [2] : vector<4x8x8xf32> to vector<4x8xf32>
    %32 = vector.shape_cast %31 : vector<4x8xf32> to vector<4x8x1xf32>
    %33 = vector.broadcast %32 : vector<4x8x1xf32> to vector<4x8x8xf32>
    %34 = arith.subf %30, %33 : vector<4x8x8xf32>
    %35 = math.exp %34 : vector<4x8x8xf32>
    %cst_21 = arith.constant dense<0.000000e+00> : vector<4x8xf32>
    %36 = vector.multi_reduction <add>, %35, %cst_21 [2] : vector<4x8x8xf32> to vector<4x8xf32>
    %37 = vector.shape_cast %36 : vector<4x8xf32> to vector<4x8x1xf32>
    %38 = vector.broadcast %37 : vector<4x8x1xf32> to vector<4x8x8xf32>
    %39 = arith.divf %35, %38 : vector<4x8x8xf32>
    %40 = arith.truncf %39 : vector<4x8x8xf32> to vector<4x8x8xbf16>
    %c0_22 = arith.constant 0 : index
    %c0_23 = arith.constant 0 : index
    %c0_24 = arith.constant 0 : index
    %c0_25 = arith.constant 0 : index
    %41 = vector.load %arg13[%c0_22, %c0_23, %c0_24, %c0_25] : memref<1x4x8x8xbf16, #tpu.memory_space<vmem>>, vector<1x4x8x8xbf16>
    %42 = vector.shape_cast %41 : vector<1x4x8x8xbf16> to vector<4x8x8xbf16>
    %43 = vector.shape_cast %40 : vector<4x8x8xbf16> to vector<1x4x8x8xbf16>
    tpu.vector_store %arg13[%c0_22, %c0_23, %c0_24, %c0_25], %43 {strides = array<i32>} : memref<1x4x8x8xbf16, #tpu.memory_space<vmem>>, vector<1x4x8x8xbf16>,
    %44 = arith.truncf %39 : vector<4x8x8xf32> to vector<4x8x8xbf16>
    "tpu.trace_start"() <{level = 10 : i32, message = "hqk,hkd->hqd"}> : () -> ()
    %cst_26 = arith.constant dense<0.000000e+00> : vector<4x8x8xf32>
    %45 = tpu.matmul %44, %22, %cst_26 {dimension_numbers = #tpu.dot_dimension_numbers<[2], [1], [1], [2], [0, 0, 0, 1, 1, 2], [0], [0]>} : vector<4x8x8xbf16>, vector<4x8x8xbf16>, vector<4x8x8xf32> -> vector<4x8x8xf32>
    "tpu.trace_stop"() : () -> ()
    %46 = tpu.transpose %45, [1, 0, 2] : vector<4x8x8xf32> -> vector<8x4x8xf32>
    %47 = vector.shape_cast %46 : vector<8x4x8xf32> to vector<8x32xf32>
    %48 = arith.truncf %47 : vector<8x32xf32> to vector<8x32xbf16>
    %c0_27 = arith.constant 0 : index
    %c0_28 = arith.constant 0 : index
    %49 = vector.load %arg8[%c0_27, %c0_28] : memref<32x32xbf16, #tpu.memory_space<vmem>>, vector<32x32xbf16>
    %cst_29 = arith.constant dense<0.000000e+00> : vector<8x32xf32>
    %50 = tpu.matmul %48, %49, %cst_29 {dimension_numbers = #tpu.dot_dimension_numbers<[1], [0], [0], [1], [0, 0, 1, 1], [], []>} : vector<8x32xbf16>, vector<32x32xbf16>, vector<8x32xf32> -> vector<8x32xf32>
    %c0_30 = arith.constant 0 : index
    %c0_31 = arith.constant 0 : index
    %51 = vector.load %arg9[%c0_30, %c0_31] : memref<1x32xf32, #tpu.memory_space<vmem>>, vector<1x32xf32>
    %52 = vector.broadcast %51 : vector<1x32xf32> to vector<8x32xf32>
    %53 = arith.addf %50, %52 : vector<8x32xf32>
    %54 = arith.addf %53, %4 : vector<8x32xf32>
    %cst_32 = arith.constant dense<0.000000e+00> : vector<8xf32>
    %55 = vector.multi_reduction <add>, %54, %cst_32 [1] : vector<8x32xf32> to vector<8xf32>
    %56 = vector.shape_cast %55 : vector<8xf32> to vector<8x1xf32>
    %cst_33 = arith.constant 3.200000e+01 : f32
    %57 = vector.broadcast %cst_33 : f32 to vector<8x1xf32>
    %58 = arith.divf %56, %57 : vector<8x1xf32>
    %59 = vector.broadcast %58 : vector<8x1xf32> to vector<8x32xf32>
    %60 = arith.subf %54, %59 : vector<8x32xf32>
    %61 = arith.mulf %60, %60 : vector<8x32xf32>
    %cst_34 = arith.constant dense<0.000000e+00> : vector<8xf32>
    %62 = vector.multi_reduction <add>, %61, %cst_34 [1] : vector<8x32xf32> to vector<8xf32>
    %63 = vector.shape_cast %62 : vector<8xf32> to vector<8x1xf32>
    %cst_35 = arith.constant 3.200000e+01 : f32
    %64 = vector.broadcast %cst_35 : f32 to vector<8x1xf32>
    %65 = arith.divf %63, %64 : vector<8x1xf32>
    %66 = vector.broadcast %58 : vector<8x1xf32> to vector<8x32xf32>
    %67 = arith.subf %54, %66 : vector<8x32xf32>
    %cst_36 = arith.constant 9.99999974E-6 : f32
    %68 = vector.broadcast %cst_36 : f32 to vector<8x1xf32>
    %69 = arith.addf %65, %68 : vector<8x1xf32>
    %70 = math.rsqrt %69 : vector<8x1xf32>
    %71 = vector.broadcast %70 : vector<8x1xf32> to vector<8x32xf32>
    %72 = arith.mulf %67, %71 : vector<8x32xf32>
    %c0_37 = arith.constant 0 : index
    %c0_38 = arith.constant 0 : index
    %73 = vector.load %arg10[%c0_37, %c0_38] : memref<1x32xf32, #tpu.memory_space<vmem>>, vector<1x32xf32>
    %74 = vector.broadcast %73 : vector<1x32xf32> to vector<8x32xf32>
    %75 = arith.mulf %72, %74 : vector<8x32xf32>
    %c0_39 = arith.constant 0 : index
    %c0_40 = arith.constant 0 : index
    %76 = vector.load %arg11[%c0_39, %c0_40] : memref<1x32xf32, #tpu.memory_space<vmem>>, vector<1x32xf32>
    %77 = vector.broadcast %76 : vector<1x32xf32> to vector<8x32xf32>
    %78 = arith.addf %75, %77 : vector<8x32xf32>
    %c0_41 = arith.constant 0 : index
    %c0_42 = arith.constant 0 : index
    %c0_43 = arith.constant 0 : index
    %79 = vector.load %arg12[%c0_41, %c0_42, %c0_43] : memref<1x8x32xf32, #tpu.memory_space<vmem>>, vector<1x8x32xf32>
    %80 = vector.shape_cast %79 : vector<1x8x32xf32> to vector<8x32xf32>
    %81 = vector.shape_cast %78 : vector<8x32xf32> to vector<1x8x32xf32>
    tpu.vector_store %arg12[%c0_41, %c0_42, %c0_43], %81 {strides = array<i32>} : memref<1x8x32xf32, #tpu.memory_space<vmem>>, vector<1x8x32xf32>,
    return
  }
  func.func @transform_0(%arg0: i32, %arg1: i32) -> (i32, i32, i32) {
    %c0_i32 = arith.constant 0 : i32
    %c0_i32_0 = arith.constant 0 : i32
    return %arg0, %arg1, %c0_i32 : i32, i32, i32
  }
  func.func @transform_1(%arg0: i32, %arg1: i32) -> (i32, i32, i32) {
    %c0_i32 = arith.constant 0 : i32
    %c0_i32_0 = arith.constant 0 : i32
    %c0_i32_1 = arith.constant 0 : i32
    return %arg0, %c0_i32, %c0_i32_0 : i32, i32, i32
  }
  func.func @transform_2(%arg0: i32, %arg1: i32) -> (i32, i32, i32) {
    %c0_i32 = arith.constant 0 : i32
    %c0_i32_0 = arith.constant 0 : i32
    %c0_i32_1 = arith.constant 0 : i32
    return %arg0, %c0_i32, %c0_i32_0 : i32, i32, i32
  }
  func.func @transform_3(%arg0: i32, %arg1: i32) -> (i32, i32, i32, i32) {
    %c0_i32 = arith.constant 0 : i32
    %c0_i32_0 = arith.constant 0 : i32
    %c0_i32_1 = arith.constant 0 : i32
    return %arg0, %c0_i32, %arg1, %c0_i32_0 : i32, i32, i32, i32
  }
  func.func @transform_4(%arg0: i32, %arg1: i32) -> (i32, i32, i32) {
    %c0_i32 = arith.constant 0 : i32
    %c0_i32_0 = arith.constant 0 : i32
    %c0_i32_1 = arith.constant 0 : i32
    %c0_i32_2 = arith.constant 0 : i32
    return %c0_i32, %c0_i32_0, %c0_i32_1 : i32, i32, i32
  }
  func.func @transform_5(%arg0: i32, %arg1: i32) -> (i32, i32, i32) {
    %c0_i32 = arith.constant 0 : i32
    %c0_i32_0 = arith.constant 0 : i32
    %c0_i32_1 = arith.constant 0 : i32
    %c0_i32_2 = arith.constant 0 : i32
    return %c0_i32, %c0_i32_0, %c0_i32_1 : i32, i32, i32
  }
  func.func @transform_6(%arg0: i32, %arg1: i32) -> (i32, i32) {
    %c0_i32 = arith.constant 0 : i32
    %c0_i32_0 = arith.constant 0 : i32
    %c0_i32_1 = arith.constant 0 : i32
    return %c0_i32, %c0_i32_0 : i32, i32
  }
  func.func @transform_7(%arg0: i32, %arg1: i32) -> (i32, i32) {
    %c0_i32 = arith.constant 0 : i32
    %c0_i32_0 = arith.constant 0 : i32
    %c0_i32_1 = arith.constant 0 : i32
    return %c0_i32, %c0_i32_0 : i32, i32
  }
  func.func @transform_8(%arg0: i32, %arg1: i32) -> (i32, i32) {
    %c0_i32 = arith.constant 0 : i32
    %c0_i32_0 = arith.constant 0 : i32
    %c0_i32_1 = arith.constant 0 : i32
    return %c0_i32, %c0_i32_0 : i32, i32
  }
  func.func @transform_9(%arg0: i32, %arg1: i32) -> (i32, i32) {
    %c0_i32 = arith.constant 0 : i32
    %c0_i32_0 = arith.constant 0 : i32
    %c0_i32_1 = arith.constant 0 : i32
    return %c0_i32, %c0_i32_0 : i32, i32
  }
  func.func @transform_10(%arg0: i32, %arg1: i32) -> (i32, i32, i32) {
    %c0_i32 = arith.constant 0 : i32
    %c0_i32_0 = arith.constant 0 : i32
    return %arg0, %arg1, %c0_i32 : i32, i32, i32
  }
  func.func @transform_11(%arg0: i32, %arg1: i32) -> (i32, i32, i32, i32) {
    %c0_i32 = arith.constant 0 : i32
    %c0_i32_0 = arith.constant 0 : i32
    %c0_i32_1 = arith.constant 0 : i32
    return %arg0, %c0_i32, %arg1, %c0_i32_0 : i32, i32, i32, i32
  }
}

</mosaic_0001>

<llo_original>
// kernel: tpu_custom_call.1
$region0: #{tpu_custom_call.1}
  #allocation0 [shape = 'u32[]', space=smem, size = 0x4, offset = 0x4, fixed_abs, tag = 'smem constant byte address 0x4 - core index']
  #allocation1 [shape = 'u32[144,128]{1,0:T(1,128)}', space=vmem, size = 0x12000, scoped, tag = 'internal scratch']
  #allocation2 [shape = 'bf16[2,8,32]{2,1,0:T(8,128)(2,1)}', space=vmem, size = 0x1000, scoped, tag = 'scratch operand']
  %s0 = inlined_call_operand.hbm [shape: f32[2,8,32], index: 0, kind: input, shape index: {}]
  %s1 = inlined_call_operand.hbm [shape: bf16[2,8,32], index: 1, kind: input, shape index: {}]
  %s2 = inlined_call_operand.hbm [shape: bf16[2,8,32], index: 2, kind: input, shape index: {}]
  %s3 = inlined_call_operand.hbm [shape: s8[2,4,8,8], index: 3, kind: input, shape index: {}]
  %s4 = inlined_call_operand.hbm [shape: bf16[3,32,32], index: 4, kind: input, shape index: {}]
  %s5 = inlined_call_operand.hbm [shape: f32[3,1,32], index: 5, kind: input, shape index: {}]
  %s6 = inlined_call_operand.hbm [shape: bf16[32,32], index: 6, kind: input, shape index: {}]
  %s7 = inlined_call_operand.hbm [shape: f32[1,32], index: 7, kind: input, shape index: {}]
  %s8 = inlined_call_operand.hbm [shape: f32[1,32], index: 8, kind: input, shape index: {}]
  %s9 = inlined_call_operand.hbm [shape: f32[1,32], index: 9, kind: input, shape index: {}]
  %s10 = inlined_call_operand.hbm [shape: f32[2,8,32], index: 10, kind: output, shape index: {0}]
  %s11 = inlined_call_operand.hbm [shape: bf16[2,4,8,8], index: 11, kind: output, shape index: {1}]
  %12 = xla_tuple %s10, %s11
  %s13 = sld [smem:[#allocation0]]
  $region125: #{tpu_custom_call.1} parent=0
    _
  %s15 = ssub.s32 1, %s13
  %s16 = scalar_select 0, %s15, %s13
  $region1: #{tpu_custom_call.1} parent=0
    #allocation3 [shape = 'u8[8192]{0}', space=vmem, size = 0x2000, scoped, tag = 'input window, operand 0']
    #allocation4 [shape = 's32[2]{0}', space=sflag, size = 0x8, scoped, tag = 'scoped memory for tpu_custom_call.1']
    #allocation5 [shape = 's32[2]{0}', space=sflag, size = 0x8, scoped, tag = 'scoped memory for tpu_custom_call.1']
    #allocation6 [shape = 'u8[2048]{0}', space=vmem, size = 0x800, scoped, tag = 'input window, operand 1, single buffered']
    #allocation7 [shape = 's32[1]{0}', space=sflag, size = 0x4, scoped, tag = 'scoped memory for tpu_custom_call.1']
    #allocation8 [shape = 'u8[2048]{0}', space=vmem, size = 0x800, scoped, tag = 'input window, operand 2, single buffered']
    #allocation9 [shape = 'u8[8192]{0}', space=vmem, size = 0x2000, scoped, tag = 'input window, operand 3']
    #allocation10 [shape = 's32[2]{0}', space=sflag, size = 0x8, scoped, tag = 'scoped memory for tpu_custom_call.1']
    #allocation11 [shape = 'u8[24576]{0}', space=vmem, size = 0x6000, scoped, tag = 'input window, operand 4, single buffered']
    #allocation12 [shape = 'u8[1536]{0}', space=vmem, size = 0x800, scoped, tag = 'input window, operand 5, single buffered']
    #allocation13 [shape = 's32[1]{0}', space=sflag, size = 0x4, scoped, tag = 'scoped memory for tpu_custom_call.1']
    #allocation14 [shape = 'u8[8192]{0}', space=vmem, size = 0x2000, scoped, tag = 'input window, operand 6, single buffered']
    #allocation15 [shape = 'u8[512]{0}', space=vmem, size = 0x400, scoped, tag = 'input window, operand 7, single buffered']
    #allocation16 [shape = 's32[1]{0}', space=sflag, size = 0x4, scoped, tag = 'scoped memory for tpu_custom_call.1']
    #allocation17 [shape = 'u8[512]{0}', space=vmem, size = 0x400, scoped, tag = 'input window, operand 8, single buffered']
    #allocation18 [shape = 'u8[512]{0}', space=vmem, size = 0x400, scoped, tag = 'input window, operand 9, single buffered']
    #allocation19 [shape = 's32[1]{0}', space=sflag, size = 0x4, scoped, tag = 'scoped memory for tpu_custom_call.1']
    #allocation20 [shape = 'u8[8192]{0}', space=vmem, size = 0x2000, scoped, tag = 'output window, operand 0']
    #allocation21 [shape = 'u8[16384]{0}', space=vmem, size = 0x4000, scoped, tag = 'output window, operand 1']
    #allocation22 [shape = 's32[2]{0}', space=sflag, size = 0x8, scoped, tag = 'scoped memory for tpu_custom_call.1']
    %17 = vsyncpa [#allocation4], 0
    %s18 = scalar_lea.sflag [#allocation4], 1
    %19 = vsyncpa %s18, 0
    %20 = vsyncpa [#allocation7], 0
    %21 = vsyncpa [#allocation10], 0
    %s22 = scalar_lea.sflag [#allocation10], 1
    %23 = vsyncpa %s22, 0
    %24 = vsyncpa [#allocation13], 0
    %25 = vsyncpa [#allocation16], 0
    %26 = vsyncpa [#allocation19], 0
    %27 = vsyncpa [#allocation5], 0
    %s28 = scalar_lea.sflag [#allocation5], 1
    %29 = vsyncpa %s28, 0
    %30 = vsyncpa [#allocation22], 0
    %s31 = scalar_lea.sflag [#allocation22], 1
    %32 = vsyncpa %s31, 0
    loop: start=0, step=1, limit=4
    $region2: #{tpu_custom_call.1} parent=1 // loop_pre_header
      _
    $region3: #{tpu_custom_call.1} parent=1 // loop_header
      %s34 = sphi 0, %s38
      %p35 = scmp.ge.s32.totalorder %s34, 4
      %s41 = sphi 0, %s53
      %s42 = sphi 0, %s49
      %s43 = sphi 0, %s41
      %s44 = sphi 0, %s42
      %s45 = sphi 0, %s43
      %s46 = sphi 0, %s44
      %s58 = sphi 0, %s60
      %s61 = sphi 0, %s58
      %s62 = sphi 0, %s61
      %s78 = sphi 0, %s62
      %s84 = sphi 0, %s86
      %s87 = sphi 0, %s84
      %s88 = sphi 0, %s87
      %s104 = sphi 0, %s88
      %s110 = sphi 0, %s112
      %s113 = sphi 0, %s110
      %s114 = sphi 0, %s113
      %s130 = sphi 0, %s114
      %s138 = sphi 0, %s140
      %s141 = sphi 0, %s138
      %s142 = sphi 0, %s141
      %s158 = sphi 0, %s142
      %s162 = sphi 0, %s162
      %s164 = sphi 0, %s162
      %s165 = sphi 0, %s164
      %s179 = sphi 0, %s165
      %s183 = sphi 0, %s183
      %s185 = sphi 0, %s183
      %s186 = sphi 0, %s185
      %s200 = sphi 0, %s186
      %s204 = sphi 0, %s204
      %s206 = sphi 0, %s204
      %s207 = sphi 0, %s206
      %s221 = sphi 0, %s207
      %s225 = sphi 0, %s225
      %s227 = sphi 0, %s225
      %s228 = sphi 0, %s227
      %s242 = sphi 0, %s228
      %s246 = sphi 0, %s246
      %s248 = sphi 0, %s246
      %s249 = sphi 0, %s248
      %s263 = sphi 0, %s249
      %s267 = sphi 0, %s267
      %s269 = sphi 0, %s267
      %s270 = sphi 0, %s269
      %s284 = sphi 0, %s270
      %s292 = sphi 0, %s294
      %s295 = sphi 0, %s292
      %s296 = sphi 0, %s295
      %s312 = sphi 0, %s296
      %s320 = sphi 0, %s322
      %s323 = sphi 0, %s320
      %s324 = sphi 0, %s323
      %s340 = sphi 0, %s324
    $region4: #{tpu_custom_call.1} parent=1 // loop_header_branch
      %37 = sbr.rel (%p35) target = $region8
    $region5: #{tpu_custom_call.1} parent=1 // loop_body
      %s39 = ssub.s32 %s34, 1
      %s40 = ssub.s32 %s34, 2
      %s47 = sadd.s32 1, %s42
      %p48 = scmp.ge.s32.totalorder %s47, 1
      %s49 = scalar_select %p48, 0, %s47
      %s50 = sadd.s32 1, %s41
      %s51 = scalar_select %p48, %s50, %s41
      %p52 = scmp.ge.s32.totalorder %s51, 2
      %s53 = scalar_select %p52, 0, %s51
      %s54 = ssub.s32 %s41, %s53
      %s55 = ssub.s32 %s42, %s49
      %s56 = sor.u32 %s54, %s55
      %p57 = scmp.eq.s32.totalorder %s56, 0
      %s59 = sadd.s32 %s58, 1
      %s60 = scalar_select %p57, %s58, %s59
      %p63 = pneg %p57
      %p64 = scmp.eq.s32.totalorder %s34, 1
      %p65 = por %p63, %p64
      %p66 = scmp.ne.s32.totalorder %s58, %s61
      %p67 = scmp.eq.s32.totalorder %s34, 0
      %p68 = por %p66, %p67
      %p69 = scmp.ne.s32.totalorder %s58, %s61
      %p70 = scmp.eq.s32.totalorder %s39, 1
      %p71 = por %p69, %p70
      %p72 = scmp.ne.s32.totalorder %s61, %s62
      %p73 = scmp.eq.s32.totalorder %s39, 0
      %p74 = por %p72, %p73
      %p75 = scmp.ne.s32.totalorder %s61, %s62
      %p76 = scmp.eq.s32.totalorder %s40, 1
      %p77 = por %p75, %p76
      %p79 = scmp.ne.s32.totalorder %s62, %s78
      %p80 = scmp.eq.s32.totalorder %s40, 0
      %p81 = por %p79, %p80
      %s82 = ssub.s32 %s41, %s53
      %p83 = scmp.eq.s32.totalorder %s82, 0
      %s85 = sadd.s32 %s84, 1
      %s86 = scalar_select %p83, %s84, %s85
      %p89 = pneg %p83
      %p90 = scmp.eq.s32.totalorder %s34, 1
      %p91 = por %p89, %p90
      %p92 = scmp.ne.s32.totalorder %s84, %s87
      %p93 = scmp.eq.s32.totalorder %s34, 0
      %p94 = por %p92, %p93
      %p95 = scmp.ne.s32.totalorder %s84, %s87
      %p96 = scmp.eq.s32.totalorder %s39, 1
      %p97 = por %p95, %p96
      %p98 = scmp.ne.s32.totalorder %s87, %s88
      %p99 = scmp.eq.s32.totalorder %s39, 0
      %p100 = por %p98, %p99
      %p101 = scmp.ne.s32.totalorder %s87, %s88
      %p102 = scmp.eq.s32.totalorder %s40, 1
      %p103 = por %p101, %p102
      %p105 = scmp.ne.s32.totalorder %s88, %s104
      %p106 = scmp.eq.s32.totalorder %s40, 0
      %p107 = por %p105, %p106
      %s108 = ssub.s32 %s41, %s53
      %p109 = scmp.eq.s32.totalorder %s108, 0
      %s111 = sadd.s32 %s110, 1
      %s112 = scalar_select %p109, %s110, %s111
      %p115 = pneg %p109
      %p116 = scmp.eq.s32.totalorder %s34, 1
      %p117 = por %p115, %p116
      %p118 = scmp.ne.s32.totalorder %s110, %s113
      %p119 = scmp.eq.s32.totalorder %s34, 0
      %p120 = por %p118, %p119
      %p121 = scmp.ne.s32.totalorder %s110, %s113
      %p122 = scmp.eq.s32.totalorder %s39, 1
      %p123 = por %p121, %p122
      %p124 = scmp.ne.s32.totalorder %s113, %s114
      %p125 = scmp.eq.s32.totalorder %s39, 0
      %p126 = por %p124, %p125
      %p127 = scmp.ne.s32.totalorder %s113, %s114
      %p128 = scmp.eq.s32.totalorder %s40, 1
      %p129 = por %p127, %p128
      %p131 = scmp.ne.s32.totalorder %s114, %s130
      %p132 = scmp.eq.s32.totalorder %s40, 0
      %p133 = por %p131, %p132
      %s134 = ssub.s32 %s41, %s53
      %s135 = ssub.s32 %s42, %s49
      %s136 = sor.u32 %s134, %s135
      %p137 = scmp.eq.s32.totalorder %s136, 0
      %s139 = sadd.s32 %s138, 1
      %s140 = scalar_select %p137, %s138, %s139
      %p143 = pneg %p137
      %p144 = scmp.eq.s32.totalorder %s34, 1
      %p145 = por %p143, %p144
      %p146 = scmp.ne.s32.totalorder %s138, %s141
      %p147 = scmp.eq.s32.totalorder %s34, 0
      %p148 = por %p146, %p147
      %p149 = scmp.ne.s32.totalorder %s138, %s141
      %p150 = scmp.eq.s32.totalorder %s39, 1
      %p151 = por %p149, %p150
      %p152 = scmp.ne.s32.totalorder %s141, %s142
      %p153 = scmp.eq.s32.totalorder %s39, 0
      %p154 = por %p152, %p153
      %p155 = scmp.ne.s32.totalorder %s141, %s142
      %p156 = scmp.eq.s32.totalorder %s40, 1
      %p157 = por %p155, %p156
      %p159 = scmp.ne.s32.totalorder %s142, %s158
      %p160 = scmp.eq.s32.totalorder %s40, 0
      %p161 = por %p159, %p160
      %s163 = sadd.s32 %s162, 1
      %p166 = scmp.eq.s32.totalorder %s34, 1
      %p167 = scmp.ne.s32.totalorder %s162, %s164
      %p168 = scmp.eq.s32.totalorder %s34, 0
      %p169 = por %p167, %p168
      %p170 = scmp.ne.s32.totalorder %s162, %s164
      %p171 = scmp.eq.s32.totalorder %s39, 1
      %p172 = por %p170, %p171
      %p173 = scmp.ne.s32.totalorder %s164, %s165
      %p174 = scmp.eq.s32.totalorder %s39, 0
      %p175 = por %p173, %p174
      %p176 = scmp.ne.s32.totalorder %s164, %s165
      %p177 = scmp.eq.s32.totalorder %s40, 1
      %p178 = por %p176, %p177
      %p180 = scmp.ne.s32.totalorder %s165, %s179
      %p181 = scmp.eq.s32.totalorder %s40, 0
      %p182 = por %p180, %p181
      %s184 = sadd.s32 %s183, 1
      %p187 = scmp.eq.s32.totalorder %s34, 1
      %p188 = scmp.ne.s32.totalorder %s183, %s185
      %p189 = scmp.eq.s32.totalorder %s34, 0
      %p190 = por %p188, %p189
      %p191 = scmp.ne.s32.totalorder %s183, %s185
      %p192 = scmp.eq.s32.totalorder %s39, 1
      %p193 = por %p191, %p192
      %p194 = scmp.ne.s32.totalorder %s185, %s186
      %p195 = scmp.eq.s32.totalorder %s39, 0
      %p196 = por %p194, %p195
      %p197 = scmp.ne.s32.totalorder %s185, %s186
      %p198 = scmp.eq.s32.totalorder %s40, 1
      %p199 = por %p197, %p198
      %p201 = scmp.ne.s32.totalorder %s186, %s200
      %p202 = scmp.eq.s32.totalorder %s40, 0
      %p203 = por %p201, %p202
      %s205 = sadd.s32 %s204, 1
      %p208 = scmp.eq.s32.totalorder %s34, 1
      %p209 = scmp.ne.s32.totalorder %s204, %s206
      %p210 = scmp.eq.s32.totalorder %s34, 0
      %p211 = por %p209, %p210
      %p212 = scmp.ne.s32.totalorder %s204, %s206
      %p213 = scmp.eq.s32.totalorder %s39, 1
      %p214 = por %p212, %p213
      %p215 = scmp.ne.s32.totalorder %s206, %s207
      %p216 = scmp.eq.s32.totalorder %s39, 0
      %p217 = por %p215, %p216
      %p218 = scmp.ne.s32.totalorder %s206, %s207
      %p219 = scmp.eq.s32.totalorder %s40, 1
      %p220 = por %p218, %p219
      %p222 = scmp.ne.s32.totalorder %s207, %s221
      %p223 = scmp.eq.s32.totalorder %s40, 0
      %p224 = por %p222, %p223
      %s226 = sadd.s32 %s225, 1
      %p229 = scmp.eq.s32.totalorder %s34, 1
      %p230 = scmp.ne.s32.totalorder %s225, %s227
      %p231 = scmp.eq.s32.totalorder %s34, 0
      %p232 = por %p230, %p231
      %p233 = scmp.ne.s32.totalorder %s225, %s227
      %p234 = scmp.eq.s32.totalorder %s39, 1
      %p235 = por %p233, %p234
      %p236 = scmp.ne.s32.totalorder %s227, %s228
      %p237 = scmp.eq.s32.totalorder %s39, 0
      %p238 = por %p236, %p237
      %p239 = scmp.ne.s32.totalorder %s227, %s228
      %p240 = scmp.eq.s32.totalorder %s40, 1
      %p241 = por %p239, %p240
      %p243 = scmp.ne.s32.totalorder %s228, %s242
      %p244 = scmp.eq.s32.totalorder %s40, 0
      %p245 = por %p243, %p244
      %s247 = sadd.s32 %s246, 1
      %p250 = scmp.eq.s32.totalorder %s34, 1
      %p251 = scmp.ne.s32.totalorder %s246, %s248
      %p252 = scmp.eq.s32.totalorder %s34, 0
      %p253 = por %p251, %p252
      %p254 = scmp.ne.s32.totalorder %s246, %s248
      %p255 = scmp.eq.s32.totalorder %s39, 1
      %p256 = por %p254, %p255
      %p257 = scmp.ne.s32.totalorder %s248, %s249
      %p258 = scmp.eq.s32.totalorder %s39, 0
      %p259 = por %p257, %p258
      %p260 = scmp.ne.s32.totalorder %s248, %s249
      %p261 = scmp.eq.s32.totalorder %s40, 1
      %p262 = por %p260, %p261
      %p264 = scmp.ne.s32.totalorder %s249, %s263
      %p265 = scmp.eq.s32.totalorder %s40, 0
      %p266 = por %p264, %p265
      %s268 = sadd.s32 %s267, 1
      %p271 = scmp.eq.s32.totalorder %s34, 1
      %p272 = scmp.ne.s32.totalorder %s267, %s269
      %p273 = scmp.eq.s32.totalorder %s34, 0
      %p274 = por %p272, %p273
      %p275 = scmp.ne.s32.totalorder %s267, %s269
      %p276 = scmp.eq.s32.totalorder %s39, 1
      %p277 = por %p275, %p276
      %p278 = scmp.ne.s32.totalorder %s269, %s270
      %p279 = scmp.eq.s32.totalorder %s39, 0
      %p280 = por %p278, %p279
      %p281 = scmp.ne.s32.totalorder %s269, %s270
      %p282 = scmp.eq.s32.totalorder %s40, 1
      %p283 = por %p281, %p282
      %p285 = scmp.ne.s32.totalorder %s270, %s284
      %p286 = scmp.eq.s32.totalorder %s40, 0
      %p287 = por %p285, %p286
      %s288 = ssub.s32 %s41, %s53
      %s289 = ssub.s32 %s42, %s49
      %s290 = sor.u32 %s288, %s289
      %p291 = scmp.eq.s32.totalorder %s290, 0
      %s293 = sadd.s32 %s292, 1
      %s294 = scalar_select %p291, %s292, %s293
      %p297 = pneg %p291
      %p298 = scmp.eq.s32.totalorder %s34, 1
      %p299 = por %p297, %p298
      %p300 = scmp.ne.s32.totalorder %s292, %s295
      %p301 = scmp.eq.s32.totalorder %s34, 0
      %p302 = por %p300, %p301
      %p303 = scmp.ne.s32.totalorder %s292, %s295
      %p304 = scmp.eq.s32.totalorder %s39, 1
      %p305 = por %p303, %p304
      %p306 = scmp.ne.s32.totalorder %s295, %s296
      %p307 = scmp.eq.s32.totalorder %s39, 0
      %p308 = por %p306, %p307
      %p309 = scmp.ne.s32.totalorder %s295, %s296
      %p310 = scmp.eq.s32.totalorder %s40, 1
      %p311 = por %p309, %p310
      %p313 = scmp.ne.s32.totalorder %s296, %s312
      %p314 = scmp.eq.s32.totalorder %s40, 0
      %p315 = por %p313, %p314
      %s316 = ssub.s32 %s41, %s53
      %s317 = ssub.s32 %s42, %s49
      %s318 = sor.u32 %s316, %s317
      %p319 = scmp.eq.s32.totalorder %s318, 0
      %s321 = sadd.s32 %s320, 1
      %s322 = scalar_select %p319, %s320, %s321
      %p325 = pneg %p319
      %p326 = scmp.eq.s32.totalorder %s34, 1
      %p327 = por %p325, %p326
      %p328 = scmp.ne.s32.totalorder %s320, %s323
      %p329 = scmp.eq.s32.totalorder %s34, 0
      %p330 = por %p328, %p329
      %p331 = scmp.ne.s32.totalorder %s320, %s323
      %p332 = scmp.eq.s32.totalorder %s39, 1
      %p333 = por %p331, %p332
      %p334 = scmp.ne.s32.totalorder %s323, %s324
      %p335 = scmp.eq.s32.totalorder %s39, 0
      %p336 = por %p334, %p335
      %p337 = scmp.ne.s32.totalorder %s323, %s324
      %p338 = scmp.eq.s32.totalorder %s40, 1
      %p339 = por %p337, %p338
      %p341 = scmp.ne.s32.totalorder %s324, %s340
      %p342 = scmp.eq.s32.totalorder %s40, 0
      %p343 = por %p341, %p342
      %p344 = scmp.le.s32.totalorder 1, %s34
      %p345 = scmp.lt.s32.totalorder %s34, 3
      %p346 = pnand %p344, %p345
      %p347 = pneg %p346
      // Predicated region
      $region9: #{tpu_custom_call.1} parent=5 // pred_check
        _
      $region10: #{tpu_custom_call.1} parent=5 // pred_check_branch
        %349 = sbr.rel (%p346) target = $region12
      $region11: #{tpu_custom_call.1} parent=5 // pred_region
        %s350 = ssub.s32 %s34, 1
        // Predicated region
        $region13: #{tpu_custom_call.1} parent=11 // pred_check
          %p351 = pneg %p100
        $region14: #{tpu_custom_call.1} parent=11 // pred_check_branch
          %353 = sbr.rel (%p351) target = $region16
        $region15: #{tpu_custom_call.1} parent=11 // pred_region
          %s355 = ssub.s32 64, 64
          %356 = vsyncadd [#allocation7], %s355
          %s357 = smul.addr %s43, 64
          %s358 = scalar_lea.hbm %s1, %s357
          %s360 = sshll.u32 [#allocation6], 4
          %s361 = int_to_ptr.vmem [resolvable:$true] %s360
          %363 = dma.hbm_to_vmem [thread:$0]  %s358, 64, %s361, [#allocation7]
        $region16: #{tpu_custom_call.1} parent=11 // pred_fallthru
          _
        // Predicated region
        $region17: #{tpu_custom_call.1} parent=11 // pred_check
          %p364 = pneg %p126
        $region18: #{tpu_custom_call.1} parent=11 // pred_check_branch
          %366 = sbr.rel (%p364) target = $region20
        $region19: #{tpu_custom_call.1} parent=11 // pred_region
          %s368 = ssub.s32 64, 64
          %369 = vsyncadd [#allocation7], %s368
          %s370 = smul.addr %s43, 64
          %s371 = scalar_lea.hbm %s2, %s370
          %s373 = sshll.u32 [#allocation8], 4
          %s374 = int_to_ptr.vmem [resolvable:$true] %s373
          %376 = dma.hbm_to_vmem [thread:$0]  %s371, 64, %s374, [#allocation7]
        $region20: #{tpu_custom_call.1} parent=11 // pred_fallthru
          _
        // Predicated region
        $region21: #{tpu_custom_call.1} parent=11 // pred_check
          %p377 = pneg %p175
        $region22: #{tpu_custom_call.1} parent=11 // pred_check_branch
          %379 = sbr.rel (%p377) target = $region24
        $region23: #{tpu_custom_call.1} parent=11 // pred_region
          %s381 = ssub.s32 768, 768
          %382 = vsyncadd [#allocation10], %s381
          %s383 = sshll.u32 [#allocation11], 4
          %s384 = int_to_ptr.vmem [resolvable:$true] %s383
          %389 = dma.hbm_to_vmem [thread:$0]  %s4, 768, %s384, [#allocation10], 64, 64, 4
        $region24: #{tpu_custom_call.1} parent=11 // pred_fallthru
          _
        // Predicated region
        $region25: #{tpu_custom_call.1} parent=11 // pred_check
          %p390 = pneg %p196
        $region26: #{tpu_custom_call.1} parent=11 // pred_check_branch
          %392 = sbr.rel (%p390) target = $region28
        $region27: #{tpu_custom_call.1} parent=11 // pred_region
          %s394 = ssub.s32 48, 48
          %395 = vsyncadd [#allocation13], %s394
          %s396 = sshll.u32 [#allocation12], 4
          %s397 = int_to_ptr.vmem [resolvable:$true] %s396
          %402 = dma.hbm_to_vmem [thread:$0]  %s5, 48, %s397, [#allocation13], 16, 16, 1
        $region28: #{tpu_custom_call.1} parent=11 // pred_fallthru
          _
        // Predicated region
        $region29: #{tpu_custom_call.1} parent=11 // pred_check
          %p403 = pneg %p217
        $region30: #{tpu_custom_call.1} parent=11 // pred_check_branch
          %405 = sbr.rel (%p403) target = $region32
        $region31: #{tpu_custom_call.1} parent=11 // pred_region
          %s407 = ssub.s32 256, 256
          %408 = vsyncadd [#allocation13], %s407
          %s409 = sshll.u32 [#allocation14], 4
          %s410 = int_to_ptr.vmem [resolvable:$true] %s409
          %415 = dma.hbm_to_vmem [thread:$0]  %s6, 256, %s410, [#allocation13], 64, 64, 4
        $region32: #{tpu_custom_call.1} parent=11 // pred_fallthru
          _
        // Predicated region
        $region33: #{tpu_custom_call.1} parent=11 // pred_check
          %p416 = pneg %p238
        $region34: #{tpu_custom_call.1} parent=11 // pred_check_branch
          %418 = sbr.rel (%p416) target = $region36
        $region35: #{tpu_custom_call.1} parent=11 // pred_region
          %s420 = ssub.s32 16, 16
          %421 = vsyncadd [#allocation16], %s420
          %s423 = sshll.u32 [#allocation15], 4
          %s424 = int_to_ptr.vmem [resolvable:$true] %s423
          %426 = dma.hbm_to_vmem [thread:$0]  %s7, 16, %s424, [#allocation16]
        $region36: #{tpu_custom_call.1} parent=11 // pred_fallthru
          _
        // Predicated region
        $region37: #{tpu_custom_call.1} parent=11 // pred_check
          %p427 = pneg %p259
        $region38: #{tpu_custom_call.1} parent=11 // pred_check_branch
          %429 = sbr.rel (%p427) target = $region40
        $region39: #{tpu_custom_call.1} parent=11 // pred_region
          %s431 = ssub.s32 16, 16
          %432 = vsyncadd [#allocation16], %s431
          %s434 = sshll.u32 [#allocation17], 4
          %s435 = int_to_ptr.vmem [resolvable:$true] %s434
          %437 = dma.hbm_to_vmem [thread:$0]  %s8, 16, %s435, [#allocation16]
        $region40: #{tpu_custom_call.1} parent=11 // pred_fallthru
          _
        // Predicated region
        $region41: #{tpu_custom_call.1} parent=11 // pred_check
          %p438 = pneg %p280
        $region42: #{tpu_custom_call.1} parent=11 // pred_check_branch
          %440 = sbr.rel (%p438) target = $region44
        $region43: #{tpu_custom_call.1} parent=11 // pred_region
          %s442 = ssub.s32 16, 16
          %443 = vsyncadd [#allocation19], %s442
          %s445 = sshll.u32 [#allocation18], 4
          %s446 = int_to_ptr.vmem [resolvable:$true] %s445
          %448 = dma.hbm_to_vmem [thread:$0]  %s9, 16, %s446, [#allocation19]
        $region44: #{tpu_custom_call.1} parent=11 // pred_fallthru
          _
      $region12: #{tpu_custom_call.1} parent=5 // pred_fallthru
        _
      %p449 = scmp.lt.s32.totalorder %s34, 2
      // Predicated region
      $region45: #{tpu_custom_call.1} parent=5 // pred_check
        %p450 = pneg %p449
      $region46: #{tpu_custom_call.1} parent=5 // pred_check_branch
        %452 = sbr.rel (%p450) target = $region48
      $region47: #{tpu_custom_call.1} parent=5 // pred_region
        // Predicated region
        $region49: #{tpu_custom_call.1} parent=47 // pred_check
          %p453 = pneg %p68
        $region50: #{tpu_custom_call.1} parent=47 // pred_check_branch
          %455 = sbr.rel (%p453) target = $region52
        $region51: #{tpu_custom_call.1} parent=47 // pred_region
          %s456 = sand.u32 %s58, 1
          %s457 = scalar_lea.sflag [#allocation4], %s456
          %s458 = sand.u32 %s58, 1
          %s459 = smul.addr %s458, 8
          %s460 = scalar_lea.vmem [#allocation3], %s459
          %s462 = ssub.s32 128, 128
          %463 = vsyncadd %s457, %s462
          %s464 = sadd.s32 %s42, %s41
          %s465 = smul.addr %s464, 128
          %s466 = scalar_lea.hbm %s0, %s465
          %s468 = sshll.u32 %s460, 4
          %s469 = int_to_ptr.vmem [resolvable:$true] %s468
          %471 = dma.hbm_to_vmem [thread:$0]  %s466, 128, %s469, %s457
        $region52: #{tpu_custom_call.1} parent=47 // pred_fallthru
          _
        // Predicated region
        $region53: #{tpu_custom_call.1} parent=47 // pred_check
          %p472 = pneg %p148
        $region54: #{tpu_custom_call.1} parent=47 // pred_check_branch
          %474 = sbr.rel (%p472) target = $region56
        $region55: #{tpu_custom_call.1} parent=47 // pred_region
          %s475 = sand.u32 %s34, 1
          %s476 = scalar_lea.sflag [#allocation10], %s475
          %s477 = sand.u32 %s138, 1
          %s478 = smul.addr %s477, 8
          %s479 = scalar_lea.vmem [#allocation9], %s478
          %s481 = ssub.s32 128, 128
          %482 = vsyncadd %s476, %s481
          %s483 = smul.addr %s41, 4
          %s484 = sadd.s32 %s42, %s483
          %s485 = smul.addr %s484, 32
          %s486 = scalar_lea.hbm %s3, %s485
          %s487 = sshll.u32 %s479, 4
          %s488 = int_to_ptr.vmem [resolvable:$true] %s487
          %493 = dma.hbm_to_vmem [thread:$0]  %s486, 128, %s488, %s476, 32, 32, 2
        $region56: #{tpu_custom_call.1} parent=47 // pred_fallthru
          _
      $region48: #{tpu_custom_call.1} parent=5 // pred_fallthru
        _
      %p494 = scmp.le.s32.totalorder 1, %s34
      %p495 = scmp.lt.s32.totalorder %s34, 3
      %p496 = pnand %p494, %p495
      %p497 = pneg %p496
      // Predicated region
      $region57: #{tpu_custom_call.1} parent=5 // pred_check
        _
      $region58: #{tpu_custom_call.1} parent=5 // pred_check_branch
        %499 = sbr.rel (%p496) target = $region60
      $region59: #{tpu_custom_call.1} parent=5 // pred_region
        %s500 = ssub.s32 %s34, 1
        %s501 = sand.u32 %s61, 1
        %s502 = scalar_lea.sflag [#allocation4], %s501
        %s503 = sand.u32 %s61, 1
        %s504 = smul.addr %s503, 8
        %s505 = scalar_lea.vmem [#allocation3], %s504
        // Predicated region
        $region61: #{tpu_custom_call.1} parent=59 // pred_check
          %p506 = pneg %p74
        $region62: #{tpu_custom_call.1} parent=59 // pred_check_branch
          %508 = sbr.rel (%p506) target = $region64
        $region63: #{tpu_custom_call.1} parent=59 // pred_region
          %509 = dma.done %s502, 128
        $region64: #{tpu_custom_call.1} parent=59 // pred_fallthru
          _
        // Predicated region
        $region65: #{tpu_custom_call.1} parent=59 // pred_check
          %p510 = pneg %p100
        $region66: #{tpu_custom_call.1} parent=59 // pred_check_branch
          %512 = sbr.rel (%p510) target = $region68
        $region67: #{tpu_custom_call.1} parent=59 // pred_region
          %513 = dma.done [#allocation7], 64
        $region68: #{tpu_custom_call.1} parent=59 // pred_fallthru
          _
        // Predicated region
        $region69: #{tpu_custom_call.1} parent=59 // pred_check
          %p514 = pneg %p126
        $region70: #{tpu_custom_call.1} parent=59 // pred_check_branch
          %516 = sbr.rel (%p514) target = $region72
        $region71: #{tpu_custom_call.1} parent=59 // pred_region
          %517 = dma.done [#allocation7], 64
        $region72: #{tpu_custom_call.1} parent=59 // pred_fallthru
          _
        %s518 = sand.u32 %s39, 1
        %s519 = scalar_lea.sflag [#allocation10], %s518
        %s520 = sand.u32 %s141, 1
        %s521 = smul.addr %s520, 8
        %s522 = scalar_lea.vmem [#allocation9], %s521
        // Predicated region
        $region73: #{tpu_custom_call.1} parent=59 // pred_check
          %p523 = pneg %p154
        $region74: #{tpu_custom_call.1} parent=59 // pred_check_branch
          %525 = sbr.rel (%p523) target = $region76
        $region75: #{tpu_custom_call.1} parent=59 // pred_region
          %526 = dma.done %s519, 128
        $region76: #{tpu_custom_call.1} parent=59 // pred_fallthru
          _
        // Predicated region
        $region77: #{tpu_custom_call.1} parent=59 // pred_check
          %p527 = pneg %p175
        $region78: #{tpu_custom_call.1} parent=59 // pred_check_branch
          %529 = sbr.rel (%p527) target = $region80
        $region79: #{tpu_custom_call.1} parent=59 // pred_region
          %530 = dma.done [#allocation10], 768
        $region80: #{tpu_custom_call.1} parent=59 // pred_fallthru
          _
        // Predicated region
        $region81: #{tpu_custom_call.1} parent=59 // pred_check
          %p531 = pneg %p196
        $region82: #{tpu_custom_call.1} parent=59 // pred_check_branch
          %533 = sbr.rel (%p531) target = $region84
        $region83: #{tpu_custom_call.1} parent=59 // pred_region
          %534 = dma.done [#allocation13], 48
        $region84: #{tpu_custom_call.1} parent=59 // pred_fallthru
          _
        // Predicated region
        $region85: #{tpu_custom_call.1} parent=59 // pred_check
          %p535 = pneg %p217
        $region86: #{tpu_custom_call.1} parent=59 // pred_check_branch
          %537 = sbr.rel (%p535) target = $region88
        $region87: #{tpu_custom_call.1} parent=59 // pred_region
          %538 = dma.done [#allocation13], 256
        $region88: #{tpu_custom_call.1} parent=59 // pred_fallthru
          _
        // Predicated region
        $region89: #{tpu_custom_call.1} parent=59 // pred_check
          %p539 = pneg %p238
        $region90: #{tpu_custom_call.1} parent=59 // pred_check_branch
          %541 = sbr.rel (%p539) target = $region92
        $region91: #{tpu_custom_call.1} parent=59 // pred_region
          %542 = dma.done [#allocation16], 16
        $region92: #{tpu_custom_call.1} parent=59 // pred_fallthru
          _
        // Predicated region
        $region93: #{tpu_custom_call.1} parent=59 // pred_check
          %p543 = pneg %p259
        $region94: #{tpu_custom_call.1} parent=59 // pred_check_branch
          %545 = sbr.rel (%p543) target = $region96
        $region95: #{tpu_custom_call.1} parent=59 // pred_region
          %546 = dma.done [#allocation16], 16
        $region96: #{tpu_custom_call.1} parent=59 // pred_fallthru
          _
        // Predicated region
        $region97: #{tpu_custom_call.1} parent=59 // pred_check
          %p547 = pneg %p280
        $region98: #{tpu_custom_call.1} parent=59 // pred_check_branch
          %549 = sbr.rel (%p547) target = $region100
        $region99: #{tpu_custom_call.1} parent=59 // pred_region
          %550 = dma.done [#allocation19], 16
        $region100: #{tpu_custom_call.1} parent=59 // pred_fallthru
          _
        %s551 = sand.u32 %s61, 1
        %s552 = scalar_lea.sflag [#allocation4], %s551
        %s553 = sand.u32 %s61, 1
        %s554 = smul.addr %s553, 8
        %s555 = scalar_lea.vmem [#allocation3], %s554
        %p556 = pneg %p74
        %p557 = pneg %p71
        %p558 = pneg %p100
        %p559 = pneg %p97
        %p560 = pneg %p126
        %p561 = pneg %p123
        %s562 = sand.u32 %s39, 1
        %s563 = scalar_lea.sflag [#allocation10], %s562
        %s564 = sand.u32 %s141, 1
        %s565 = smul.addr %s564, 8
        %s566 = scalar_lea.vmem [#allocation9], %s565
        %p567 = pneg %p154
        %p568 = pneg %p151
        %p569 = pneg %p175
        %p570 = pneg %p172
        %p571 = pneg %p196
        %p572 = pneg %p193
        %p573 = pneg %p217
        %p574 = pneg %p214
        %p575 = pneg %p238
        %p576 = pneg %p235
        %p577 = pneg %p259
        %p578 = pneg %p256
        %p579 = pneg %p280
        %p580 = pneg %p277
        %p581 = pneg %p308
        %p582 = pneg %p305
        %s583 = sand.u32 %s295, 1
        %s584 = scalar_lea.sflag [#allocation5], %s583
        %s585 = sand.u32 %s295, 1
        %s586 = smul.addr %s585, 8
        %s587 = scalar_lea.vmem [#allocation20], %s586
        %p588 = pneg %p336
        %p589 = pneg %p333
        %s590 = sand.u32 %s323, 1
        %s591 = scalar_lea.sflag [#allocation22], %s590
        %s592 = sand.u32 %s323, 1
        %s593 = smul.addr %s592, 16
        %s594 = scalar_lea.vmem [#allocation21], %s593
        %p598 = scmp.eq.s32.totalorder %s44, 0
        // Predicated region
        $region101: #{tpu_custom_call.1} parent=59 // pred_check
          %p599 = pneg %p598
        $region102: #{tpu_custom_call.1} parent=59 // pred_check_branch
          %601 = sbr.rel (%p599) target = $region104
        $region103: #{tpu_custom_call.1} parent=59 // pred_region
          %v602 = vld [vmem:[#allocation6] sm:$0xf]
          %s603 = scalar_lea.vmem [#allocation11], 16
          %v604 = vld [vmem:[%s603] sm:$0xf]
          %v605 = vld [vmem:[%s603 + $0x4] sm:$0xf]
          %v606 = vld [vmem:[%s603 + $0x8] sm:$0xf]
          %v607 = vld [vmem:[%s603 + $0xc] sm:$0xf]
          %s608 = scalar_lea.vmem [#allocation12], 1
          %v609 = vld [vmem:[%s608] sm:$0x1]
          %v611 = vlaneseq
          %v612 = vshrl.u32 %v611, 7
          %v613 = vsub.s32 0, %v612
          %v614 = vrot.slane %v609, %v613
          %v620 = vunpack.c.l.b16 %v604
          %v621 = vunpack.c.l.b16 %v605
          %v622 = vunpack.c.l.b16 %v606
          %v623 = vunpack.c.l.b16 %v607
          %v624 = vpack.c.b16 %v621, %v620
          %v625 = vpack.c.b16 %v623, %v622
          %vm628 = vcmask 261120
          %v630 = vsel %vm628, %v602, 0
          %632 = vmatprep.subr.bf16.mxu0 0
          %633 = vmatpush1.bf16.msra.mxu0 %v624
          %634 = vmatprep.subr.bf16.mxu0 0
          %635 = vmatpush1.bf16.msra.mxu0 %v625
          %636 = vmatprep.subr.bf16.mxu0 0
          %637 = vmatpush1.bf16.msra.mxu0 0
          %638 = vmatprep.subr.bf16.mxu0 0
          %639 = vmatpush1.bf16.msra.mxu0 0
          %640 = vmatprep.subr.bf16.mxu0 0
          %641 = vmatpush1.bf16.msra.mxu0 0
          %642 = vmatprep.subr.bf16.mxu0 0
          %643 = vmatpush1.bf16.msra.mxu0 0
          %644 = vmatprep.subr.bf16.mxu0 0
          %645 = vmatpush1.bf16.msra.mxu0 0
          %646 = vmatprep.subr.bf16.mxu0 0
          %647 = vmatpush1.bf16.msra.mxu0 0
          %648 = vmatprep.subr.bf16.mxu0 0
          %649 = vmatpush1.bf16.msra.mxu0 0
          %650 = vmatprep.subr.bf16.mxu0 0
          %651 = vmatpush1.bf16.msra.mxu0 0
          %652 = vmatprep.subr.bf16.mxu0 0
          %653 = vmatpush1.bf16.msra.mxu0 0
          %654 = vmatprep.subr.bf16.mxu0 0
          %655 = vmatpush1.bf16.msra.mxu0 0
          %656 = vmatprep.subr.bf16.mxu0 0
          %657 = vmatpush1.bf16.msra.mxu0 0
          %658 = vmatprep.subr.bf16.mxu0 0
          %659 = vmatpush1.bf16.msra.mxu0 0
          %660 = vmatprep.subr.bf16.mxu0 0
          %661 = vmatpush1.bf16.msra.mxu0 0
          %662 = vmatprep.subr.bf16.mxu0 0
          %663 = vmatpush1.bf16.msra.mxu0 0
          %664 = vmatprep.mubr.bf16.mxu0 0
          %665 = vmatmul.mubr.bf16.gmra.mrb[0].mxu0 %v630
          %v666 = vpop.f32.mrb[0].mxu0
          %v667 = vadd.f32 %v614, %v666
          %v668 = vpop.f32.mrb[0].mxu0
          %v669 = vpop.f32.mrb[0].mxu0
          %v670 = vpop.f32.mrb[0].mxu0
          %671 = vdwg.mxu0
          %v672 = vld [vmem:[#allocation8] sm:$0xf]
          %s673 = scalar_lea.vmem [#allocation11], 32
          %v674 = vld [vmem:[%s673] sm:$0xf]
          %v675 = vld [vmem:[%s673 + $0x4] sm:$0xf]
          %v676 = vld [vmem:[%s673 + $0x8] sm:$0xf]
          %v677 = vld [vmem:[%s673 + $0xc] sm:$0xf]
          %s678 = scalar_lea.vmem [#allocation12], 2
          %v679 = vld [vmem:[%s678] sm:$0x1]
          %v681 = vlaneseq
          %v682 = vshrl.u32 %v681, 7
          %v683 = vsub.s32 0, %v682
          %v684 = vrot.slane %v679, %v683
          %v690 = vunpack.c.l.b16 %v674
          %v691 = vunpack.c.l.b16 %v675
          %v692 = vunpack.c.l.b16 %v676
          %v693 = vunpack.c.l.b16 %v677
          %v694 = vpack.c.b16 %v691, %v690
          %v695 = vpack.c.b16 %v693, %v692
          %v699 = vsel %vm628, %v672, 0
          %701 = vmatprep.subr.bf16.mxu0 0
          %702 = vmatpush1.bf16.msra.mxu0 %v694
          %703 = vmatprep.subr.bf16.mxu0 0
          %704 = vmatpush1.bf16.msra.mxu0 %v695
          %705 = vmatprep.subr.bf16.mxu0 0
          %706 = vmatpush1.bf16.msra.mxu0 0
          %707 = vmatprep.subr.bf16.mxu0 0
          %708 = vmatpush1.bf16.msra.mxu0 0
          %709 = vmatprep.subr.bf16.mxu0 0
          %710 = vmatpush1.bf16.msra.mxu0 0
          %711 = vmatprep.subr.bf16.mxu0 0
          %712 = vmatpush1.bf16.msra.mxu0 0
          %713 = vmatprep.subr.bf16.mxu0 0
          %714 = vmatpush1.bf16.msra.mxu0 0
          %715 = vmatprep.subr.bf16.mxu0 0
          %716 = vmatpush1.bf16.msra.mxu0 0
          %717 = vmatprep.subr.bf16.mxu0 0
          %718 = vmatpush1.bf16.msra.mxu0 0
          %719 = vmatprep.subr.bf16.mxu0 0
          %720 = vmatpush1.bf16.msra.mxu0 0
          %721 = vmatprep.subr.bf16.mxu0 0
          %722 = vmatpush1.bf16.msra.mxu0 0
          %723 = vmatprep.subr.bf16.mxu0 0
          %724 = vmatpush1.bf16.msra.mxu0 0
          %725 = vmatprep.subr.bf16.mxu0 0
          %726 = vmatpush1.bf16.msra.mxu0 0
          %727 = vmatprep.subr.bf16.mxu0 0
          %728 = vmatpush1.bf16.msra.mxu0 0
          %729 = vmatprep.subr.bf16.mxu0 0
          %730 = vmatpush1.bf16.msra.mxu0 0
          %731 = vmatprep.subr.bf16.mxu0 0
          %732 = vmatpush1.bf16.msra.mxu0 0
          %733 = vmatprep.mubr.bf16.mxu0 0
          %734 = vmatmul.mubr.bf16.gmra.mrb[0].mxu0 %v699
          %v735 = vpop.f32.mrb[0].mxu0
          %v736 = vadd.f32 %v684, %v735
          %v737 = vpop.f32.mrb[0].mxu0
          %v738 = vpop.f32.mrb[0].mxu0
          %v739 = vpop.f32.mrb[0].mxu0
          %740 = vdwg.mxu0
          %v741 = vpack.c.bf16 %v667, %v667
          %vm742 = vcmask 257024
          %743 = vst.msk [vmem:[#allocation2] sm:$0xf] %vm742, %v741
          %v744 = vpack.c.bf16 %v736, %v736
          %s745 = scalar_lea.vmem [#allocation2], 4
          %746 = vst.msk [vmem:[%s745] sm:$0xf] %vm742, %v744
        $region104: #{tpu_custom_call.1} parent=59 // pred_fallthru
          _
        %v747 = vld [vmem:[%s505] sm:$0xff]
        %v748 = vpack.c.bf16 %v747, %v747
        %v749 = vld [vmem:[#allocation11] sm:$0xf]
        %v750 = vld [vmem:[#allocation11 + $0x4] sm:$0xf]
        %v751 = vld [vmem:[#allocation11 + $0x8] sm:$0xf]
        %v752 = vld [vmem:[#allocation11 + $0xc] sm:$0xf]
        %v753 = vld [vmem:[#allocation12] sm:$0x1]
        %v755 = vlaneseq
        %v756 = vshrl.u32 %v755, 7
        %v757 = vsub.s32 0, %v756
        %v758 = vrot.slane %v753, %v757
        %v764 = vunpack.c.l.b16 %v749
        %v765 = vunpack.c.l.b16 %v750
        %v766 = vunpack.c.l.b16 %v751
        %v767 = vunpack.c.l.b16 %v752
        %v768 = vpack.c.b16 %v765, %v764
        %v769 = vpack.c.b16 %v767, %v766
        %vm772 = vcmask 261120
        %v774 = vsel %vm772, %v748, 0
        %776 = vmatprep.subr.bf16.mxu0 0
        %777 = vmatpush1.bf16.msra.mxu0 %v768
        %778 = vmatprep.subr.bf16.mxu0 0
        %779 = vmatpush1.bf16.msra.mxu0 %v769
        %780 = vmatprep.subr.bf16.mxu0 0
        %781 = vmatpush1.bf16.msra.mxu0 0
        %782 = vmatprep.subr.bf16.mxu0 0
        %783 = vmatpush1.bf16.msra.mxu0 0
        %784 = vmatprep.subr.bf16.mxu0 0
        %785 = vmatpush1.bf16.msra.mxu0 0
        %786 = vmatprep.subr.bf16.mxu0 0
        %787 = vmatpush1.bf16.msra.mxu0 0
        %788 = vmatprep.subr.bf16.mxu0 0
        %789 = vmatpush1.bf16.msra.mxu0 0
        %790 = vmatprep.subr.bf16.mxu0 0
        %791 = vmatpush1.bf16.msra.mxu0 0
        %792 = vmatprep.subr.bf16.mxu0 0
        %793 = vmatpush1.bf16.msra.mxu0 0
        %794 = vmatprep.subr.bf16.mxu0 0
        %795 = vmatpush1.bf16.msra.mxu0 0
        %796 = vmatprep.subr.bf16.mxu0 0
        %797 = vmatpush1.bf16.msra.mxu0 0
        %798 = vmatprep.subr.bf16.mxu0 0
        %799 = vmatpush1.bf16.msra.mxu0 0
        %800 = vmatprep.subr.bf16.mxu0 0
        %801 = vmatpush1.bf16.msra.mxu0 0
        %802 = vmatprep.subr.bf16.mxu0 0
        %803 = vmatpush1.bf16.msra.mxu0 0
        %804 = vmatprep.subr.bf16.mxu0 0
        %805 = vmatpush1.bf16.msra.mxu0 0
        %806 = vmatprep.subr.bf16.mxu0 0
        %807 = vmatpush1.bf16.msra.mxu0 0
        %808 = vmatprep.mubr.bf16.mxu0 0
        %809 = vmatmul.mubr.bf16.gmra.mrb[0].mxu0 %v774
        %v810 = vpop.f32.mrb[0].mxu0
        %v811 = vadd.f32 %v758, %v810
        %v812 = vpop.f32.mrb[0].mxu0
        %v813 = vpop.f32.mrb[0].mxu0
        %v814 = vpop.f32.mrb[0].mxu0
        %815 = vdwg.mxu0
        %817 = vrot.lane.b32.xlu0 %v811, 120
        %v818 = vpop.permute.xlu0 %817
        %820 = vrot.lane.b32.xlu0 %v811, 112
        %v821 = vpop.permute.xlu0 %820
        %823 = vrot.lane.b32.xlu0 %v811, 104
        %v824 = vpop.permute.xlu0 %823
        %v826 = vcombine.low %v811, %v821
        %v827 = vcombine.high %v811, %v821
        %v829 = vunpack.c.l.s4 1983009808
        %v830 = vunpack.c.0.s8 %v829
        %v831 = vlaneseq
        %v832 = vshrl.u32 %v831, 7
        %v833 = vsub.s32 %v830, %v832
        %v834 = vrot.slane %v826, %v833
        %v836 = vunpack.c.l.s4 1983009808
        %v837 = vunpack.c.0.s8 %v836
        %v838 = vlaneseq
        %v839 = vshrl.u32 %v838, 7
        %v840 = vsub.s32 %v837, %v839
        %v841 = vrot.slane %v827, %v840
        %v842 = vcombine.low %v818, %v824
        %v843 = vcombine.high %v818, %v824
        %v845 = vunpack.c.l.s4 1983009808
        %v846 = vunpack.c.0.s8 %v845
        %v847 = vlaneseq
        %v848 = vshrl.u32 %v847, 7
        %v849 = vsub.s32 %v846, %v848
        %v850 = vrot.slane %v842, %v849
        %v852 = vunpack.c.l.s4 1983009808
        %v853 = vunpack.c.0.s8 %v852
        %v854 = vlaneseq
        %v855 = vshrl.u32 %v854, 7
        %v856 = vsub.s32 %v853, %v855
        %v857 = vrot.slane %v843, %v856
        %v858 = vcombine.low %v834, %v850
        %v859 = vcombine.high %v834, %v850
        %v861 = vunpack.c.l.s4 1934713408
        %v862 = vunpack.c.0.s8 %v861
        %v863 = vlaneseq
        %v864 = vshrl.u32 %v863, 7
        %v865 = vsub.s32 %v862, %v864
        %v866 = vrot.slane %v858, %v865
        %v868 = vunpack.c.l.s4 1934713408
        %v869 = vunpack.c.0.s8 %v868
        %v870 = vlaneseq
        %v871 = vshrl.u32 %v870, 7
        %v872 = vsub.s32 %v869, %v871
        %v873 = vrot.slane %v859, %v872
        %v874 = vcombine.low %v841, %v857
        %v875 = vcombine.high %v841, %v857
        %v877 = vunpack.c.l.s4 1934713408
        %v878 = vunpack.c.0.s8 %v877
        %v879 = vlaneseq
        %v880 = vshrl.u32 %v879, 7
        %v881 = vsub.s32 %v878, %v880
        %v882 = vrot.slane %v874, %v881
        %v884 = vunpack.c.l.s4 1934713408
        %v885 = vunpack.c.0.s8 %v884
        %v886 = vlaneseq
        %v887 = vshrl.u32 %v886, 7
        %v888 = vsub.s32 %v885, %v887
        %v889 = vrot.slane %v875, %v888
        %v890 = vcombine.high %v866, 0.0
        %v891 = vcombine.high %v873, 0.0
        %v892 = vcombine.high %v882, 0.0
        %v893 = vcombine.high %v889, 0.0
        %v894 = vcombine.low %v866, %v873
        %v896 = vunpack.c.l.s4 1983009808
        %v897 = vunpack.c.0.s8 %v896
        %v898 = vlaneseq
        %v899 = vshrl.u32 %v898, 7
        %v900 = vsub.s32 %v897, %v899
        %v901 = vrot.slane %v894, %v900
        %v902 = vcombine.low %v890, %v891
        %v904 = vunpack.c.l.s4 1983009808
        %v905 = vunpack.c.0.s8 %v904
        %v906 = vlaneseq
        %v907 = vshrl.u32 %v906, 7
        %v908 = vsub.s32 %v905, %v907
        %v909 = vrot.slane %v902, %v908
        %v910 = vcombine.low %v882, %v889
        %v912 = vunpack.c.l.s4 1983009808
        %v913 = vunpack.c.0.s8 %v912
        %v914 = vlaneseq
        %v915 = vshrl.u32 %v914, 7
        %v916 = vsub.s32 %v913, %v915
        %v917 = vrot.slane %v910, %v916
        %v918 = vcombine.low %v892, %v893
        %v920 = vunpack.c.l.s4 1983009808
        %v921 = vunpack.c.0.s8 %v920
        %v922 = vlaneseq
        %v923 = vshrl.u32 %v922, 7
        %v924 = vsub.s32 %v921, %v923
        %v925 = vrot.slane %v918, %v924
        %v926 = vcombine.low %v901, %v909
        %v927 = vcombine.high %v901, %v909
        %v929 = vunpack.c.l.s4 1934713408
        %v930 = vunpack.c.0.s8 %v929
        %v931 = vlaneseq
        %v932 = vshrl.u32 %v931, 7
        %v933 = vsub.s32 %v930, %v932
        %v934 = vrot.slane %v926, %v933
        %v936 = vunpack.c.l.s4 1934713408
        %v937 = vunpack.c.0.s8 %v936
        %v938 = vlaneseq
        %v939 = vshrl.u32 %v938, 7
        %v940 = vsub.s32 %v937, %v939
        %v941 = vrot.slane %v927, %v940
        %v942 = vcombine.low %v917, %v925
        %v943 = vcombine.high %v917, %v925
        %v945 = vunpack.c.l.s4 1934713408
        %v946 = vunpack.c.0.s8 %v945
        %v947 = vlaneseq
        %v948 = vshrl.u32 %v947, 7
        %v949 = vsub.s32 %v946, %v948
        %v950 = vrot.slane %v942, %v949
        %v952 = vunpack.c.l.s4 1934713408
        %v953 = vunpack.c.0.s8 %v952
        %v954 = vlaneseq
        %v955 = vshrl.u32 %v954, 7
        %v956 = vsub.s32 %v953, %v955
        %v957 = vrot.slane %v943, %v956
        %v958 = vcombine.low %v934, %v950
        %v959 = vcombine.high %v934, %v950
        %v960 = vcombine.low %v941, %v957
        %v961 = vcombine.high %v941, %v957
        %v962 = vld [vmem:[#allocation2] sm:$0xf]
        %964 = vrot.lane.b32.xlu0 %v962, 120
        %v965 = vpop.permute.xlu0 %964
        %966 = vrot.lane.b32.xlu0 %v962, 112
        %v967 = vpop.permute.xlu0 %966
        %968 = vrot.lane.b32.xlu0 %v962, 104
        %v969 = vpop.permute.xlu0 %968
        %v972 = vpack.i.b16 %v965, %v962
        %v973 = vshrl.u32 %v962, 16
        %v974 = vshrl.u32 %v965, 16
        %v975 = vpack.i.b16 %v974, %v973
        %v978 = vpack.i.b16 %v969, %v967
        %v979 = vshrl.u32 %v967, 16
        %v980 = vshrl.u32 %v969, 16
        %v981 = vpack.i.b16 %v980, %v979
        %v984 = vunpack.c.l.s4 1983009808
        %v985 = vunpack.c.0.s8 %v984
        %v986 = vlaneseq
        %v987 = vshrl.u32 %v986, 7
        %v988 = vsub.s32 %v985, %v987
        %v989 = vrot.slane %v972, %v988
        %v992 = vunpack.c.l.s4 1983009808
        %v993 = vunpack.c.0.s8 %v992
        %v994 = vlaneseq
        %v995 = vshrl.u32 %v994, 7
        %v996 = vsub.s32 %v993, %v995
        %v997 = vrot.slane %v978, %v996
        %v998 = vcombine.low %v989, %v997
        %v999 = vcombine.high %v989, %v997
        %v1001 = vunpack.c.l.s4 1934713408
        %v1002 = vunpack.c.0.s8 %v1001
        %v1003 = vlaneseq
        %v1004 = vshrl.u32 %v1003, 7
        %v1005 = vsub.s32 %v1002, %v1004
        %v1006 = vrot.slane %v998, %v1005
        %v1008 = vunpack.c.l.s4 1934713408
        %v1009 = vunpack.c.0.s8 %v1008
        %v1010 = vlaneseq
        %v1011 = vshrl.u32 %v1010, 7
        %v1012 = vsub.s32 %v1009, %v1011
        %v1013 = vrot.slane %v999, %v1012
        %v1014 = vcombine.high %v1006, 0
        %v1015 = vcombine.high %v1013, 0
        %v1018 = vunpack.c.l.s4 1983009808
        %v1019 = vunpack.c.0.s8 %v1018
        %v1020 = vlaneseq
        %v1021 = vshrl.u32 %v1020, 7
        %v1022 = vsub.s32 %v1019, %v1021
        %v1023 = vrot.slane %v975, %v1022
        %v1026 = vunpack.c.l.s4 1983009808
        %v1027 = vunpack.c.0.s8 %v1026
        %v1028 = vlaneseq
        %v1029 = vshrl.u32 %v1028, 7
        %v1030 = vsub.s32 %v1027, %v1029
        %v1031 = vrot.slane %v981, %v1030
        %v1032 = vcombine.low %v1023, %v1031
        %v1033 = vcombine.high %v1023, %v1031
        %v1035 = vunpack.c.l.s4 1934713408
        %v1036 = vunpack.c.0.s8 %v1035
        %v1037 = vlaneseq
        %v1038 = vshrl.u32 %v1037, 7
        %v1039 = vsub.s32 %v1036, %v1038
        %v1040 = vrot.slane %v1032, %v1039
        %v1042 = vunpack.c.l.s4 1934713408
        %v1043 = vunpack.c.0.s8 %v1042
        %v1044 = vlaneseq
        %v1045 = vshrl.u32 %v1044, 7
        %v1046 = vsub.s32 %v1043, %v1045
        %v1047 = vrot.slane %v1033, %v1046
        %v1048 = vcombine.high %v1040, 0
        %v1049 = vcombine.high %v1047, 0
        %v1050 = vcombine.low %v1006, %v1013
        %v1052 = vunpack.c.l.s4 1983009808
        %v1053 = vunpack.c.0.s8 %v1052
        %v1054 = vlaneseq
        %v1055 = vshrl.u32 %v1054, 7
        %v1056 = vsub.s32 %v1053, %v1055
        %v1057 = vrot.slane %v1050, %v1056
        %v1058 = vcombine.low %v1014, %v1015
        %v1060 = vunpack.c.l.s4 1983009808
        %v1061 = vunpack.c.0.s8 %v1060
        %v1062 = vlaneseq
        %v1063 = vshrl.u32 %v1062, 7
        %v1064 = vsub.s32 %v1061, %v1063
        %v1065 = vrot.slane %v1058, %v1064
        %v1066 = vcombine.low %v1057, %v1065
        %v1068 = vunpack.c.l.s4 1934713408
        %v1069 = vunpack.c.0.s8 %v1068
        %v1070 = vlaneseq
        %v1071 = vshrl.u32 %v1070, 7
        %v1072 = vsub.s32 %v1069, %v1071
        %v1073 = vrot.slane %v1066, %v1072
        %v1074 = vcombine.high %v1073, 0
        %v1075 = vcombine.low %v1040, %v1047
        %v1077 = vunpack.c.l.s4 1983009808
        %v1078 = vunpack.c.0.s8 %v1077
        %v1079 = vlaneseq
        %v1080 = vshrl.u32 %v1079, 7
        %v1081 = vsub.s32 %v1078, %v1080
        %v1082 = vrot.slane %v1075, %v1081
        %v1083 = vcombine.low %v1048, %v1049
        %v1085 = vunpack.c.l.s4 1983009808
        %v1086 = vunpack.c.0.s8 %v1085
        %v1087 = vlaneseq
        %v1088 = vshrl.u32 %v1087, 7
        %v1089 = vsub.s32 %v1086, %v1088
        %v1090 = vrot.slane %v1083, %v1089
        %v1091 = vcombine.low %v1082, %v1090
        %v1093 = vunpack.c.l.s4 1934713408
        %v1094 = vunpack.c.0.s8 %v1093
        %v1095 = vlaneseq
        %v1096 = vshrl.u32 %v1095, 7
        %v1097 = vsub.s32 %v1094, %v1096
        %v1098 = vrot.slane %v1091, %v1097
        %v1099 = vcombine.high %v1098, 0
        %v1102 = vpack.i.b16 %v1098, %v1073
        %v1103 = vshrl.u32 %v1073, 16
        %v1104 = vshrl.u32 %v1098, 16
        %v1105 = vpack.i.b16 %v1104, %v1103
        %v1108 = vpack.i.b16 %v1099, %v1074
        %v1109 = vshrl.u32 %v1074, 16
        %v1110 = vshrl.u32 %v1099, 16
        %v1111 = vpack.i.b16 %v1110, %v1109
        %s1112 = scalar_lea.vmem [#allocation2], 4
        %v1113 = vld [vmem:[%s1112] sm:$0xf]
        %1115 = vrot.lane.b32.xlu0 %v1113, 120
        %v1116 = vpop.permute.xlu0 %1115
        %1117 = vrot.lane.b32.xlu0 %v1113, 112
        %v1118 = vpop.permute.xlu0 %1117
        %1119 = vrot.lane.b32.xlu0 %v1113, 104
        %v1120 = vpop.permute.xlu0 %1119
        %v1123 = vpack.i.b16 %v1116, %v1113
        %v1124 = vshrl.u32 %v1113, 16
        %v1125 = vshrl.u32 %v1116, 16
        %v1126 = vpack.i.b16 %v1125, %v1124
        %v1129 = vpack.i.b16 %v1120, %v1118
        %v1130 = vshrl.u32 %v1118, 16
        %v1131 = vshrl.u32 %v1120, 16
        %v1132 = vpack.i.b16 %v1131, %v1130
        %v1135 = vunpack.c.l.s4 1983009808
        %v1136 = vunpack.c.0.s8 %v1135
        %v1137 = vlaneseq
        %v1138 = vshrl.u32 %v1137, 7
        %v1139 = vsub.s32 %v1136, %v1138
        %v1140 = vrot.slane %v1123, %v1139
        %v1143 = vunpack.c.l.s4 1983009808
        %v1144 = vunpack.c.0.s8 %v1143
        %v1145 = vlaneseq
        %v1146 = vshrl.u32 %v1145, 7
        %v1147 = vsub.s32 %v1144, %v1146
        %v1148 = vrot.slane %v1129, %v1147
        %v1149 = vcombine.low %v1140, %v1148
        %v1150 = vcombine.high %v1140, %v1148
        %v1152 = vunpack.c.l.s4 1934713408
        %v1153 = vunpack.c.0.s8 %v1152
        %v1154 = vlaneseq
        %v1155 = vshrl.u32 %v1154, 7
        %v1156 = vsub.s32 %v1153, %v1155
        %v1157 = vrot.slane %v1149, %v1156
        %v1159 = vunpack.c.l.s4 1934713408
        %v1160 = vunpack.c.0.s8 %v1159
        %v1161 = vlaneseq
        %v1162 = vshrl.u32 %v1161, 7
        %v1163 = vsub.s32 %v1160, %v1162
        %v1164 = vrot.slane %v1150, %v1163
        %v1165 = vcombine.high %v1157, 0
        %v1166 = vcombine.high %v1164, 0
        %v1169 = vunpack.c.l.s4 1983009808
        %v1170 = vunpack.c.0.s8 %v1169
        %v1171 = vlaneseq
        %v1172 = vshrl.u32 %v1171, 7
        %v1173 = vsub.s32 %v1170, %v1172
        %v1174 = vrot.slane %v1126, %v1173
        %v1177 = vunpack.c.l.s4 1983009808
        %v1178 = vunpack.c.0.s8 %v1177
        %v1179 = vlaneseq
        %v1180 = vshrl.u32 %v1179, 7
        %v1181 = vsub.s32 %v1178, %v1180
        %v1182 = vrot.slane %v1132, %v1181
        %v1183 = vcombine.low %v1174, %v1182
        %v1184 = vcombine.high %v1174, %v1182
        %v1186 = vunpack.c.l.s4 1934713408
        %v1187 = vunpack.c.0.s8 %v1186
        %v1188 = vlaneseq
        %v1189 = vshrl.u32 %v1188, 7
        %v1190 = vsub.s32 %v1187, %v1189
        %v1191 = vrot.slane %v1183, %v1190
        %v1193 = vunpack.c.l.s4 1934713408
        %v1194 = vunpack.c.0.s8 %v1193
        %v1195 = vlaneseq
        %v1196 = vshrl.u32 %v1195, 7
        %v1197 = vsub.s32 %v1194, %v1196
        %v1198 = vrot.slane %v1184, %v1197
        %v1199 = vcombine.high %v1191, 0
        %v1200 = vcombine.high %v1198, 0
        %v1201 = vcombine.low %v1157, %v1164
        %v1203 = vunpack.c.l.s4 1983009808
        %v1204 = vunpack.c.0.s8 %v1203
        %v1205 = vlaneseq
        %v1206 = vshrl.u32 %v1205, 7
        %v1207 = vsub.s32 %v1204, %v1206
        %v1208 = vrot.slane %v1201, %v1207
        %v1209 = vcombine.low %v1165, %v1166
        %v1211 = vunpack.c.l.s4 1983009808
        %v1212 = vunpack.c.0.s8 %v1211
        %v1213 = vlaneseq
        %v1214 = vshrl.u32 %v1213, 7
        %v1215 = vsub.s32 %v1212, %v1214
        %v1216 = vrot.slane %v1209, %v1215
        %v1217 = vcombine.low %v1208, %v1216
        %v1219 = vunpack.c.l.s4 1934713408
        %v1220 = vunpack.c.0.s8 %v1219
        %v1221 = vlaneseq
        %v1222 = vshrl.u32 %v1221, 7
        %v1223 = vsub.s32 %v1220, %v1222
        %v1224 = vrot.slane %v1217, %v1223
        %v1225 = vcombine.high %v1224, 0
        %v1226 = vcombine.low %v1191, %v1198
        %v1228 = vunpack.c.l.s4 1983009808
        %v1229 = vunpack.c.0.s8 %v1228
        %v1230 = vlaneseq
        %v1231 = vshrl.u32 %v1230, 7
        %v1232 = vsub.s32 %v1229, %v1231
        %v1233 = vrot.slane %v1226, %v1232
        %v1234 = vcombine.low %v1199, %v1200
        %v1236 = vunpack.c.l.s4 1983009808
        %v1237 = vunpack.c.0.s8 %v1236
        %v1238 = vlaneseq
        %v1239 = vshrl.u32 %v1238, 7
        %v1240 = vsub.s32 %v1237, %v1239
        %v1241 = vrot.slane %v1234, %v1240
        %v1242 = vcombine.low %v1233, %v1241
        %v1244 = vunpack.c.l.s4 1934713408
        %v1245 = vunpack.c.0.s8 %v1244
        %v1246 = vlaneseq
        %v1247 = vshrl.u32 %v1246, 7
        %v1248 = vsub.s32 %v1245, %v1247
        %v1249 = vrot.slane %v1242, %v1248
        %v1250 = vcombine.high %v1249, 0
        %v1253 = vpack.i.b16 %v1249, %v1224
        %v1254 = vshrl.u32 %v1224, 16
        %v1255 = vshrl.u32 %v1249, 16
        %v1256 = vpack.i.b16 %v1255, %v1254
        %v1259 = vpack.i.b16 %v1250, %v1225
        %v1260 = vshrl.u32 %v1225, 16
        %v1261 = vshrl.u32 %v1250, 16
        %v1262 = vpack.i.b16 %v1261, %v1260
        %v1263 = vpack.c.bf16 %v958, %v958
        %v1264 = vpack.c.bf16 %v959, %v959
        %v1265 = vpack.c.bf16 %v960, %v960
        %v1266 = vpack.c.bf16 %v961, %v961
        %vm1267 = vcmask 64512
        %v1269 = vsel %vm1267, %v1263, 0
        %v1272 = vsel %vm1267, %v1102, 0
        %1274 = vmatprep.subr.bf16.mxu0 0
        %1275 = vmatpush1.bf16.xpose.msra.mxu0 %v1272
        %1276 = vmatprep.subr.bf16.mxu0 0
        %1277 = vmatpush1.bf16.xpose.msra.mxu0 0
        %1278 = vmatprep.subr.bf16.mxu0 0
        %1279 = vmatpush1.bf16.xpose.msra.mxu0 0
        %1280 = vmatprep.subr.bf16.mxu0 0
        %1281 = vmatpush1.bf16.xpose.msra.mxu0 0
        %1282 = vmatprep.subr.bf16.mxu0 0
        %1283 = vmatpush1.bf16.xpose.msra.mxu0 0
        %1284 = vmatprep.subr.bf16.mxu0 0
        %1285 = vmatpush1.bf16.xpose.msra.mxu0 0
        %1286 = vmatprep.subr.bf16.mxu0 0
        %1287 = vmatpush1.bf16.xpose.msra.mxu0 0
        %1288 = vmatprep.subr.bf16.mxu0 0
        %1289 = vmatpush1.bf16.xpose.msra.mxu0 0
        %1290 = vmatprep.subr.bf16.mxu0 0
        %1291 = vmatpush1.bf16.xpose.msra.mxu0 0
        %1292 = vmatprep.subr.bf16.mxu0 0
        %1293 = vmatpush1.bf16.xpose.msra.mxu0 0
        %1294 = vmatprep.subr.bf16.mxu0 0
        %1295 = vmatpush1.bf16.xpose.msra.mxu0 0
        %1296 = vmatprep.subr.bf16.mxu0 0
        %1297 = vmatpush1.bf16.xpose.msra.mxu0 0
        %1298 = vmatprep.subr.bf16.mxu0 0
        %1299 = vmatpush1.bf16.xpose.msra.mxu0 0
        %1300 = vmatprep.subr.bf16.mxu0 0
        %1301 = vmatpush1.bf16.xpose.msra.mxu0 0
        %1302 = vmatprep.subr.bf16.mxu0 0
        %1303 = vmatpush1.bf16.xpose.msra.mxu0 0
        %1304 = vmatprep.subr.bf16.mxu0 0
        %1305 = vmatpush1.bf16.xpose.msra.mxu0 0
        %1306 = vmatprep.mubr.bf16.mxu0 0
        %1307 = vmatmul.mubr.bf16.gmra.mrb[0].mxu0 %v1269
        %v1308 = vpop.f32.mrb[0].mxu0
        %v1309 = vadd.f32 0.0, %v1308
        %v1310 = vpop.f32.mrb[0].mxu0
        %v1311 = vpop.f32.mrb[0].mxu0
        %v1312 = vpop.f32.mrb[0].mxu0
        %1313 = vdwg.mxu0
        %v1315 = vsel %vm1267, %v1264, 0
        %v1318 = vsel %vm1267, %v1105, 0
        %1320 = vmatprep.subr.bf16.mxu0 0
        %1321 = vmatpush1.bf16.xpose.msra.mxu0 %v1318
        %1322 = vmatprep.subr.bf16.mxu0 0
        %1323 = vmatpush1.bf16.xpose.msra.mxu0 0
        %1324 = vmatprep.subr.bf16.mxu0 0
        %1325 = vmatpush1.bf16.xpose.msra.mxu0 0
        %1326 = vmatprep.subr.bf16.mxu0 0
        %1327 = vmatpush1.bf16.xpose.msra.mxu0 0
        %1328 = vmatprep.subr.bf16.mxu0 0
        %1329 = vmatpush1.bf16.xpose.msra.mxu0 0
        %1330 = vmatprep.subr.bf16.mxu0 0
        %1331 = vmatpush1.bf16.xpose.msra.mxu0 0
        %1332 = vmatprep.subr.bf16.mxu0 0
        %1333 = vmatpush1.bf16.xpose.msra.mxu0 0
        %1334 = vmatprep.subr.bf16.mxu0 0
        %1335 = vmatpush1.bf16.xpose.msra.mxu0 0
        %1336 = vmatprep.subr.bf16.mxu0 0
        %1337 = vmatpush1.bf16.xpose.msra.mxu0 0
        %1338 = vmatprep.subr.bf16.mxu0 0
        %1339 = vmatpush1.bf16.xpose.msra.mxu0 0
        %1340 = vmatprep.subr.bf16.mxu0 0
        %1341 = vmatpush1.bf16.xpose.msra.mxu0 0
        %1342 = vmatprep.subr.bf16.mxu0 0
        %1343 = vmatpush1.bf16.xpose.msra.mxu0 0
        %1344 = vmatprep.subr.bf16.mxu0 0
        %1345 = vmatpush1.bf16.xpose.msra.mxu0 0
        %1346 = vmatprep.subr.bf16.mxu0 0
        %1347 = vmatpush1.bf16.xpose.msra.mxu0 0
        %1348 = vmatprep.subr.bf16.mxu0 0
        %1349 = vmatpush1.bf16.xpose.msra.mxu0 0
        %1350 = vmatprep.subr.bf16.mxu0 0
        %1351 = vmatpush1.bf16.xpose.msra.mxu0 0
        %1352 = vmatprep.mubr.bf16.mxu0 0
        %1353 = vmatmul.mubr.bf16.gmra.mrb[0].mxu0 %v1315
        %v1354 = vpop.f32.mrb[0].mxu0
        %v1355 = vadd.f32 0.0, %v1354
        %v1356 = vpop.f32.mrb[0].mxu0
        %v1357 = vpop.f32.mrb[0].mxu0
        %v1358 = vpop.f32.mrb[0].mxu0
        %1359 = vdwg.mxu0
        %v1361 = vsel %vm1267, %v1265, 0
        %v1364 = vsel %vm1267, %v1108, 0
        %1366 = vmatprep.subr.bf16.mxu0 0
        %1367 = vmatpush1.bf16.xpose.msra.mxu0 %v1364
        %1368 = vmatprep.subr.bf16.mxu0 0
        %1369 = vmatpush1.bf16.xpose.msra.mxu0 0
        %1370 = vmatprep.subr.bf16.mxu0 0
        %1371 = vmatpush1.bf16.xpose.msra.mxu0 0
        %1372 = vmatprep.subr.bf16.mxu0 0
        %1373 = vmatpush1.bf16.xpose.msra.mxu0 0
        %1374 = vmatprep.subr.bf16.mxu0 0
        %1375 = vmatpush1.bf16.xpose.msra.mxu0 0
        %1376 = vmatprep.subr.bf16.mxu0 0
        %1377 = vmatpush1.bf16.xpose.msra.mxu0 0
        %1378 = vmatprep.subr.bf16.mxu0 0
        %1379 = vmatpush1.bf16.xpose.msra.mxu0 0
        %1380 = vmatprep.subr.bf16.mxu0 0
        %1381 = vmatpush1.bf16.xpose.msra.mxu0 0
        %1382 = vmatprep.subr.bf16.mxu0 0
        %1383 = vmatpush1.bf16.xpose.msra.mxu0 0
        %1384 = vmatprep.subr.bf16.mxu0 0
        %1385 = vmatpush1.bf16.xpose.msra.mxu0 0
        %1386 = vmatprep.subr.bf16.mxu0 0
        %1387 = vmatpush1.bf16.xpose.msra.mxu0 0
        %1388 = vmatprep.subr.bf16.mxu0 0
        %1389 = vmatpush1.bf16.xpose.msra.mxu0 0
        %1390 = vmatprep.subr.bf16.mxu0 0
        %1391 = vmatpush1.bf16.xpose.msra.mxu0 0
        %1392 = vmatprep.subr.bf16.mxu0 0
        %1393 = vmatpush1.bf16.xpose.msra.mxu0 0
        %1394 = vmatprep.subr.bf16.mxu0 0
        %1395 = vmatpush1.bf16.xpose.msra.mxu0 0
        %1396 = vmatprep.subr.bf16.mxu0 0
        %1397 = vmatpush1.bf16.xpose.msra.mxu0 0
        %1398 = vmatprep.mubr.bf16.mxu0 0
        %1399 = vmatmul.mubr.bf16.gmra.mrb[0].mxu0 %v1361
        %v1400 = vpop.f32.mrb[0].mxu0
        %v1401 = vadd.f32 0.0, %v1400
        %v1402 = vpop.f32.mrb[0].mxu0
        %v1403 = vpop.f32.mrb[0].mxu0
        %v1404 = vpop.f32.mrb[0].mxu0
        %1405 = vdwg.mxu0
        %v1407 = vsel %vm1267, %v1266, 0
        %v1410 = vsel %vm1267, %v1111, 0
        %1412 = vmatprep.subr.bf16.mxu0 0
        %1413 = vmatpush1.bf16.xpose.msra.mxu0 %v1410
        %1414 = vmatprep.subr.bf16.mxu0 0
        %1415 = vmatpush1.bf16.xpose.msra.mxu0 0
        %1416 = vmatprep.subr.bf16.mxu0 0
        %1417 = vmatpush1.bf16.xpose.msra.mxu0 0
        %1418 = vmatprep.subr.bf16.mxu0 0
        %1419 = vmatpush1.bf16.xpose.msra.mxu0 0
        %1420 = vmatprep.subr.bf16.mxu0 0
        %1421 = vmatpush1.bf16.xpose.msra.mxu0 0
        %1422 = vmatprep.subr.bf16.mxu0 0
        %1423 = vmatpush1.bf16.xpose.msra.mxu0 0
        %1424 = vmatprep.subr.bf16.mxu0 0
        %1425 = vmatpush1.bf16.xpose.msra.mxu0 0
        %1426 = vmatprep.subr.bf16.mxu0 0
        %1427 = vmatpush1.bf16.xpose.msra.mxu0 0
        %1428 = vmatprep.subr.bf16.mxu0 0
        %1429 = vmatpush1.bf16.xpose.msra.mxu0 0
        %1430 = vmatprep.subr.bf16.mxu0 0
        %1431 = vmatpush1.bf16.xpose.msra.mxu0 0
        %1432 = vmatprep.subr.bf16.mxu0 0
        %1433 = vmatpush1.bf16.xpose.msra.mxu0 0
        %1434 = vmatprep.subr.bf16.mxu0 0
        %1435 = vmatpush1.bf16.xpose.msra.mxu0 0
        %1436 = vmatprep.subr.bf16.mxu0 0
        %1437 = vmatpush1.bf16.xpose.msra.mxu0 0
        %1438 = vmatprep.subr.bf16.mxu0 0
        %1439 = vmatpush1.bf16.xpose.msra.mxu0 0
        %1440 = vmatprep.subr.bf16.mxu0 0
        %1441 = vmatpush1.bf16.xpose.msra.mxu0 0
        %1442 = vmatprep.subr.bf16.mxu0 0
        %1443 = vmatpush1.bf16.xpose.msra.mxu0 0
        %1444 = vmatprep.mubr.bf16.mxu0 0
        %1445 = vmatmul.mubr.bf16.gmra.mrb[0].mxu0 %v1407
        %v1446 = vpop.f32.mrb[0].mxu0
        %v1447 = vadd.f32 0.0, %v1446
        %v1448 = vpop.f32.mrb[0].mxu0
        %v1449 = vpop.f32.mrb[0].mxu0
        %v1450 = vpop.f32.mrb[0].mxu0
        %1451 = vdwg.mxu0
        %v1452 = vld [vmem:[%s522] sm:$0x3]
        %v1453 = vld [vmem:[%s522 + $0x2] sm:$0x3]
        %v1454 = vld [vmem:[%s522 + $0x4] sm:$0x3]
        %v1455 = vld [vmem:[%s522 + $0x6] sm:$0x3]
        %vm1456 = vnez %v1452
        %vm1457 = vnez %v1453
        %vm1458 = vnez %v1454
        %vm1459 = vnez %v1455
        %v1460 = vsel %vm1456, 16843009, 0
        %v1461 = vsel %vm1457, 16843009, 0
        %v1462 = vsel %vm1458, 16843009, 0
        %v1463 = vsel %vm1459, 16843009, 0
        %v1464 = vunpack.c.0.s8 %v1460
        %v1465 = vunpack.c.0.s8 %v1461
        %v1466 = vunpack.c.0.s8 %v1462
        %v1467 = vunpack.c.0.s8 %v1463
        %vm1468 = vcmp.ne.s32.totalorder %v1464, 0
        %vm1469 = vcmp.ne.s32.totalorder %v1465, 0
        %vm1470 = vcmp.ne.s32.totalorder %v1466, 0
        %vm1471 = vcmp.ne.s32.totalorder %v1467, 0
        %v1472 = vsel %vm1468, -1e+09, %v1309
        %v1473 = vsel %vm1469, -1e+09, %v1355
        %v1474 = vsel %vm1470, -1e+09, %v1401
        %v1475 = vsel %vm1471, -1e+09, %v1447
        %v1476 = vsel %vm1267, %v1472, -inf
        %1477 = vmax.xlane.f32.xlu0 %v1476
        %v1478 = vpop.xlane.xlu0 %1477
        %v1479 = vsel %vm1267, %v1473, -inf
        %1480 = vmax.xlane.f32.xlu0 %v1479
        %v1481 = vpop.xlane.xlu0 %1480
        %v1482 = vsel %vm1267, %v1474, -inf
        %1483 = vmax.xlane.f32.xlu0 %v1482
        %v1484 = vpop.xlane.xlu0 %1483
        %v1485 = vsel %vm1267, %v1475, -inf
        %1486 = vmax.xlane.f32.xlu0 %v1485
        %v1487 = vpop.xlane.xlu0 %1486
        %v1488 = vsub.f32 %v1472, %v1478
        %v1489 = vsub.f32 %v1473, %v1481
        %v1490 = vsub.f32 %v1474, %v1484
        %v1491 = vsub.f32 %v1475, %v1487
        %v1492 = vmul.f32 %v1488, 1.442695
        %v1493 = vpow.pop %v1492
        %v1494 = vmul.f32 %v1489, 1.442695
        %v1495 = vpow.pop %v1494
        %v1496 = vmul.f32 %v1490, 1.442695
        %v1497 = vpow.pop %v1496
        %v1498 = vmul.f32 %v1491, 1.442695
        %v1499 = vpow.pop %v1498
        %v1500 = vsel %vm1267, %v1493, 0.0
        %1501 = vadd.xlane.f32.xlu0 %v1500
        %v1502 = vpop.xlane.xlu0 %1501
        %v1503 = vsel %vm1267, %v1495, 0.0
        %1504 = vadd.xlane.f32.xlu0 %v1503
        %v1505 = vpop.xlane.xlu0 %1504
        %v1506 = vsel %vm1267, %v1497, 0.0
        %1507 = vadd.xlane.f32.xlu0 %v1506
        %v1508 = vpop.xlane.xlu0 %1507
        %v1509 = vsel %vm1267, %v1499, 0.0
        %1510 = vadd.xlane.f32.xlu0 %v1509
        %v1511 = vpop.xlane.xlu0 %1510
        %v1512 = vrcp.pop %v1502
        %v1513 = vmul.f32 %v1493, %v1512
        %v1514 = vrcp.pop %v1505
        %v1515 = vmul.f32 %v1495, %v1514
        %v1516 = vrcp.pop %v1508
        %v1517 = vmul.f32 %v1497, %v1516
        %v1518 = vrcp.pop %v1511
        %v1519 = vmul.f32 %v1499, %v1518
        %v1520 = vpack.c.bf16 %v1513, %v1513
        %v1521 = vpack.c.bf16 %v1515, %v1515
        %v1522 = vpack.c.bf16 %v1517, %v1517
        %v1523 = vpack.c.bf16 %v1519, %v1519
        %vm1524 = vcmask 60416
        %1525 = vst.msk [vmem:[%s594] sm:$0xf] %vm1524, %v1520
        %1526 = vst.msk [vmem:[%s594 + $0x4] sm:$0xf] %vm1524, %v1521
        %1527 = vst.msk [vmem:[%s594 + $0x8] sm:$0xf] %vm1524, %v1522
        %1528 = vst.msk [vmem:[%s594 + $0xc] sm:$0xf] %vm1524, %v1523
        %v1530 = vsel %vm1267, %v1520, 0
        %vm1532 = vcmask 1043456
        %v1534 = vsel %vm1532, %v1253, 0
        %1536 = vmatprep.subr.bf16.mxu0 0
        %1537 = vmatpush1.bf16.msra.mxu0 %v1534
        %1538 = vmatprep.subr.bf16.mxu0 0
        %1539 = vmatpush1.bf16.msra.mxu0 0
        %1540 = vmatprep.subr.bf16.mxu0 0
        %1541 = vmatpush1.bf16.msra.mxu0 0
        %1542 = vmatprep.subr.bf16.mxu0 0
        %1543 = vmatpush1.bf16.msra.mxu0 0
        %1544 = vmatprep.subr.bf16.mxu0 0
        %1545 = vmatpush1.bf16.msra.mxu0 0
        %1546 = vmatprep.subr.bf16.mxu0 0
        %1547 = vmatpush1.bf16.msra.mxu0 0
        %1548 = vmatprep.subr.bf16.mxu0 0
        %1549 = vmatpush1.bf16.msra.mxu0 0
        %1550 = vmatprep.subr.bf16.mxu0 0
        %1551 = vmatpush1.bf16.msra.mxu0 0
        %1552 = vmatprep.subr.bf16.mxu0 0
        %1553 = vmatpush1.bf16.msra.mxu0 0
        %1554 = vmatprep.subr.bf16.mxu0 0
        %1555 = vmatpush1.bf16.msra.mxu0 0
        %1556 = vmatprep.subr.bf16.mxu0 0
        %1557 = vmatpush1.bf16.msra.mxu0 0
        %1558 = vmatprep.subr.bf16.mxu0 0
        %1559 = vmatpush1.bf16.msra.mxu0 0
        %1560 = vmatprep.subr.bf16.mxu0 0
        %1561 = vmatpush1.bf16.msra.mxu0 0
        %1562 = vmatprep.subr.bf16.mxu0 0
        %1563 = vmatpush1.bf16.msra.mxu0 0
        %1564 = vmatprep.subr.bf16.mxu0 0
        %1565 = vmatpush1.bf16.msra.mxu0 0
        %1566 = vmatprep.subr.bf16.mxu0 0
        %1567 = vmatpush1.bf16.msra.mxu0 0
        %1568 = vmatprep.mubr.bf16.mxu0 0
        %1569 = vmatmul.mubr.bf16.gmra.mrb[0].mxu0 %v1530
        %v1570 = vpop.f32.mrb[0].mxu0
        %v1571 = vadd.f32 0.0, %v1570
        %v1572 = vpop.f32.mrb[0].mxu0
        %v1573 = vpop.f32.mrb[0].mxu0
        %v1574 = vpop.f32.mrb[0].mxu0
        %1575 = vdwg.mxu0
        %v1577 = vsel %vm1267, %v1521, 0
        %v1580 = vsel %vm1532, %v1256, 0
        %1582 = vmatprep.subr.bf16.mxu0 0
        %1583 = vmatpush1.bf16.msra.mxu0 %v1580
        %1584 = vmatprep.subr.bf16.mxu0 0
        %1585 = vmatpush1.bf16.msra.mxu0 0
        %1586 = vmatprep.subr.bf16.mxu0 0
        %1587 = vmatpush1.bf16.msra.mxu0 0
        %1588 = vmatprep.subr.bf16.mxu0 0
        %1589 = vmatpush1.bf16.msra.mxu0 0
        %1590 = vmatprep.subr.bf16.mxu0 0
        %1591 = vmatpush1.bf16.msra.mxu0 0
        %1592 = vmatprep.subr.bf16.mxu0 0
        %1593 = vmatpush1.bf16.msra.mxu0 0
        %1594 = vmatprep.subr.bf16.mxu0 0
        %1595 = vmatpush1.bf16.msra.mxu0 0
        %1596 = vmatprep.subr.bf16.mxu0 0
        %1597 = vmatpush1.bf16.msra.mxu0 0
        %1598 = vmatprep.subr.bf16.mxu0 0
        %1599 = vmatpush1.bf16.msra.mxu0 0
        %1600 = vmatprep.subr.bf16.mxu0 0
        %1601 = vmatpush1.bf16.msra.mxu0 0
        %1602 = vmatprep.subr.bf16.mxu0 0
        %1603 = vmatpush1.bf16.msra.mxu0 0
        %1604 = vmatprep.subr.bf16.mxu0 0
        %1605 = vmatpush1.bf16.msra.mxu0 0
        %1606 = vmatprep.subr.bf16.mxu0 0
        %1607 = vmatpush1.bf16.msra.mxu0 0
        %1608 = vmatprep.subr.bf16.mxu0 0
        %1609 = vmatpush1.bf16.msra.mxu0 0
        %1610 = vmatprep.subr.bf16.mxu0 0
        %1611 = vmatpush1.bf16.msra.mxu0 0
        %1612 = vmatprep.subr.bf16.mxu0 0
        %1613 = vmatpush1.bf16.msra.mxu0 0
        %1614 = vmatprep.mubr.bf16.mxu0 0
        %1615 = vmatmul.mubr.bf16.gmra.mrb[0].mxu0 %v1577
        %v1616 = vpop.f32.mrb[0].mxu0
        %v1617 = vadd.f32 0.0, %v1616
        %v1618 = vpop.f32.mrb[0].mxu0
        %v1619 = vpop.f32.mrb[0].mxu0
        %v1620 = vpop.f32.mrb[0].mxu0
        %1621 = vdwg.mxu0
        %v1623 = vsel %vm1267, %v1522, 0
        %v1626 = vsel %vm1532, %v1259, 0
        %1628 = vmatprep.subr.bf16.mxu0 0
        %1629 = vmatpush1.bf16.msra.mxu0 %v1626
        %1630 = vmatprep.subr.bf16.mxu0 0
        %1631 = vmatpush1.bf16.msra.mxu0 0
        %1632 = vmatprep.subr.bf16.mxu0 0
        %1633 = vmatpush1.bf16.msra.mxu0 0
        %1634 = vmatprep.subr.bf16.mxu0 0
        %1635 = vmatpush1.bf16.msra.mxu0 0
        %1636 = vmatprep.subr.bf16.mxu0 0
        %1637 = vmatpush1.bf16.msra.mxu0 0
        %1638 = vmatprep.subr.bf16.mxu0 0
        %1639 = vmatpush1.bf16.msra.mxu0 0
        %1640 = vmatprep.subr.bf16.mxu0 0
        %1641 = vmatpush1.bf16.msra.mxu0 0
        %1642 = vmatprep.subr.bf16.mxu0 0
        %1643 = vmatpush1.bf16.msra.mxu0 0
        %1644 = vmatprep.subr.bf16.mxu0 0
        %1645 = vmatpush1.bf16.msra.mxu0 0
        %1646 = vmatprep.subr.bf16.mxu0 0
        %1647 = vmatpush1.bf16.msra.mxu0 0
        %1648 = vmatprep.subr.bf16.mxu0 0
        %1649 = vmatpush1.bf16.msra.mxu0 0
        %1650 = vmatprep.subr.bf16.mxu0 0
        %1651 = vmatpush1.bf16.msra.mxu0 0
        %1652 = vmatprep.subr.bf16.mxu0 0
        %1653 = vmatpush1.bf16.msra.mxu0 0
        %1654 = vmatprep.subr.bf16.mxu0 0
        %1655 = vmatpush1.bf16.msra.mxu0 0
        %1656 = vmatprep.subr.bf16.mxu0 0
        %1657 = vmatpush1.bf16.msra.mxu0 0
        %1658 = vmatprep.subr.bf16.mxu0 0
        %1659 = vmatpush1.bf16.msra.mxu0 0
        %1660 = vmatprep.mubr.bf16.mxu0 0
        %1661 = vmatmul.mubr.bf16.gmra.mrb[0].mxu0 %v1623
        %v1662 = vpop.f32.mrb[0].mxu0
        %v1663 = vadd.f32 0.0, %v1662
        %v1664 = vpop.f32.mrb[0].mxu0
        %v1665 = vpop.f32.mrb[0].mxu0
        %v1666 = vpop.f32.mrb[0].mxu0
        %1667 = vdwg.mxu0
        %v1669 = vsel %vm1267, %v1523, 0
        %v1672 = vsel %vm1532, %v1262, 0
        %1674 = vmatprep.subr.bf16.mxu0 0
        %1675 = vmatpush1.bf16.msra.mxu0 %v1672
        %1676 = vmatprep.subr.bf16.mxu0 0
        %1677 = vmatpush1.bf16.msra.mxu0 0
        %1678 = vmatprep.subr.bf16.mxu0 0
        %1679 = vmatpush1.bf16.msra.mxu0 0
        %1680 = vmatprep.subr.bf16.mxu0 0
        %1681 = vmatpush1.bf16.msra.mxu0 0
        %1682 = vmatprep.subr.bf16.mxu0 0
        %1683 = vmatpush1.bf16.msra.mxu0 0
        %1684 = vmatprep.subr.bf16.mxu0 0
        %1685 = vmatpush1.bf16.msra.mxu0 0
        %1686 = vmatprep.subr.bf16.mxu0 0
        %1687 = vmatpush1.bf16.msra.mxu0 0
        %1688 = vmatprep.subr.bf16.mxu0 0
        %1689 = vmatpush1.bf16.msra.mxu0 0
        %1690 = vmatprep.subr.bf16.mxu0 0
        %1691 = vmatpush1.bf16.msra.mxu0 0
        %1692 = vmatprep.subr.bf16.mxu0 0
        %1693 = vmatpush1.bf16.msra.mxu0 0
        %1694 = vmatprep.subr.bf16.mxu0 0
        %1695 = vmatpush1.bf16.msra.mxu0 0
        %1696 = vmatprep.subr.bf16.mxu0 0
        %1697 = vmatpush1.bf16.msra.mxu0 0
        %1698 = vmatprep.subr.bf16.mxu0 0
        %1699 = vmatpush1.bf16.msra.mxu0 0
        %1700 = vmatprep.subr.bf16.mxu0 0
        %1701 = vmatpush1.bf16.msra.mxu0 0
        %1702 = vmatprep.subr.bf16.mxu0 0
        %1703 = vmatpush1.bf16.msra.mxu0 0
        %1704 = vmatprep.subr.bf16.mxu0 0
        %1705 = vmatpush1.bf16.msra.mxu0 0
        %1706 = vmatprep.mubr.bf16.mxu0 0
        %1707 = vmatmul.mubr.bf16.gmra.mrb[0].mxu0 %v1669
        %v1708 = vpop.f32.mrb[0].mxu0
        %v1709 = vadd.f32 0.0, %v1708
        %v1710 = vpop.f32.mrb[0].mxu0
        %v1711 = vpop.f32.mrb[0].mxu0
        %v1712 = vpop.f32.mrb[0].mxu0
        %1713 = vdwg.mxu0
        %v1714 = vcombine.low %v1571, %v1663
        %v1715 = vcombine.high %v1571, %v1663
        %v1717 = vunpack.c.l.s4 1983009808
        %v1718 = vunpack.c.0.s8 %v1717
        %v1719 = vlaneseq
        %v1720 = vshrl.u32 %v1719, 7
        %v1721 = vsub.s32 %v1718, %v1720
        %v1722 = vrot.slane %v1714, %v1721
        %v1724 = vunpack.c.l.s4 1983009808
        %v1725 = vunpack.c.0.s8 %v1724
        %v1726 = vlaneseq
        %v1727 = vshrl.u32 %v1726, 7
        %v1728 = vsub.s32 %v1725, %v1727
        %v1729 = vrot.slane %v1715, %v1728
        %v1730 = vcombine.low %v1617, %v1709
        %v1731 = vcombine.high %v1617, %v1709
        %v1733 = vunpack.c.l.s4 1983009808
        %v1734 = vunpack.c.0.s8 %v1733
        %v1735 = vlaneseq
        %v1736 = vshrl.u32 %v1735, 7
        %v1737 = vsub.s32 %v1734, %v1736
        %v1738 = vrot.slane %v1730, %v1737
        %v1740 = vunpack.c.l.s4 1983009808
        %v1741 = vunpack.c.0.s8 %v1740
        %v1742 = vlaneseq
        %v1743 = vshrl.u32 %v1742, 7
        %v1744 = vsub.s32 %v1741, %v1743
        %v1745 = vrot.slane %v1731, %v1744
        %v1746 = vcombine.low %v1722, %v1738
        %v1747 = vcombine.high %v1722, %v1738
        %v1749 = vunpack.c.l.s4 1934713408
        %v1750 = vunpack.c.0.s8 %v1749
        %v1751 = vlaneseq
        %v1752 = vshrl.u32 %v1751, 7
        %v1753 = vsub.s32 %v1750, %v1752
        %v1754 = vrot.slane %v1746, %v1753
        %v1756 = vunpack.c.l.s4 1934713408
        %v1757 = vunpack.c.0.s8 %v1756
        %v1758 = vlaneseq
        %v1759 = vshrl.u32 %v1758, 7
        %v1760 = vsub.s32 %v1757, %v1759
        %v1761 = vrot.slane %v1747, %v1760
        %v1762 = vcombine.low %v1729, %v1745
        %v1763 = vcombine.high %v1729, %v1745
        %v1765 = vunpack.c.l.s4 1934713408
        %v1766 = vunpack.c.0.s8 %v1765
        %v1767 = vlaneseq
        %v1768 = vshrl.u32 %v1767, 7
        %v1769 = vsub.s32 %v1766, %v1768
        %v1770 = vrot.slane %v1762, %v1769
        %v1772 = vunpack.c.l.s4 1934713408
        %v1773 = vunpack.c.0.s8 %v1772
        %v1774 = vlaneseq
        %v1775 = vshrl.u32 %v1774, 7
        %v1776 = vsub.s32 %v1773, %v1775
        %v1777 = vrot.slane %v1763, %v1776
        %v1778 = vcombine.high %v1754, 0.0
        %v1779 = vcombine.high %v1761, 0.0
        %v1780 = vcombine.high %v1770, 0.0
        %v1781 = vcombine.high %v1777, 0.0
        %v1782 = vcombine.low %v1754, %v1761
        %v1784 = vunpack.c.l.s4 1983009808
        %v1785 = vunpack.c.0.s8 %v1784
        %v1786 = vlaneseq
        %v1787 = vshrl.u32 %v1786, 7
        %v1788 = vsub.s32 %v1785, %v1787
        %v1789 = vrot.slane %v1782, %v1788
        %v1790 = vcombine.low %v1778, %v1779
        %v1792 = vunpack.c.l.s4 1983009808
        %v1793 = vunpack.c.0.s8 %v1792
        %v1794 = vlaneseq
        %v1795 = vshrl.u32 %v1794, 7
        %v1796 = vsub.s32 %v1793, %v1795
        %v1797 = vrot.slane %v1790, %v1796
        %v1798 = vcombine.low %v1770, %v1777
        %v1800 = vunpack.c.l.s4 1983009808
        %v1801 = vunpack.c.0.s8 %v1800
        %v1802 = vlaneseq
        %v1803 = vshrl.u32 %v1802, 7
        %v1804 = vsub.s32 %v1801, %v1803
        %v1805 = vrot.slane %v1798, %v1804
        %v1806 = vcombine.low %v1780, %v1781
        %v1808 = vunpack.c.l.s4 1983009808
        %v1809 = vunpack.c.0.s8 %v1808
        %v1810 = vlaneseq
        %v1811 = vshrl.u32 %v1810, 7
        %v1812 = vsub.s32 %v1809, %v1811
        %v1813 = vrot.slane %v1806, %v1812
        %v1814 = vcombine.low %v1789, %v1797
        %v1815 = vcombine.high %v1789, %v1797
        %v1817 = vunpack.c.l.s4 1934713408
        %v1818 = vunpack.c.0.s8 %v1817
        %v1819 = vlaneseq
        %v1820 = vshrl.u32 %v1819, 7
        %v1821 = vsub.s32 %v1818, %v1820
        %v1822 = vrot.slane %v1814, %v1821
        %v1824 = vunpack.c.l.s4 1934713408
        %v1825 = vunpack.c.0.s8 %v1824
        %v1826 = vlaneseq
        %v1827 = vshrl.u32 %v1826, 7
        %v1828 = vsub.s32 %v1825, %v1827
        %v1829 = vrot.slane %v1815, %v1828
        %v1830 = vcombine.low %v1805, %v1813
        %v1831 = vcombine.high %v1805, %v1813
        %v1833 = vunpack.c.l.s4 1934713408
        %v1834 = vunpack.c.0.s8 %v1833
        %v1835 = vlaneseq
        %v1836 = vshrl.u32 %v1835, 7
        %v1837 = vsub.s32 %v1834, %v1836
        %v1838 = vrot.slane %v1830, %v1837
        %v1840 = vunpack.c.l.s4 1934713408
        %v1841 = vunpack.c.0.s8 %v1840
        %v1842 = vlaneseq
        %v1843 = vshrl.u32 %v1842, 7
        %v1844 = vsub.s32 %v1841, %v1843
        %v1845 = vrot.slane %v1831, %v1844
        %v1846 = vcombine.low %v1822, %v1838
        %v1847 = vcombine.high %v1822, %v1838
        %v1848 = vcombine.low %v1829, %v1845
        %v1849 = vcombine.high %v1829, %v1845
        %1851 = vrot.lane.b32.xlu0 %v1847, 8
        %v1852 = vpop.permute.xlu0 %1851
        %1855 = vrot.lane.b32.xlu0 %v1848, 16
        %v1856 = vpop.permute.xlu0 %1855
        %1859 = vrot.lane.b32.xlu0 %v1849, 24
        %v1860 = vpop.permute.xlu0 %1859
        %v1862 = vsel %vm1267, %v1846, %v1852
        %vm1863 = vcmask 130048
        %v1864 = vsel %vm1863, %v1862, %v1856
        %vm1865 = vcmask 195584
        %v1866 = vsel %vm1865, %v1864, %v1860
        %v1867 = vpack.c.bf16 %v1866, %v1866
        %v1868 = vld [vmem:[#allocation14] sm:$0xf]
        %v1869 = vld [vmem:[#allocation14 + $0x4] sm:$0xf]
        %v1870 = vld [vmem:[#allocation14 + $0x8] sm:$0xf]
        %v1871 = vld [vmem:[#allocation14 + $0xc] sm:$0xf]
        %v1872 = vld [vmem:[#allocation15] sm:$0x1]
        %v1874 = vlaneseq
        %v1875 = vshrl.u32 %v1874, 7
        %v1876 = vsub.s32 0, %v1875
        %v1877 = vrot.slane %v1872, %v1876
        %v1883 = vunpack.c.l.b16 %v1868
        %v1884 = vunpack.c.l.b16 %v1869
        %v1885 = vunpack.c.l.b16 %v1870
        %v1886 = vunpack.c.l.b16 %v1871
        %v1887 = vpack.c.b16 %v1884, %v1883
        %v1888 = vpack.c.b16 %v1886, %v1885
        %v1892 = vsel %vm772, %v1867, 0
        %1894 = vmatprep.subr.bf16.mxu0 0
        %1895 = vmatpush1.bf16.msra.mxu0 %v1887
        %1896 = vmatprep.subr.bf16.mxu0 0
        %1897 = vmatpush1.bf16.msra.mxu0 %v1888
        %1898 = vmatprep.subr.bf16.mxu0 0
        %1899 = vmatpush1.bf16.msra.mxu0 0
        %1900 = vmatprep.subr.bf16.mxu0 0
        %1901 = vmatpush1.bf16.msra.mxu0 0
        %1902 = vmatprep.subr.bf16.mxu0 0
        %1903 = vmatpush1.bf16.msra.mxu0 0
        %1904 = vmatprep.subr.bf16.mxu0 0
        %1905 = vmatpush1.bf16.msra.mxu0 0
        %1906 = vmatprep.subr.bf16.mxu0 0
        %1907 = vmatpush1.bf16.msra.mxu0 0
        %1908 = vmatprep.subr.bf16.mxu0 0
        %1909 = vmatpush1.bf16.msra.mxu0 0
        %1910 = vmatprep.subr.bf16.mxu0 0
        %1911 = vmatpush1.bf16.msra.mxu0 0
        %1912 = vmatprep.subr.bf16.mxu0 0
        %1913 = vmatpush1.bf16.msra.mxu0 0
        %1914 = vmatprep.subr.bf16.mxu0 0
        %1915 = vmatpush1.bf16.msra.mxu0 0
        %1916 = vmatprep.subr.bf16.mxu0 0
        %1917 = vmatpush1.bf16.msra.mxu0 0
        %1918 = vmatprep.subr.bf16.mxu0 0
        %1919 = vmatpush1.bf16.msra.mxu0 0
        %1920 = vmatprep.subr.bf16.mxu0 0
        %1921 = vmatpush1.bf16.msra.mxu0 0
        %1922 = vmatprep.subr.bf16.mxu0 0
        %1923 = vmatpush1.bf16.msra.mxu0 0
        %1924 = vmatprep.subr.bf16.mxu0 0
        %1925 = vmatpush1.bf16.msra.mxu0 0
        %1926 = vmatprep.mubr.bf16.mxu0 0
        %1927 = vmatmul.mubr.bf16.gmra.mrb[0].mxu0 %v1892
        %v1928 = vpop.f32.mrb[0].mxu0
        %v1929 = vadd.f32 %v1877, %v1928
        %v1930 = vpop.f32.mrb[0].mxu0
        %v1931 = vpop.f32.mrb[0].mxu0
        %v1932 = vpop.f32.mrb[0].mxu0
        %1933 = vdwg.mxu0
        %v1934 = vadd.f32 %v1929, %v747
        %v1935 = vsel %vm772, %v1934, 0.0
        %1936 = vadd.xlane.f32.xlu0 %v1935
        %v1937 = vpop.xlane.xlu0 %1936
        %v1938 = vrcp.pop 32.0
        %v1939 = vmul.f32 %v1937, %v1938
        %v1940 = vsub.f32 %v1934, %v1939
        %v1941 = vmul.f32 %v1940, %v1940
        %v1942 = vsel %vm772, %v1941, 0.0
        %1943 = vadd.xlane.f32.xlu0 %v1942
        %v1944 = vpop.xlane.xlu0 %1943
        %v1945 = vmul.f32 %v1944, %v1938
        %v1946 = vadd.f32 %v1945, 1e-05
        %v1947 = vrsqrt.pop %v1946
        %v1948 = vmul.f32 %v1940, %v1947
        %v1949 = vld [vmem:[#allocation17] sm:$0x1]
        %v1951 = vlaneseq
        %v1952 = vshrl.u32 %v1951, 7
        %v1953 = vsub.s32 0, %v1952
        %v1954 = vrot.slane %v1949, %v1953
        %v1956 = vmul.f32 %v1948, %v1954
        %v1957 = vld [vmem:[#allocation18] sm:$0x1]
        %v1959 = vlaneseq
        %v1960 = vshrl.u32 %v1959, 7
        %v1961 = vsub.s32 0, %v1960
        %v1962 = vrot.slane %v1957, %v1961
        %v1964 = vadd.f32 %v1956, %v1962
        %1965 = vst.msk [vmem:[%s587] sm:$0xff] %vm772, %v1964
        %s1966 = sand.u32 %s295, 1
        %s1967 = scalar_lea.sflag [#allocation5], %s1966
        %s1968 = sand.u32 %s295, 1
        %s1969 = smul.addr %s1968, 8
        %s1970 = scalar_lea.vmem [#allocation20], %s1969
        %s1971 = sand.u32 %s323, 1
        %s1972 = scalar_lea.sflag [#allocation22], %s1971
        %s1973 = sand.u32 %s323, 1
        %s1974 = smul.addr %s1973, 16
        %s1975 = scalar_lea.vmem [#allocation21], %s1974
        // Predicated region
        $region105: #{tpu_custom_call.1} parent=59 // pred_check
          %p1976 = pneg %p305
        $region106: #{tpu_custom_call.1} parent=59 // pred_check_branch
          %1978 = sbr.rel (%p1976) target = $region108
        $region107: #{tpu_custom_call.1} parent=59 // pred_region
          %s1980 = ssub.s32 128, 128
          %1981 = vsyncadd %s1967, %s1980
          %s1982 = sadd.s32 %s44, %s43
          %s1983 = smul.addr %s1982, 128
          %s1984 = scalar_lea.hbm %s10, %s1983
          %s1986 = sshll.u32 %s1970, 4
          %s1987 = int_to_ptr.vmem [resolvable:$true] %s1986
          %1989 = dma.vmem_to_hbm [thread:$0]  %s1987, 128, %s1984, %s1967
        $region108: #{tpu_custom_call.1} parent=59 // pred_fallthru
          _
        // Predicated region
        $region109: #{tpu_custom_call.1} parent=59 // pred_check
          %p1990 = pneg %p333
        $region110: #{tpu_custom_call.1} parent=59 // pred_check_branch
          %1992 = sbr.rel (%p1990) target = $region112
        $region111: #{tpu_custom_call.1} parent=59 // pred_region
          %s1994 = ssub.s32 256, 256
          %1995 = vsyncadd %s1972, %s1994
          %s1996 = smul.addr %s43, 4
          %s1997 = sadd.s32 %s44, %s1996
          %s1998 = smul.addr %s1997, 64
          %s1999 = scalar_lea.hbm %s11, %s1998
          %s2000 = sshll.u32 %s1975, 4
          %s2001 = int_to_ptr.vmem [resolvable:$true] %s2000
          %2006 = dma.vmem_to_hbm [thread:$0]  %s2001, 256, %s1999, %s1972, 64, 64, 4
        $region112: #{tpu_custom_call.1} parent=59 // pred_fallthru
          _
      $region60: #{tpu_custom_call.1} parent=5 // pred_fallthru
        _
      %p2007 = scmp.le.s32.totalorder 2, %s34
      // Predicated region
      $region113: #{tpu_custom_call.1} parent=5 // pred_check
        %p2008 = pneg %p2007
      $region114: #{tpu_custom_call.1} parent=5 // pred_check_branch
        %2010 = sbr.rel (%p2008) target = $region116
      $region115: #{tpu_custom_call.1} parent=5 // pred_region
        %s2011 = ssub.s32 %s34, 2
        // Predicated region
        $region117: #{tpu_custom_call.1} parent=115 // pred_check
          %p2012 = pneg %p311
        $region118: #{tpu_custom_call.1} parent=115 // pred_check_branch
          %2014 = sbr.rel (%p2012) target = $region120
        $region119: #{tpu_custom_call.1} parent=115 // pred_region
          %s2015 = sand.u32 %s296, 1
          %s2016 = scalar_lea.sflag [#allocation5], %s2015
          %s2017 = sand.u32 %s296, 1
          %s2018 = smul.addr %s2017, 8
          %s2019 = scalar_lea.vmem [#allocation20], %s2018
          %2020 = dma.done %s2016, 128
        $region120: #{tpu_custom_call.1} parent=115 // pred_fallthru
          _
        // Predicated region
        $region121: #{tpu_custom_call.1} parent=115 // pred_check
          %p2021 = pneg %p339
        $region122: #{tpu_custom_call.1} parent=115 // pred_check_branch
          %2023 = sbr.rel (%p2021) target = $region124
        $region123: #{tpu_custom_call.1} parent=115 // pred_region
          %s2024 = sand.u32 %s324, 1
          %s2025 = scalar_lea.sflag [#allocation22], %s2024
          %s2026 = sand.u32 %s324, 1
          %s2027 = smul.addr %s2026, 16
          %s2028 = scalar_lea.vmem [#allocation21], %s2027
          %2029 = dma.done %s2025, 256
        $region124: #{tpu_custom_call.1} parent=115 // pred_fallthru
          _
      $region116: #{tpu_custom_call.1} parent=5 // pred_fallthru
        _
    $region6: #{tpu_custom_call.1} parent=1 // loop_footer
      %s38 = sadd.s32 1, %s34
    $region7: #{tpu_custom_call.1} parent=1 // loop_footer_branch
      %33 = sbr.rel target = $region3
    $region8: #{tpu_custom_call.1} parent=1 // loop_exit
      _
    %2030 = vsyncpa [#allocation4], 1
    %s2031 = scalar_lea.sflag [#allocation4], 1
    %2032 = vsyncpa %s2031, 1
    %2033 = vsyncpa [#allocation7], 1
    %2034 = vsyncpa [#allocation10], 1
    %s2035 = scalar_lea.sflag [#allocation10], 1
    %2036 = vsyncpa %s2035, 1
    %2037 = vsyncpa [#allocation13], 1
    %2038 = vsyncpa [#allocation16], 1
    %2039 = vsyncpa [#allocation19], 1
    %2040 = vsyncpa [#allocation5], 1
    %s2041 = scalar_lea.sflag [#allocation5], 1
    %2042 = vsyncpa %s2041, 1
    %2043 = vsyncpa [#allocation22], 1
    %s2044 = scalar_lea.sflag [#allocation22], 1
    %2045 = vsyncpa %s2044, 1

// kernel: tpu_custom_call.1
$region0: #{tpu_custom_call.1}
  #allocation0 [shape = 'u32[]', space=smem, size = 0x4, offset = 0x4, fixed_abs, tag = 'smem constant byte address 0x4 - core index']
  #allocation1 [shape = 'u32[144,128]{1,0:T(1,128)}', space=vmem, size = 0x12000, scoped, tag = 'internal scratch']
  #allocation2 [shape = 'bf16[2,8,32]{2,1,0:T(8,128)(2,1)}', space=vmem, size = 0x1000, scoped, tag = 'scratch operand']
  %s0 = inlined_call_operand.hbm [shape: f32[2,8,32], index: 0, kind: input, shape index: {}]
  %s1 = inlined_call_operand.hbm [shape: bf16[2,8,32], index: 1, kind: input, shape index: {}]
  %s2 = inlined_call_operand.hbm [shape: bf16[2,8,32], index: 2, kind: input, shape index: {}]
  %s3 = inlined_call_operand.hbm [shape: s8[2,4,8,8], index: 3, kind: input, shape index: {}]
  %s4 = inlined_call_operand.hbm [shape: bf16[3,32,32], index: 4, kind: input, shape index: {}]
  %s5 = inlined_call_operand.hbm [shape: f32[3,1,32], index: 5, kind: input, shape index: {}]
  %s6 = inlined_call_operand.hbm [shape: bf16[32,32], index: 6, kind: input, shape index: {}]
  %s7 = inlined_call_operand.hbm [shape: f32[1,32], index: 7, kind: input, shape index: {}]
  %s8 = inlined_call_operand.hbm [shape: f32[1,32], index: 8, kind: input, shape index: {}]
  %s9 = inlined_call_operand.hbm [shape: f32[1,32], index: 9, kind: input, shape index: {}]
  %s10 = inlined_call_operand.hbm [shape: f32[2,8,32], index: 10, kind: output, shape index: {0}]
  %s11 = inlined_call_operand.hbm [shape: bf16[2,4,8,8], index: 11, kind: output, shape index: {1}]
  %12 = xla_tuple %s10, %s11
  %s13 = sld [smem:[#allocation0]]
  $region125: #{tpu_custom_call.1} parent=0
    _
  %s15 = ssub.s32 1, %s13
  %s16 = scalar_select 0, %s15, %s13
  $region1: #{tpu_custom_call.1} parent=0
    #allocation3 [shape = 'u8[8192]{0}', space=vmem, size = 0x2000, scoped, tag = 'input window, operand 0']
    #allocation4 [shape = 's32[2]{0}', space=sflag, size = 0x8, scoped, tag = 'scoped memory for tpu_custom_call.1']
    #allocation5 [shape = 's32[2]{0}', space=sflag, size = 0x8, scoped, tag = 'scoped memory for tpu_custom_call.1']
    #allocation6 [shape = 'u8[4096]{0}', space=vmem, size = 0x1000, scoped, tag = 'input window, operand 1']
    #allocation7 [shape = 's32[2]{0}', space=sflag, size = 0x8, scoped, tag = 'scoped memory for tpu_custom_call.1']
    #allocation8 [shape = 'u8[4096]{0}', space=vmem, size = 0x1000, scoped, tag = 'input window, operand 2']
    #allocation9 [shape = 'u8[8192]{0}', space=vmem, size = 0x2000, scoped, tag = 'input window, operand 3']
    #allocation10 [shape = 's32[2]{0}', space=sflag, size = 0x8, scoped, tag = 'scoped memory for tpu_custom_call.1']
    #allocation11 [shape = 'u8[24576]{0}', space=vmem, size = 0x6000, scoped, tag = 'input window, operand 4, single buffered']
    #allocation12 [shape = 'u8[1536]{0}', space=vmem, size = 0x800, scoped, tag = 'input window, operand 5, single buffered']
    #allocation13 [shape = 's32[1]{0}', space=sflag, size = 0x4, scoped, tag = 'scoped memory for tpu_custom_call.1']
    #allocation14 [shape = 'u8[8192]{0}', space=vmem, size = 0x2000, scoped, tag = 'input window, operand 6, single buffered']
    #allocation15 [shape = 'u8[512]{0}', space=vmem, size = 0x400, scoped, tag = 'input window, operand 7, single buffered']
    #allocation16 [shape = 's32[1]{0}', space=sflag, size = 0x4, scoped, tag = 'scoped memory for tpu_custom_call.1']
    #allocation17 [shape = 'u8[512]{0}', space=vmem, size = 0x400, scoped, tag = 'input window, operand 8, single buffered']
    #allocation18 [shape = 'u8[512]{0}', space=vmem, size = 0x400, scoped, tag = 'input window, operand 9, single buffered']
    #allocation19 [shape = 's32[1]{0}', space=sflag, size = 0x4, scoped, tag = 'scoped memory for tpu_custom_call.1']
    #allocation20 [shape = 'u8[8192]{0}', space=vmem, size = 0x2000, scoped, tag = 'output window, operand 0']
    #allocation21 [shape = 'u8[16384]{0}', space=vmem, size = 0x4000, scoped, tag = 'output window, operand 1']
    #allocation22 [shape = 's32[2]{0}', space=sflag, size = 0x8, scoped, tag = 'scoped memory for tpu_custom_call.1']
    %17 = vsyncpa [#allocation4], 0
    %s18 = scalar_lea.sflag [#allocation4], 1
    %19 = vsyncpa %s18, 0
    %20 = vsyncpa [#allocation7], 0
    %s21 = scalar_lea.sflag [#allocation7], 1
    %22 = vsyncpa %s21, 0
    %23 = vsyncpa [#allocation10], 0
    %s24 = scalar_lea.sflag [#allocation10], 1
    %25 = vsyncpa %s24, 0
    %26 = vsyncpa [#allocation13], 0
    %27 = vsyncpa [#allocation16], 0
    %28 = vsyncpa [#allocation19], 0
    %29 = vsyncpa [#allocation5], 0
    %s30 = scalar_lea.sflag [#allocation5], 1
    %31 = vsyncpa %s30, 0
    %32 = vsyncpa [#allocation22], 0
    %s33 = scalar_lea.sflag [#allocation22], 1
    %34 = vsyncpa %s33, 0
    loop: start=0, step=1, limit=4
    $region2: #{tpu_custom_call.1} parent=1 // loop_pre_header
      _
    $region3: #{tpu_custom_call.1} parent=1 // loop_header
      %s36 = sphi 0, %s40
      %p37 = scmp.ge.s32.totalorder %s36, 4
      %s43 = sphi 0, %s55
      %s44 = sphi 0, %s51
      %s45 = sphi 0, %s43
      %s46 = sphi 0, %s44
      %s47 = sphi 0, %s45
      %s48 = sphi 0, %s46
      %s60 = sphi 0, %s62
      %s63 = sphi 0, %s60
      %s64 = sphi 0, %s63
      %s80 = sphi 0, %s64
      %s86 = sphi 0, %s88
      %s89 = sphi 0, %s86
      %s90 = sphi 0, %s89
      %s106 = sphi 0, %s90
      %s112 = sphi 0, %s114
      %s115 = sphi 0, %s112
      %s116 = sphi 0, %s115
      %s132 = sphi 0, %s116
      %s140 = sphi 0, %s142
      %s143 = sphi 0, %s140
      %s144 = sphi 0, %s143
      %s160 = sphi 0, %s144
      %s164 = sphi 0, %s164
      %s166 = sphi 0, %s164
      %s167 = sphi 0, %s166
      %s181 = sphi 0, %s167
      %s185 = sphi 0, %s185
      %s187 = sphi 0, %s185
      %s188 = sphi 0, %s187
      %s202 = sphi 0, %s188
      %s206 = sphi 0, %s206
      %s208 = sphi 0, %s206
      %s209 = sphi 0, %s208
      %s223 = sphi 0, %s209
      %s227 = sphi 0, %s227
      %s229 = sphi 0, %s227
      %s230 = sphi 0, %s229
      %s244 = sphi 0, %s230
      %s248 = sphi 0, %s248
      %s250 = sphi 0, %s248
      %s251 = sphi 0, %s250
      %s265 = sphi 0, %s251
      %s269 = sphi 0, %s269
      %s271 = sphi 0, %s269
      %s272 = sphi 0, %s271
      %s286 = sphi 0, %s272
      %s294 = sphi 0, %s296
      %s297 = sphi 0, %s294
      %s298 = sphi 0, %s297
      %s314 = sphi 0, %s298
      %s322 = sphi 0, %s324
      %s325 = sphi 0, %s322
      %s326 = sphi 0, %s325
      %s342 = sphi 0, %s326
    $region4: #{tpu_custom_call.1} parent=1 // loop_header_branch
      %39 = sbr.rel (%p37) target = $region8
    $region5: #{tpu_custom_call.1} parent=1 // loop_body
      %s41 = ssub.s32 %s36, 1
      %s42 = ssub.s32 %s36, 2
      %s49 = sadd.s32 1, %s44
      %p50 = scmp.ge.s32.totalorder %s49, 1
      %s51 = scalar_select %p50, 0, %s49
      %s52 = sadd.s32 1, %s43
      %s53 = scalar_select %p50, %s52, %s43
      %p54 = scmp.ge.s32.totalorder %s53, 2
      %s55 = scalar_select %p54, 0, %s53
      %s56 = ssub.s32 %s43, %s55
      %s57 = ssub.s32 %s44, %s51
      %s58 = sor.u32 %s56, %s57
      %p59 = scmp.eq.s32.totalorder %s58, 0
      %s61 = sadd.s32 %s60, 1
      %s62 = scalar_select %p59, %s60, %s61
      %p65 = pneg %p59
      %p66 = scmp.eq.s32.totalorder %s36, 1
      %p67 = por %p65, %p66
      %p68 = scmp.ne.s32.totalorder %s60, %s63
      %p69 = scmp.eq.s32.totalorder %s36, 0
      %p70 = por %p68, %p69
      %p71 = scmp.ne.s32.totalorder %s60, %s63
      %p72 = scmp.eq.s32.totalorder %s41, 1
      %p73 = por %p71, %p72
      %p74 = scmp.ne.s32.totalorder %s63, %s64
      %p75 = scmp.eq.s32.totalorder %s41, 0
      %p76 = por %p74, %p75
      %p77 = scmp.ne.s32.totalorder %s63, %s64
      %p78 = scmp.eq.s32.totalorder %s42, 1
      %p79 = por %p77, %p78
      %p81 = scmp.ne.s32.totalorder %s64, %s80
      %p82 = scmp.eq.s32.totalorder %s42, 0
      %p83 = por %p81, %p82
      %s84 = ssub.s32 %s43, %s55
      %p85 = scmp.eq.s32.totalorder %s84, 0
      %s87 = sadd.s32 %s86, 1
      %s88 = scalar_select %p85, %s86, %s87
      %p91 = pneg %p85
      %p92 = scmp.eq.s32.totalorder %s36, 1
      %p93 = por %p91, %p92
      %p94 = scmp.ne.s32.totalorder %s86, %s89
      %p95 = scmp.eq.s32.totalorder %s36, 0
      %p96 = por %p94, %p95
      %p97 = scmp.ne.s32.totalorder %s86, %s89
      %p98 = scmp.eq.s32.totalorder %s41, 1
      %p99 = por %p97, %p98
      %p100 = scmp.ne.s32.totalorder %s89, %s90
      %p101 = scmp.eq.s32.totalorder %s41, 0
      %p102 = por %p100, %p101
      %p103 = scmp.ne.s32.totalorder %s89, %s90
      %p104 = scmp.eq.s32.totalorder %s42, 1
      %p105 = por %p103, %p104
      %p107 = scmp.ne.s32.totalorder %s90, %s106
      %p108 = scmp.eq.s32.totalorder %s42, 0
      %p109 = por %p107, %p108
      %s110 = ssub.s32 %s43, %s55
      %p111 = scmp.eq.s32.totalorder %s110, 0
      %s113 = sadd.s32 %s112, 1
      %s114 = scalar_select %p111, %s112, %s113
      %p117 = pneg %p111
      %p118 = scmp.eq.s32.totalorder %s36, 1
      %p119 = por %p117, %p118
      %p120 = scmp.ne.s32.totalorder %s112, %s115
      %p121 = scmp.eq.s32.totalorder %s36, 0
      %p122 = por %p120, %p121
      %p123 = scmp.ne.s32.totalorder %s112, %s115
      %p124 = scmp.eq.s32.totalorder %s41, 1
      %p125 = por %p123, %p124
      %p126 = scmp.ne.s32.totalorder %s115, %s116
      %p127 = scmp.eq.s32.totalorder %s41, 0
      %p128 = por %p126, %p127
      %p129 = scmp.ne.s32.totalorder %s115, %s116
      %p130 = scmp.eq.s32.totalorder %s42, 1
      %p131 = por %p129, %p130
      %p133 = scmp.ne.s32.totalorder %s116, %s132
      %p134 = scmp.eq.s32.totalorder %s42, 0
      %p135 = por %p133, %p134
      %s136 = ssub.s32 %s43, %s55
      %s137 = ssub.s32 %s44, %s51
      %s138 = sor.u32 %s136, %s137
      %p139 = scmp.eq.s32.totalorder %s138, 0
      %s141 = sadd.s32 %s140, 1
      %s142 = scalar_select %p139, %s140, %s141
      %p145 = pneg %p139
      %p146 = scmp.eq.s32.totalorder %s36, 1
      %p147 = por %p145, %p146
      %p148 = scmp.ne.s32.totalorder %s140, %s143
      %p149 = scmp.eq.s32.totalorder %s36, 0
      %p150 = por %p148, %p149
      %p151 = scmp.ne.s32.totalorder %s140, %s143
      %p152 = scmp.eq.s32.totalorder %s41, 1
      %p153 = por %p151, %p152
      %p154 = scmp.ne.s32.totalorder %s143, %s144
      %p155 = scmp.eq.s32.totalorder %s41, 0
      %p156 = por %p154, %p155
      %p157 = scmp.ne.s32.totalorder %s143, %s144
      %p158 = scmp.eq.s32.totalorder %s42, 1
      %p159 = por %p157, %p158
      %p161 = scmp.ne.s32.totalorder %s144, %s160
      %p162 = scmp.eq.s32.totalorder %s42, 0
      %p163 = por %p161, %p162
      %s165 = sadd.s32 %s164, 1
      %p168 = scmp.eq.s32.totalorder %s36, 1
      %p169 = scmp.ne.s32.totalorder %s164, %s166
      %p170 = scmp.eq.s32.totalorder %s36, 0
      %p171 = por %p169, %p170
      %p172 = scmp.ne.s32.totalorder %s164, %s166
      %p173 = scmp.eq.s32.totalorder %s41, 1
      %p174 = por %p172, %p173
      %p175 = scmp.ne.s32.totalorder %s166, %s167
      %p176 = scmp.eq.s32.totalorder %s41, 0
      %p177 = por %p175, %p176
      %p178 = scmp.ne.s32.totalorder %s166, %s167
      %p179 = scmp.eq.s32.totalorder %s42, 1
      %p180 = por %p178, %p179
      %p182 = scmp.ne.s32.totalorder %s167, %s181
      %p183 = scmp.eq.s32.totalorder %s42, 0
      %p184 = por %p182, %p183
      %s186 = sadd.s32 %s185, 1
      %p189 = scmp.eq.s32.totalorder %s36, 1
      %p190 = scmp.ne.s32.totalorder %s185, %s187
      %p191 = scmp.eq.s32.totalorder %s36, 0
      %p192 = por %p190, %p191
      %p193 = scmp.ne.s32.totalorder %s185, %s187
      %p194 = scmp.eq.s32.totalorder %s41, 1
      %p195 = por %p193, %p194
      %p196 = scmp.ne.s32.totalorder %s187, %s188
      %p197 = scmp.eq.s32.totalorder %s41, 0
      %p198 = por %p196, %p197
      %p199 = scmp.ne.s32.totalorder %s187, %s188
      %p200 = scmp.eq.s32.totalorder %s42, 1
      %p201 = por %p199, %p200
      %p203 = scmp.ne.s32.totalorder %s188, %s202
      %p204 = scmp.eq.s32.totalorder %s42, 0
      %p205 = por %p203, %p204
      %s207 = sadd.s32 %s206, 1
      %p210 = scmp.eq.s32.totalorder %s36, 1
      %p211 = scmp.ne.s32.totalorder %s206, %s208
      %p212 = scmp.eq.s32.totalorder %s36, 0
      %p213 = por %p211, %p212
      %p214 = scmp.ne.s32.totalorder %s206, %s208
      %p215 = scmp.eq.s32.totalorder %s41, 1
      %p216 = por %p214, %p215
      %p217 = scmp.ne.s32.totalorder %s208, %s209
      %p218 = scmp.eq.s32.totalorder %s41, 0
      %p219 = por %p217, %p218
      %p220 = scmp.ne.s32.totalorder %s208, %s209
      %p221 = scmp.eq.s32.totalorder %s42, 1
      %p222 = por %p220, %p221
      %p224 = scmp.ne.s32.totalorder %s209, %s223
      %p225 = scmp.eq.s32.totalorder %s42, 0
      %p226 = por %p224, %p225
      %s228 = sadd.s32 %s227, 1
      %p231 = scmp.eq.s32.totalorder %s36, 1
      %p232 = scmp.ne.s32.totalorder %s227, %s229
      %p233 = scmp.eq.s32.totalorder %s36, 0
      %p234 = por %p232, %p233
      %p235 = scmp.ne.s32.totalorder %s227, %s229
      %p236 = scmp.eq.s32.totalorder %s41, 1
      %p237 = por %p235, %p236
      %p238 = scmp.ne.s32.totalorder %s229, %s230
      %p239 = scmp.eq.s32.totalorder %s41, 0
      %p240 = por %p238, %p239
      %p241 = scmp.ne.s32.totalorder %s229, %s230
      %p242 = scmp.eq.s32.totalorder %s42, 1
      %p243 = por %p241, %p242
      %p245 = scmp.ne.s32.totalorder %s230, %s244
      %p246 = scmp.eq.s32.totalorder %s42, 0
      %p247 = por %p245, %p246
      %s249 = sadd.s32 %s248, 1
      %p252 = scmp.eq.s32.totalorder %s36, 1
      %p253 = scmp.ne.s32.totalorder %s248, %s250
      %p254 = scmp.eq.s32.totalorder %s36, 0
      %p255 = por %p253, %p254
      %p256 = scmp.ne.s32.totalorder %s248, %s250
      %p257 = scmp.eq.s32.totalorder %s41, 1
      %p258 = por %p256, %p257
      %p259 = scmp.ne.s32.totalorder %s250, %s251
      %p260 = scmp.eq.s32.totalorder %s41, 0
      %p261 = por %p259, %p260
      %p262 = scmp.ne.s32.totalorder %s250, %s251
      %p263 = scmp.eq.s32.totalorder %s42, 1
      %p264 = por %p262, %p263
      %p266 = scmp.ne.s32.totalorder %s251, %s265
      %p267 = scmp.eq.s32.totalorder %s42, 0
      %p268 = por %p266, %p267
      %s270 = sadd.s32 %s269, 1
      %p273 = scmp.eq.s32.totalorder %s36, 1
      %p274 = scmp.ne.s32.totalorder %s269, %s271
      %p275 = scmp.eq.s32.totalorder %s36, 0
      %p276 = por %p274, %p275
      %p277 = scmp.ne.s32.totalorder %s269, %s271
      %p278 = scmp.eq.s32.totalorder %s41, 1
      %p279 = por %p277, %p278
      %p280 = scmp.ne.s32.totalorder %s271, %s272
      %p281 = scmp.eq.s32.totalorder %s41, 0
      %p282 = por %p280, %p281
      %p283 = scmp.ne.s32.totalorder %s271, %s272
      %p284 = scmp.eq.s32.totalorder %s42, 1
      %p285 = por %p283, %p284
      %p287 = scmp.ne.s32.totalorder %s272, %s286
      %p288 = scmp.eq.s32.totalorder %s42, 0
      %p289 = por %p287, %p288
      %s290 = ssub.s32 %s43, %s55
      %s291 = ssub.s32 %s44, %s51
      %s292 = sor.u32 %s290, %s291
      %p293 = scmp.eq.s32.totalorder %s292, 0
      %s295 = sadd.s32 %s294, 1
      %s296 = scalar_select %p293, %s294, %s295
      %p299 = pneg %p293
      %p300 = scmp.eq.s32.totalorder %s36, 1
      %p301 = por %p299, %p300
      %p302 = scmp.ne.s32.totalorder %s294, %s297
      %p303 = scmp.eq.s32.totalorder %s36, 0
      %p304 = por %p302, %p303
      %p305 = scmp.ne.s32.totalorder %s294, %s297
      %p306 = scmp.eq.s32.totalorder %s41, 1
      %p307 = por %p305, %p306
      %p308 = scmp.ne.s32.totalorder %s297, %s298
      %p309 = scmp.eq.s32.totalorder %s41, 0
      %p310 = por %p308, %p309
      %p311 = scmp.ne.s32.totalorder %s297, %s298
      %p312 = scmp.eq.s32.totalorder %s42, 1
      %p313 = por %p311, %p312
      %p315 = scmp.ne.s32.totalorder %s298, %s314
      %p316 = scmp.eq.s32.totalorder %s42, 0
      %p317 = por %p315, %p316
      %s318 = ssub.s32 %s43, %s55
      %s319 = ssub.s32 %s44, %s51
      %s320 = sor.u32 %s318, %s319
      %p321 = scmp.eq.s32.totalorder %s320, 0
      %s323 = sadd.s32 %s322, 1
      %s324 = scalar_select %p321, %s322, %s323
      %p327 = pneg %p321
      %p328 = scmp.eq.s32.totalorder %s36, 1
      %p329 = por %p327, %p328
      %p330 = scmp.ne.s32.totalorder %s322, %s325
      %p331 = scmp.eq.s32.totalorder %s36, 0
      %p332 = por %p330, %p331
      %p333 = scmp.ne.s32.totalorder %s322, %s325
      %p334 = scmp.eq.s32.totalorder %s41, 1
      %p335 = por %p333, %p334
      %p336 = scmp.ne.s32.totalorder %s325, %s326
      %p337 = scmp.eq.s32.totalorder %s41, 0
      %p338 = por %p336, %p337
      %p339 = scmp.ne.s32.totalorder %s325, %s326
      %p340 = scmp.eq.s32.totalorder %s42, 1
      %p341 = por %p339, %p340
      %p343 = scmp.ne.s32.totalorder %s326, %s342
      %p344 = scmp.eq.s32.totalorder %s42, 0
      %p345 = por %p343, %p344
      %p346 = scmp.le.s32.totalorder 1, %s36
      %p347 = scmp.lt.s32.totalorder %s36, 3
      %p348 = pnand %p346, %p347
      %p349 = pneg %p348
      // Predicated region
      $region9: #{tpu_custom_call.1} parent=5 // pred_check
        _
      $region10: #{tpu_custom_call.1} parent=5 // pred_check_branch
        %351 = sbr.rel (%p348) target = $region12
      $region11: #{tpu_custom_call.1} parent=5 // pred_region
        %s352 = ssub.s32 %s36, 1
        // Predicated region
        $region13: #{tpu_custom_call.1} parent=11 // pred_check
          %p353 = pneg %p177
        $region14: #{tpu_custom_call.1} parent=11 // pred_check_branch
          %355 = sbr.rel (%p353) target = $region16
        $region15: #{tpu_custom_call.1} parent=11 // pred_region
          %s357 = ssub.s32 768, 768
          %358 = vsyncadd [#allocation10], %s357
          %s359 = sshll.u32 [#allocation11], 4
          %s360 = int_to_ptr.vmem [resolvable:$true] %s359
          %365 = dma.hbm_to_vmem [thread:$0]  %s4, 768, %s360, [#allocation10], 64, 64, 4
        $region16: #{tpu_custom_call.1} parent=11 // pred_fallthru
          _
        // Predicated region
        $region17: #{tpu_custom_call.1} parent=11 // pred_check
          %p366 = pneg %p198
        $region18: #{tpu_custom_call.1} parent=11 // pred_check_branch
          %368 = sbr.rel (%p366) target = $region20
        $region19: #{tpu_custom_call.1} parent=11 // pred_region
          %s370 = ssub.s32 48, 48
          %371 = vsyncadd [#allocation13], %s370
          %s372 = sshll.u32 [#allocation12], 4
          %s373 = int_to_ptr.vmem [resolvable:$true] %s372
          %378 = dma.hbm_to_vmem [thread:$0]  %s5, 48, %s373, [#allocation13], 16, 16, 1
        $region20: #{tpu_custom_call.1} parent=11 // pred_fallthru
          _
        // Predicated region
        $region21: #{tpu_custom_call.1} parent=11 // pred_check
          %p379 = pneg %p219
        $region22: #{tpu_custom_call.1} parent=11 // pred_check_branch
          %381 = sbr.rel (%p379) target = $region24
        $region23: #{tpu_custom_call.1} parent=11 // pred_region
          %s383 = ssub.s32 256, 256
          %384 = vsyncadd [#allocation13], %s383
          %s385 = sshll.u32 [#allocation14], 4
          %s386 = int_to_ptr.vmem [resolvable:$true] %s385
          %391 = dma.hbm_to_vmem [thread:$0]  %s6, 256, %s386, [#allocation13], 64, 64, 4
        $region24: #{tpu_custom_call.1} parent=11 // pred_fallthru
          _
        // Predicated region
        $region25: #{tpu_custom_call.1} parent=11 // pred_check
          %p392 = pneg %p240
        $region26: #{tpu_custom_call.1} parent=11 // pred_check_branch
          %394 = sbr.rel (%p392) target = $region28
        $region27: #{tpu_custom_call.1} parent=11 // pred_region
          %s396 = ssub.s32 16, 16
          %397 = vsyncadd [#allocation16], %s396
          %s399 = sshll.u32 [#allocation15], 4
          %s400 = int_to_ptr.vmem [resolvable:$true] %s399
          %402 = dma.hbm_to_vmem [thread:$0]  %s7, 16, %s400, [#allocation16]
        $region28: #{tpu_custom_call.1} parent=11 // pred_fallthru
          _
        // Predicated region
        $region29: #{tpu_custom_call.1} parent=11 // pred_check
          %p403 = pneg %p261
        $region30: #{tpu_custom_call.1} parent=11 // pred_check_branch
          %405 = sbr.rel (%p403) target = $region32
        $region31: #{tpu_custom_call.1} parent=11 // pred_region
          %s407 = ssub.s32 16, 16
          %408 = vsyncadd [#allocation16], %s407
          %s410 = sshll.u32 [#allocation17], 4
          %s411 = int_to_ptr.vmem [resolvable:$true] %s410
          %413 = dma.hbm_to_vmem [thread:$0]  %s8, 16, %s411, [#allocation16]
        $region32: #{tpu_custom_call.1} parent=11 // pred_fallthru
          _
        // Predicated region
        $region33: #{tpu_custom_call.1} parent=11 // pred_check
          %p414 = pneg %p282
        $region34: #{tpu_custom_call.1} parent=11 // pred_check_branch
          %416 = sbr.rel (%p414) target = $region36
        $region35: #{tpu_custom_call.1} parent=11 // pred_region
          %s418 = ssub.s32 16, 16
          %419 = vsyncadd [#allocation19], %s418
          %s421 = sshll.u32 [#allocation18], 4
          %s422 = int_to_ptr.vmem [resolvable:$true] %s421
          %424 = dma.hbm_to_vmem [thread:$0]  %s9, 16, %s422, [#allocation19]
        $region36: #{tpu_custom_call.1} parent=11 // pred_fallthru
          _
      $region12: #{tpu_custom_call.1} parent=5 // pred_fallthru
        _
      %p425 = scmp.lt.s32.totalorder %s36, 2
      // Predicated region
      $region37: #{tpu_custom_call.1} parent=5 // pred_check
        %p426 = pneg %p425
      $region38: #{tpu_custom_call.1} parent=5 // pred_check_branch
        %428 = sbr.rel (%p426) target = $region40
      $region39: #{tpu_custom_call.1} parent=5 // pred_region
        // Predicated region
        $region41: #{tpu_custom_call.1} parent=39 // pred_check
          %p429 = pneg %p70
        $region42: #{tpu_custom_call.1} parent=39 // pred_check_branch
          %431 = sbr.rel (%p429) target = $region44
        $region43: #{tpu_custom_call.1} parent=39 // pred_region
          %s432 = sand.u32 %s60, 1
          %s433 = scalar_lea.sflag [#allocation4], %s432
          %s434 = sand.u32 %s60, 1
          %s435 = smul.addr %s434, 8
          %s436 = scalar_lea.vmem [#allocation3], %s435
          %s438 = ssub.s32 128, 128
          %439 = vsyncadd %s433, %s438
          %s440 = sadd.s32 %s44, %s43
          %s441 = smul.addr %s440, 128
          %s442 = scalar_lea.hbm %s0, %s441
          %s444 = sshll.u32 %s436, 4
          %s445 = int_to_ptr.vmem [resolvable:$true] %s444
          %447 = dma.hbm_to_vmem [thread:$0]  %s442, 128, %s445, %s433
        $region44: #{tpu_custom_call.1} parent=39 // pred_fallthru
          _
        // Predicated region
        $region45: #{tpu_custom_call.1} parent=39 // pred_check
          %p448 = pneg %p96
        $region46: #{tpu_custom_call.1} parent=39 // pred_check_branch
          %450 = sbr.rel (%p448) target = $region48
        $region47: #{tpu_custom_call.1} parent=39 // pred_region
          %s451 = sand.u32 %s36, 1
          %s452 = scalar_lea.sflag [#allocation7], %s451
          %s453 = sand.u32 %s86, 1
          %s454 = smul.addr %s453, 4
          %s455 = scalar_lea.vmem [#allocation6], %s454
          %s457 = ssub.s32 64, 64
          %458 = vsyncadd %s452, %s457
          %s459 = smul.addr %s43, 64
          %s460 = scalar_lea.hbm %s1, %s459
          %s462 = sshll.u32 %s455, 4
          %s463 = int_to_ptr.vmem [resolvable:$true] %s462
          %465 = dma.hbm_to_vmem [thread:$0]  %s460, 64, %s463, %s452
        $region48: #{tpu_custom_call.1} parent=39 // pred_fallthru
          _
        // Predicated region
        $region49: #{tpu_custom_call.1} parent=39 // pred_check
          %p466 = pneg %p122
        $region50: #{tpu_custom_call.1} parent=39 // pred_check_branch
          %468 = sbr.rel (%p466) target = $region52
        $region51: #{tpu_custom_call.1} parent=39 // pred_region
          %s469 = sand.u32 %s36, 1
          %s470 = scalar_lea.sflag [#allocation7], %s469
          %s471 = sand.u32 %s112, 1
          %s472 = smul.addr %s471, 4
          %s473 = scalar_lea.vmem [#allocation8], %s472
          %s475 = ssub.s32 64, 64
          %476 = vsyncadd %s470, %s475
          %s477 = smul.addr %s43, 64
          %s478 = scalar_lea.hbm %s2, %s477
          %s480 = sshll.u32 %s473, 4
          %s481 = int_to_ptr.vmem [resolvable:$true] %s480
          %483 = dma.hbm_to_vmem [thread:$0]  %s478, 64, %s481, %s470
        $region52: #{tpu_custom_call.1} parent=39 // pred_fallthru
          _
        // Predicated region
        $region53: #{tpu_custom_call.1} parent=39 // pred_check
          %p484 = pneg %p150
        $region54: #{tpu_custom_call.1} parent=39 // pred_check_branch
          %486 = sbr.rel (%p484) target = $region56
        $region55: #{tpu_custom_call.1} parent=39 // pred_region
          %s487 = sand.u32 %s36, 1
          %s488 = scalar_lea.sflag [#allocation10], %s487
          %s489 = sand.u32 %s140, 1
          %s490 = smul.addr %s489, 8
          %s491 = scalar_lea.vmem [#allocation9], %s490
          %s493 = ssub.s32 128, 128
          %494 = vsyncadd %s488, %s493
          %s495 = smul.addr %s43, 4
          %s496 = sadd.s32 %s44, %s495
          %s497 = smul.addr %s496, 32
          %s498 = scalar_lea.hbm %s3, %s497
          %s499 = sshll.u32 %s491, 4
          %s500 = int_to_ptr.vmem [resolvable:$true] %s499
          %505 = dma.hbm_to_vmem [thread:$0]  %s498, 128, %s500, %s488, 32, 32, 2
        $region56: #{tpu_custom_call.1} parent=39 // pred_fallthru
          _
      $region40: #{tpu_custom_call.1} parent=5 // pred_fallthru
        _
      %p506 = scmp.le.s32.totalorder 1, %s36
      %p507 = scmp.lt.s32.totalorder %s36, 3
      %p508 = pnand %p506, %p507
      %p509 = pneg %p508
      // Predicated region
      $region57: #{tpu_custom_call.1} parent=5 // pred_check
        _
      $region58: #{tpu_custom_call.1} parent=5 // pred_check_branch
        %511 = sbr.rel (%p508) target = $region60
      $region59: #{tpu_custom_call.1} parent=5 // pred_region
        %s512 = ssub.s32 %s36, 1
        %s513 = sand.u32 %s63, 1
        %s514 = scalar_lea.sflag [#allocation4], %s513
        %s515 = sand.u32 %s63, 1
        %s516 = smul.addr %s515, 8
        %s517 = scalar_lea.vmem [#allocation3], %s516
        // Predicated region
        $region61: #{tpu_custom_call.1} parent=59 // pred_check
          %p518 = pneg %p76
        $region62: #{tpu_custom_call.1} parent=59 // pred_check_branch
          %520 = sbr.rel (%p518) target = $region64
        $region63: #{tpu_custom_call.1} parent=59 // pred_region
          %521 = dma.done %s514, 128
        $region64: #{tpu_custom_call.1} parent=59 // pred_fallthru
          _
        %s522 = sand.u32 %s41, 1
        %s523 = scalar_lea.sflag [#allocation7], %s522
        %s524 = sand.u32 %s89, 1
        %s525 = smul.addr %s524, 4
        %s526 = scalar_lea.vmem [#allocation6], %s525
        // Predicated region
        $region65: #{tpu_custom_call.1} parent=59 // pred_check
          %p527 = pneg %p102
        $region66: #{tpu_custom_call.1} parent=59 // pred_check_branch
          %529 = sbr.rel (%p527) target = $region68
        $region67: #{tpu_custom_call.1} parent=59 // pred_region
          %530 = dma.done %s523, 64
        $region68: #{tpu_custom_call.1} parent=59 // pred_fallthru
          _
        %s531 = sand.u32 %s41, 1
        %s532 = scalar_lea.sflag [#allocation7], %s531
        %s533 = sand.u32 %s115, 1
        %s534 = smul.addr %s533, 4
        %s535 = scalar_lea.vmem [#allocation8], %s534
        // Predicated region
        $region69: #{tpu_custom_call.1} parent=59 // pred_check
          %p536 = pneg %p128
        $region70: #{tpu_custom_call.1} parent=59 // pred_check_branch
          %538 = sbr.rel (%p536) target = $region72
        $region71: #{tpu_custom_call.1} parent=59 // pred_region
          %539 = dma.done %s532, 64
        $region72: #{tpu_custom_call.1} parent=59 // pred_fallthru
          _
        %s540 = sand.u32 %s41, 1
        %s541 = scalar_lea.sflag [#allocation10], %s540
        %s542 = sand.u32 %s143, 1
        %s543 = smul.addr %s542, 8
        %s544 = scalar_lea.vmem [#allocation9], %s543
        // Predicated region
        $region73: #{tpu_custom_call.1} parent=59 // pred_check
          %p545 = pneg %p156
        $region74: #{tpu_custom_call.1} parent=59 // pred_check_branch
          %547 = sbr.rel (%p545) target = $region76
        $region75: #{tpu_custom_call.1} parent=59 // pred_region
          %548 = dma.done %s541, 128
        $region76: #{tpu_custom_call.1} parent=59 // pred_fallthru
          _
        // Predicated region
        $region77: #{tpu_custom_call.1} parent=59 // pred_check
          %p549 = pneg %p177
        $region78: #{tpu_custom_call.1} parent=59 // pred_check_branch
          %551 = sbr.rel (%p549) target = $region80
        $region79: #{tpu_custom_call.1} parent=59 // pred_region
          %552 = dma.done [#allocation10], 768
        $region80: #{tpu_custom_call.1} parent=59 // pred_fallthru
          _
        // Predicated region
        $region81: #{tpu_custom_call.1} parent=59 // pred_check
          %p553 = pneg %p198
        $region82: #{tpu_custom_call.1} parent=59 // pred_check_branch
          %555 = sbr.rel (%p553) target = $region84
        $region83: #{tpu_custom_call.1} parent=59 // pred_region
          %556 = dma.done [#allocation13], 48
        $region84: #{tpu_custom_call.1} parent=59 // pred_fallthru
          _
        // Predicated region
        $region85: #{tpu_custom_call.1} parent=59 // pred_check
          %p557 = pneg %p219
        $region86: #{tpu_custom_call.1} parent=59 // pred_check_branch
          %559 = sbr.rel (%p557) target = $region88
        $region87: #{tpu_custom_call.1} parent=59 // pred_region
          %560 = dma.done [#allocation13], 256
        $region88: #{tpu_custom_call.1} parent=59 // pred_fallthru
          _
        // Predicated region
        $region89: #{tpu_custom_call.1} parent=59 // pred_check
          %p561 = pneg %p240
        $region90: #{tpu_custom_call.1} parent=59 // pred_check_branch
          %563 = sbr.rel (%p561) target = $region92
        $region91: #{tpu_custom_call.1} parent=59 // pred_region
          %564 = dma.done [#allocation16], 16
        $region92: #{tpu_custom_call.1} parent=59 // pred_fallthru
          _
        // Predicated region
        $region93: #{tpu_custom_call.1} parent=59 // pred_check
          %p565 = pneg %p261
        $region94: #{tpu_custom_call.1} parent=59 // pred_check_branch
          %567 = sbr.rel (%p565) target = $region96
        $region95: #{tpu_custom_call.1} parent=59 // pred_region
          %568 = dma.done [#allocation16], 16
        $region96: #{tpu_custom_call.1} parent=59 // pred_fallthru
          _
        // Predicated region
        $region97: #{tpu_custom_call.1} parent=59 // pred_check
          %p569 = pneg %p282
        $region98: #{tpu_custom_call.1} parent=59 // pred_check_branch
          %571 = sbr.rel (%p569) target = $region100
        $region99: #{tpu_custom_call.1} parent=59 // pred_region
          %572 = dma.done [#allocation19], 16
        $region100: #{tpu_custom_call.1} parent=59 // pred_fallthru
          _
        %s573 = sand.u32 %s63, 1
        %s574 = scalar_lea.sflag [#allocation4], %s573
        %s575 = sand.u32 %s63, 1
        %s576 = smul.addr %s575, 8
        %s577 = scalar_lea.vmem [#allocation3], %s576
        %p578 = pneg %p76
        %p579 = pneg %p73
        %s580 = sand.u32 %s41, 1
        %s581 = scalar_lea.sflag [#allocation7], %s580
        %s582 = sand.u32 %s89, 1
        %s583 = smul.addr %s582, 4
        %s584 = scalar_lea.vmem [#allocation6], %s583
        %p585 = pneg %p102
        %p586 = pneg %p99
        %s587 = sand.u32 %s41, 1
        %s588 = scalar_lea.sflag [#allocation7], %s587
        %s589 = sand.u32 %s115, 1
        %s590 = smul.addr %s589, 4
        %s591 = scalar_lea.vmem [#allocation8], %s590
        %p592 = pneg %p128
        %p593 = pneg %p125
        %s594 = sand.u32 %s41, 1
        %s595 = scalar_lea.sflag [#allocation10], %s594
        %s596 = sand.u32 %s143, 1
        %s597 = smul.addr %s596, 8
        %s598 = scalar_lea.vmem [#allocation9], %s597
        %p599 = pneg %p156
        %p600 = pneg %p153
        %p601 = pneg %p177
        %p602 = pneg %p174
        %p603 = pneg %p198
        %p604 = pneg %p195
        %p605 = pneg %p219
        %p606 = pneg %p216
        %p607 = pneg %p240
        %p608 = pneg %p237
        %p609 = pneg %p261
        %p610 = pneg %p258
        %p611 = pneg %p282
        %p612 = pneg %p279
        %p613 = pneg %p310
        %p614 = pneg %p307
        %s615 = sand.u32 %s297, 1
        %s616 = scalar_lea.sflag [#allocation5], %s615
        %s617 = sand.u32 %s297, 1
        %s618 = smul.addr %s617, 8
        %s619 = scalar_lea.vmem [#allocation20], %s618
        %p620 = pneg %p338
        %p621 = pneg %p335
        %s622 = sand.u32 %s325, 1
        %s623 = scalar_lea.sflag [#allocation22], %s622
        %s624 = sand.u32 %s325, 1
        %s625 = smul.addr %s624, 16
        %s626 = scalar_lea.vmem [#allocation21], %s625
        %p630 = scmp.eq.s32.totalorder %s46, 0
        // Predicated region
        $region101: #{tpu_custom_call.1} parent=59 // pred_check
          %p631 = pneg %p630
        $region102: #{tpu_custom_call.1} parent=59 // pred_check_branch
          %633 = sbr.rel (%p631) target = $region104
        $region103: #{tpu_custom_call.1} parent=59 // pred_region
          %v634 = vld [vmem:[%s526] sm:$0xf]
          %s635 = scalar_lea.vmem [#allocation11], 16
          %v636 = vld [vmem:[%s635] sm:$0xf]
          %v637 = vld [vmem:[%s635 + $0x4] sm:$0xf]
          %v638 = vld [vmem:[%s635 + $0x8] sm:$0xf]
          %v639 = vld [vmem:[%s635 + $0xc] sm:$0xf]
          %s640 = scalar_lea.vmem [#allocation12], 1
          %v641 = vld [vmem:[%s640] sm:$0x1]
          %v643 = vlaneseq
          %v644 = vshrl.u32 %v643, 7
          %v645 = vsub.s32 0, %v644
          %v646 = vrot.slane %v641, %v645
          %v652 = vunpack.c.l.b16 %v636
          %v653 = vunpack.c.l.b16 %v637
          %v654 = vunpack.c.l.b16 %v638
          %v655 = vunpack.c.l.b16 %v639
          %v656 = vpack.c.b16 %v653, %v652
          %v657 = vpack.c.b16 %v655, %v654
          %vm660 = vcmask 261120
          %v662 = vsel %vm660, %v634, 0
          %664 = vmatprep.subr.bf16.mxu0 0
          %665 = vmatpush1.bf16.msra.mxu0 %v656
          %666 = vmatprep.subr.bf16.mxu0 0
          %667 = vmatpush1.bf16.msra.mxu0 %v657
          %668 = vmatprep.subr.bf16.mxu0 0
          %669 = vmatpush1.bf16.msra.mxu0 0
          %670 = vmatprep.subr.bf16.mxu0 0
          %671 = vmatpush1.bf16.msra.mxu0 0
          %672 = vmatprep.subr.bf16.mxu0 0
          %673 = vmatpush1.bf16.msra.mxu0 0
          %674 = vmatprep.subr.bf16.mxu0 0
          %675 = vmatpush1.bf16.msra.mxu0 0
          %676 = vmatprep.subr.bf16.mxu0 0
          %677 = vmatpush1.bf16.msra.mxu0 0
          %678 = vmatprep.subr.bf16.mxu0 0
          %679 = vmatpush1.bf16.msra.mxu0 0
          %680 = vmatprep.subr.bf16.mxu0 0
          %681 = vmatpush1.bf16.msra.mxu0 0
          %682 = vmatprep.subr.bf16.mxu0 0
          %683 = vmatpush1.bf16.msra.mxu0 0
          %684 = vmatprep.subr.bf16.mxu0 0
          %685 = vmatpush1.bf16.msra.mxu0 0
          %686 = vmatprep.subr.bf16.mxu0 0
          %687 = vmatpush1.bf16.msra.mxu0 0
          %688 = vmatprep.subr.bf16.mxu0 0
          %689 = vmatpush1.bf16.msra.mxu0 0
          %690 = vmatprep.subr.bf16.mxu0 0
          %691 = vmatpush1.bf16.msra.mxu0 0
          %692 = vmatprep.subr.bf16.mxu0 0
          %693 = vmatpush1.bf16.msra.mxu0 0
          %694 = vmatprep.subr.bf16.mxu0 0
          %695 = vmatpush1.bf16.msra.mxu0 0
          %696 = vmatprep.mubr.bf16.mxu0 0
          %697 = vmatmul.mubr.bf16.gmra.mrb[0].mxu0 %v662
          %v698 = vpop.f32.mrb[0].mxu0
          %v699 = vadd.f32 %v646, %v698
          %v700 = vpop.f32.mrb[0].mxu0
          %v701 = vpop.f32.mrb[0].mxu0
          %v702 = vpop.f32.mrb[0].mxu0
          %703 = vdwg.mxu0
          %v704 = vld [vmem:[%s535] sm:$0xf]
          %s705 = scalar_lea.vmem [#allocation11], 32
          %v706 = vld [vmem:[%s705] sm:$0xf]
          %v707 = vld [vmem:[%s705 + $0x4] sm:$0xf]
          %v708 = vld [vmem:[%s705 + $0x8] sm:$0xf]
          %v709 = vld [vmem:[%s705 + $0xc] sm:$0xf]
          %s710 = scalar_lea.vmem [#allocation12], 2
          %v711 = vld [vmem:[%s710] sm:$0x1]
          %v713 = vlaneseq
          %v714 = vshrl.u32 %v713, 7
          %v715 = vsub.s32 0, %v714
          %v716 = vrot.slane %v711, %v715
          %v722 = vunpack.c.l.b16 %v706
          %v723 = vunpack.c.l.b16 %v707
          %v724 = vunpack.c.l.b16 %v708
          %v725 = vunpack.c.l.b16 %v709
          %v726 = vpack.c.b16 %v723, %v722
          %v727 = vpack.c.b16 %v725, %v724
          %v731 = vsel %vm660, %v704, 0
          %733 = vmatprep.subr.bf16.mxu0 0
          %734 = vmatpush1.bf16.msra.mxu0 %v726
          %735 = vmatprep.subr.bf16.mxu0 0
          %736 = vmatpush1.bf16.msra.mxu0 %v727
          %737 = vmatprep.subr.bf16.mxu0 0
          %738 = vmatpush1.bf16.msra.mxu0 0
          %739 = vmatprep.subr.bf16.mxu0 0
          %740 = vmatpush1.bf16.msra.mxu0 0
          %741 = vmatprep.subr.bf16.mxu0 0
          %742 = vmatpush1.bf16.msra.mxu0 0
          %743 = vmatprep.subr.bf16.mxu0 0
          %744 = vmatpush1.bf16.msra.mxu0 0
          %745 = vmatprep.subr.bf16.mxu0 0
          %746 = vmatpush1.bf16.msra.mxu0 0
          %747 = vmatprep.subr.bf16.mxu0 0
          %748 = vmatpush1.bf16.msra.mxu0 0
          %749 = vmatprep.subr.bf16.mxu0 0
          %750 = vmatpush1.bf16.msra.mxu0 0
          %751 = vmatprep.subr.bf16.mxu0 0
          %752 = vmatpush1.bf16.msra.mxu0 0
          %753 = vmatprep.subr.bf16.mxu0 0
          %754 = vmatpush1.bf16.msra.mxu0 0
          %755 = vmatprep.subr.bf16.mxu0 0
          %756 = vmatpush1.bf16.msra.mxu0 0
          %757 = vmatprep.subr.bf16.mxu0 0
          %758 = vmatpush1.bf16.msra.mxu0 0
          %759 = vmatprep.subr.bf16.mxu0 0
          %760 = vmatpush1.bf16.msra.mxu0 0
          %761 = vmatprep.subr.bf16.mxu0 0
          %762 = vmatpush1.bf16.msra.mxu0 0
          %763 = vmatprep.subr.bf16.mxu0 0
          %764 = vmatpush1.bf16.msra.mxu0 0
          %765 = vmatprep.mubr.bf16.mxu0 0
          %766 = vmatmul.mubr.bf16.gmra.mrb[0].mxu0 %v731
          %v767 = vpop.f32.mrb[0].mxu0
          %v768 = vadd.f32 %v716, %v767
          %v769 = vpop.f32.mrb[0].mxu0
          %v770 = vpop.f32.mrb[0].mxu0
          %v771 = vpop.f32.mrb[0].mxu0
          %772 = vdwg.mxu0
          %v773 = vpack.c.bf16 %v699, %v699
          %vm774 = vcmask 257024
          %775 = vst.msk [vmem:[#allocation2] sm:$0xf] %vm774, %v773
          %v776 = vpack.c.bf16 %v768, %v768
          %s777 = scalar_lea.vmem [#allocation2], 4
          %778 = vst.msk [vmem:[%s777] sm:$0xf] %vm774, %v776
        $region104: #{tpu_custom_call.1} parent=59 // pred_fallthru
          _
        %v779 = vld [vmem:[%s517] sm:$0xff]
        %v780 = vpack.c.bf16 %v779, %v779
        %v781 = vld [vmem:[#allocation11] sm:$0xf]
        %v782 = vld [vmem:[#allocation11 + $0x4] sm:$0xf]
        %v783 = vld [vmem:[#allocation11 + $0x8] sm:$0xf]
        %v784 = vld [vmem:[#allocation11 + $0xc] sm:$0xf]
        %v785 = vld [vmem:[#allocation12] sm:$0x1]
        %v787 = vlaneseq
        %v788 = vshrl.u32 %v787, 7
        %v789 = vsub.s32 0, %v788
        %v790 = vrot.slane %v785, %v789
        %v796 = vunpack.c.l.b16 %v781
        %v797 = vunpack.c.l.b16 %v782
        %v798 = vunpack.c.l.b16 %v783
        %v799 = vunpack.c.l.b16 %v784
        %v800 = vpack.c.b16 %v797, %v796
        %v801 = vpack.c.b16 %v799, %v798
        %vm804 = vcmask 261120
        %v806 = vsel %vm804, %v780, 0
        %808 = vmatprep.subr.bf16.mxu0 0
        %809 = vmatpush1.bf16.msra.mxu0 %v800
        %810 = vmatprep.subr.bf16.mxu0 0
        %811 = vmatpush1.bf16.msra.mxu0 %v801
        %812 = vmatprep.subr.bf16.mxu0 0
        %813 = vmatpush1.bf16.msra.mxu0 0
        %814 = vmatprep.subr.bf16.mxu0 0
        %815 = vmatpush1.bf16.msra.mxu0 0
        %816 = vmatprep.subr.bf16.mxu0 0
        %817 = vmatpush1.bf16.msra.mxu0 0
        %818 = vmatprep.subr.bf16.mxu0 0
        %819 = vmatpush1.bf16.msra.mxu0 0
        %820 = vmatprep.subr.bf16.mxu0 0
        %821 = vmatpush1.bf16.msra.mxu0 0
        %822 = vmatprep.subr.bf16.mxu0 0
        %823 = vmatpush1.bf16.msra.mxu0 0
        %824 = vmatprep.subr.bf16.mxu0 0
        %825 = vmatpush1.bf16.msra.mxu0 0
        %826 = vmatprep.subr.bf16.mxu0 0
        %827 = vmatpush1.bf16.msra.mxu0 0
        %828 = vmatprep.subr.bf16.mxu0 0
        %829 = vmatpush1.bf16.msra.mxu0 0
        %830 = vmatprep.subr.bf16.mxu0 0
        %831 = vmatpush1.bf16.msra.mxu0 0
        %832 = vmatprep.subr.bf16.mxu0 0
        %833 = vmatpush1.bf16.msra.mxu0 0
        %834 = vmatprep.subr.bf16.mxu0 0
        %835 = vmatpush1.bf16.msra.mxu0 0
        %836 = vmatprep.subr.bf16.mxu0 0
        %837 = vmatpush1.bf16.msra.mxu0 0
        %838 = vmatprep.subr.bf16.mxu0 0
        %839 = vmatpush1.bf16.msra.mxu0 0
        %840 = vmatprep.mubr.bf16.mxu0 0
        %841 = vmatmul.mubr.bf16.gmra.mrb[0].mxu0 %v806
        %v842 = vpop.f32.mrb[0].mxu0
        %v843 = vadd.f32 %v790, %v842
        %v844 = vpop.f32.mrb[0].mxu0
        %v845 = vpop.f32.mrb[0].mxu0
        %v846 = vpop.f32.mrb[0].mxu0
        %847 = vdwg.mxu0
        %849 = vrot.lane.b32.xlu0 %v843, 120
        %v850 = vpop.permute.xlu0 %849
        %852 = vrot.lane.b32.xlu0 %v843, 112
        %v853 = vpop.permute.xlu0 %852
        %855 = vrot.lane.b32.xlu0 %v843, 104
        %v856 = vpop.permute.xlu0 %855
        %v858 = vcombine.low %v843, %v853
        %v859 = vcombine.high %v843, %v853
        %v861 = vunpack.c.l.s4 1983009808
        %v862 = vunpack.c.0.s8 %v861
        %v863 = vlaneseq
        %v864 = vshrl.u32 %v863, 7
        %v865 = vsub.s32 %v862, %v864
        %v866 = vrot.slane %v858, %v865
        %v868 = vunpack.c.l.s4 1983009808
        %v869 = vunpack.c.0.s8 %v868
        %v870 = vlaneseq
        %v871 = vshrl.u32 %v870, 7
        %v872 = vsub.s32 %v869, %v871
        %v873 = vrot.slane %v859, %v872
        %v874 = vcombine.low %v850, %v856
        %v875 = vcombine.high %v850, %v856
        %v877 = vunpack.c.l.s4 1983009808
        %v878 = vunpack.c.0.s8 %v877
        %v879 = vlaneseq
        %v880 = vshrl.u32 %v879, 7
        %v881 = vsub.s32 %v878, %v880
        %v882 = vrot.slane %v874, %v881
        %v884 = vunpack.c.l.s4 1983009808
        %v885 = vunpack.c.0.s8 %v884
        %v886 = vlaneseq
        %v887 = vshrl.u32 %v886, 7
        %v888 = vsub.s32 %v885, %v887
        %v889 = vrot.slane %v875, %v888
        %v890 = vcombine.low %v866, %v882
        %v891 = vcombine.high %v866, %v882
        %v893 = vunpack.c.l.s4 1934713408
        %v894 = vunpack.c.0.s8 %v893
        %v895 = vlaneseq
        %v896 = vshrl.u32 %v895, 7
        %v897 = vsub.s32 %v894, %v896
        %v898 = vrot.slane %v890, %v897
        %v900 = vunpack.c.l.s4 1934713408
        %v901 = vunpack.c.0.s8 %v900
        %v902 = vlaneseq
        %v903 = vshrl.u32 %v902, 7
        %v904 = vsub.s32 %v901, %v903
        %v905 = vrot.slane %v891, %v904
        %v906 = vcombine.low %v873, %v889
        %v907 = vcombine.high %v873, %v889
        %v909 = vunpack.c.l.s4 1934713408
        %v910 = vunpack.c.0.s8 %v909
        %v911 = vlaneseq
        %v912 = vshrl.u32 %v911, 7
        %v913 = vsub.s32 %v910, %v912
        %v914 = vrot.slane %v906, %v913
        %v916 = vunpack.c.l.s4 1934713408
        %v917 = vunpack.c.0.s8 %v916
        %v918 = vlaneseq
        %v919 = vshrl.u32 %v918, 7
        %v920 = vsub.s32 %v917, %v919
        %v921 = vrot.slane %v907, %v920
        %v922 = vcombine.high %v898, 0.0
        %v923 = vcombine.high %v905, 0.0
        %v924 = vcombine.high %v914, 0.0
        %v925 = vcombine.high %v921, 0.0
        %v926 = vcombine.low %v898, %v905
        %v928 = vunpack.c.l.s4 1983009808
        %v929 = vunpack.c.0.s8 %v928
        %v930 = vlaneseq
        %v931 = vshrl.u32 %v930, 7
        %v932 = vsub.s32 %v929, %v931
        %v933 = vrot.slane %v926, %v932
        %v934 = vcombine.low %v922, %v923
        %v936 = vunpack.c.l.s4 1983009808
        %v937 = vunpack.c.0.s8 %v936
        %v938 = vlaneseq
        %v939 = vshrl.u32 %v938, 7
        %v940 = vsub.s32 %v937, %v939
        %v941 = vrot.slane %v934, %v940
        %v942 = vcombine.low %v914, %v921
        %v944 = vunpack.c.l.s4 1983009808
        %v945 = vunpack.c.0.s8 %v944
        %v946 = vlaneseq
        %v947 = vshrl.u32 %v946, 7
        %v948 = vsub.s32 %v945, %v947
        %v949 = vrot.slane %v942, %v948
        %v950 = vcombine.low %v924, %v925
        %v952 = vunpack.c.l.s4 1983009808
        %v953 = vunpack.c.0.s8 %v952
        %v954 = vlaneseq
        %v955 = vshrl.u32 %v954, 7
        %v956 = vsub.s32 %v953, %v955
        %v957 = vrot.slane %v950, %v956
        %v958 = vcombine.low %v933, %v941
        %v959 = vcombine.high %v933, %v941
        %v961 = vunpack.c.l.s4 1934713408
        %v962 = vunpack.c.0.s8 %v961
        %v963 = vlaneseq
        %v964 = vshrl.u32 %v963, 7
        %v965 = vsub.s32 %v962, %v964
        %v966 = vrot.slane %v958, %v965
        %v968 = vunpack.c.l.s4 1934713408
        %v969 = vunpack.c.0.s8 %v968
        %v970 = vlaneseq
        %v971 = vshrl.u32 %v970, 7
        %v972 = vsub.s32 %v969, %v971
        %v973 = vrot.slane %v959, %v972
        %v974 = vcombine.low %v949, %v957
        %v975 = vcombine.high %v949, %v957
        %v977 = vunpack.c.l.s4 1934713408
        %v978 = vunpack.c.0.s8 %v977
        %v979 = vlaneseq
        %v980 = vshrl.u32 %v979, 7
        %v981 = vsub.s32 %v978, %v980
        %v982 = vrot.slane %v974, %v981
        %v984 = vunpack.c.l.s4 1934713408
        %v985 = vunpack.c.0.s8 %v984
        %v986 = vlaneseq
        %v987 = vshrl.u32 %v986, 7
        %v988 = vsub.s32 %v985, %v987
        %v989 = vrot.slane %v975, %v988
        %v990 = vcombine.low %v966, %v982
        %v991 = vcombine.high %v966, %v982
        %v992 = vcombine.low %v973, %v989
        %v993 = vcombine.high %v973, %v989
        %v994 = vld [vmem:[#allocation2] sm:$0xf]
        %996 = vrot.lane.b32.xlu0 %v994, 120
        %v997 = vpop.permute.xlu0 %996
        %998 = vrot.lane.b32.xlu0 %v994, 112
        %v999 = vpop.permute.xlu0 %998
        %1000 = vrot.lane.b32.xlu0 %v994, 104
        %v1001 = vpop.permute.xlu0 %1000
        %v1004 = vpack.i.b16 %v997, %v994
        %v1005 = vshrl.u32 %v994, 16
        %v1006 = vshrl.u32 %v997, 16
        %v1007 = vpack.i.b16 %v1006, %v1005
        %v1010 = vpack.i.b16 %v1001, %v999
        %v1011 = vshrl.u32 %v999, 16
        %v1012 = vshrl.u32 %v1001, 16
        %v1013 = vpack.i.b16 %v1012, %v1011
        %v1016 = vunpack.c.l.s4 1983009808
        %v1017 = vunpack.c.0.s8 %v1016
        %v1018 = vlaneseq
        %v1019 = vshrl.u32 %v1018, 7
        %v1020 = vsub.s32 %v1017, %v1019
        %v1021 = vrot.slane %v1004, %v1020
        %v1024 = vunpack.c.l.s4 1983009808
        %v1025 = vunpack.c.0.s8 %v1024
        %v1026 = vlaneseq
        %v1027 = vshrl.u32 %v1026, 7
        %v1028 = vsub.s32 %v1025, %v1027
        %v1029 = vrot.slane %v1010, %v1028
        %v1030 = vcombine.low %v1021, %v1029
        %v1031 = vcombine.high %v1021, %v1029
        %v1033 = vunpack.c.l.s4 1934713408
        %v1034 = vunpack.c.0.s8 %v1033
        %v1035 = vlaneseq
        %v1036 = vshrl.u32 %v1035, 7
        %v1037 = vsub.s32 %v1034, %v1036
        %v1038 = vrot.slane %v1030, %v1037
        %v1040 = vunpack.c.l.s4 1934713408
        %v1041 = vunpack.c.0.s8 %v1040
        %v1042 = vlaneseq
        %v1043 = vshrl.u32 %v1042, 7
        %v1044 = vsub.s32 %v1041, %v1043
        %v1045 = vrot.slane %v1031, %v1044
        %v1046 = vcombine.high %v1038, 0
        %v1047 = vcombine.high %v1045, 0
        %v1050 = vunpack.c.l.s4 1983009808
        %v1051 = vunpack.c.0.s8 %v1050
        %v1052 = vlaneseq
        %v1053 = vshrl.u32 %v1052, 7
        %v1054 = vsub.s32 %v1051, %v1053
        %v1055 = vrot.slane %v1007, %v1054
        %v1058 = vunpack.c.l.s4 1983009808
        %v1059 = vunpack.c.0.s8 %v1058
        %v1060 = vlaneseq
        %v1061 = vshrl.u32 %v1060, 7
        %v1062 = vsub.s32 %v1059, %v1061
        %v1063 = vrot.slane %v1013, %v1062
        %v1064 = vcombine.low %v1055, %v1063
        %v1065 = vcombine.high %v1055, %v1063
        %v1067 = vunpack.c.l.s4 1934713408
        %v1068 = vunpack.c.0.s8 %v1067
        %v1069 = vlaneseq
        %v1070 = vshrl.u32 %v1069, 7
        %v1071 = vsub.s32 %v1068, %v1070
        %v1072 = vrot.slane %v1064, %v1071
        %v1074 = vunpack.c.l.s4 1934713408
        %v1075 = vunpack.c.0.s8 %v1074
        %v1076 = vlaneseq
        %v1077 = vshrl.u32 %v1076, 7
        %v1078 = vsub.s32 %v1075, %v1077
        %v1079 = vrot.slane %v1065, %v1078
        %v1080 = vcombine.high %v1072, 0
        %v1081 = vcombine.high %v1079, 0
        %v1082 = vcombine.low %v1038, %v1045
        %v1084 = vunpack.c.l.s4 1983009808
        %v1085 = vunpack.c.0.s8 %v1084
        %v1086 = vlaneseq
        %v1087 = vshrl.u32 %v1086, 7
        %v1088 = vsub.s32 %v1085, %v1087
        %v1089 = vrot.slane %v1082, %v1088
        %v1090 = vcombine.low %v1046, %v1047
        %v1092 = vunpack.c.l.s4 1983009808
        %v1093 = vunpack.c.0.s8 %v1092
        %v1094 = vlaneseq
        %v1095 = vshrl.u32 %v1094, 7
        %v1096 = vsub.s32 %v1093, %v1095
        %v1097 = vrot.slane %v1090, %v1096
        %v1098 = vcombine.low %v1089, %v1097
        %v1100 = vunpack.c.l.s4 1934713408
        %v1101 = vunpack.c.0.s8 %v1100
        %v1102 = vlaneseq
        %v1103 = vshrl.u32 %v1102, 7
        %v1104 = vsub.s32 %v1101, %v1103
        %v1105 = vrot.slane %v1098, %v1104
        %v1106 = vcombine.high %v1105, 0
        %v1107 = vcombine.low %v1072, %v1079
        %v1109 = vunpack.c.l.s4 1983009808
        %v1110 = vunpack.c.0.s8 %v1109
        %v1111 = vlaneseq
        %v1112 = vshrl.u32 %v1111, 7
        %v1113 = vsub.s32 %v1110, %v1112
        %v1114 = vrot.slane %v1107, %v1113
        %v1115 = vcombine.low %v1080, %v1081
        %v1117 = vunpack.c.l.s4 1983009808
        %v1118 = vunpack.c.0.s8 %v1117
        %v1119 = vlaneseq
        %v1120 = vshrl.u32 %v1119, 7
        %v1121 = vsub.s32 %v1118, %v1120
        %v1122 = vrot.slane %v1115, %v1121
        %v1123 = vcombine.low %v1114, %v1122
        %v1125 = vunpack.c.l.s4 1934713408
        %v1126 = vunpack.c.0.s8 %v1125
        %v1127 = vlaneseq
        %v1128 = vshrl.u32 %v1127, 7
        %v1129 = vsub.s32 %v1126, %v1128
        %v1130 = vrot.slane %v1123, %v1129
        %v1131 = vcombine.high %v1130, 0
        %v1134 = vpack.i.b16 %v1130, %v1105
        %v1135 = vshrl.u32 %v1105, 16
        %v1136 = vshrl.u32 %v1130, 16
        %v1137 = vpack.i.b16 %v1136, %v1135
        %v1140 = vpack.i.b16 %v1131, %v1106
        %v1141 = vshrl.u32 %v1106, 16
        %v1142 = vshrl.u32 %v1131, 16
        %v1143 = vpack.i.b16 %v1142, %v1141
        %s1144 = scalar_lea.vmem [#allocation2], 4
        %v1145 = vld [vmem:[%s1144] sm:$0xf]
        %1147 = vrot.lane.b32.xlu0 %v1145, 120
        %v1148 = vpop.permute.xlu0 %1147
        %1149 = vrot.lane.b32.xlu0 %v1145, 112
        %v1150 = vpop.permute.xlu0 %1149
        %1151 = vrot.lane.b32.xlu0 %v1145, 104
        %v1152 = vpop.permute.xlu0 %1151
        %v1155 = vpack.i.b16 %v1148, %v1145
        %v1156 = vshrl.u32 %v1145, 16
        %v1157 = vshrl.u32 %v1148, 16
        %v1158 = vpack.i.b16 %v1157, %v1156
        %v1161 = vpack.i.b16 %v1152, %v1150
        %v1162 = vshrl.u32 %v1150, 16
        %v1163 = vshrl.u32 %v1152, 16
        %v1164 = vpack.i.b16 %v1163, %v1162
        %v1167 = vunpack.c.l.s4 1983009808
        %v1168 = vunpack.c.0.s8 %v1167
        %v1169 = vlaneseq
        %v1170 = vshrl.u32 %v1169, 7
        %v1171 = vsub.s32 %v1168, %v1170
        %v1172 = vrot.slane %v1155, %v1171
        %v1175 = vunpack.c.l.s4 1983009808
        %v1176 = vunpack.c.0.s8 %v1175
        %v1177 = vlaneseq
        %v1178 = vshrl.u32 %v1177, 7
        %v1179 = vsub.s32 %v1176, %v1178
        %v1180 = vrot.slane %v1161, %v1179
        %v1181 = vcombine.low %v1172, %v1180
        %v1182 = vcombine.high %v1172, %v1180
        %v1184 = vunpack.c.l.s4 1934713408
        %v1185 = vunpack.c.0.s8 %v1184
        %v1186 = vlaneseq
        %v1187 = vshrl.u32 %v1186, 7
        %v1188 = vsub.s32 %v1185, %v1187
        %v1189 = vrot.slane %v1181, %v1188
        %v1191 = vunpack.c.l.s4 1934713408
        %v1192 = vunpack.c.0.s8 %v1191
        %v1193 = vlaneseq
        %v1194 = vshrl.u32 %v1193, 7
        %v1195 = vsub.s32 %v1192, %v1194
        %v1196 = vrot.slane %v1182, %v1195
        %v1197 = vcombine.high %v1189, 0
        %v1198 = vcombine.high %v1196, 0
        %v1201 = vunpack.c.l.s4 1983009808
        %v1202 = vunpack.c.0.s8 %v1201
        %v1203 = vlaneseq
        %v1204 = vshrl.u32 %v1203, 7
        %v1205 = vsub.s32 %v1202, %v1204
        %v1206 = vrot.slane %v1158, %v1205
        %v1209 = vunpack.c.l.s4 1983009808
        %v1210 = vunpack.c.0.s8 %v1209
        %v1211 = vlaneseq
        %v1212 = vshrl.u32 %v1211, 7
        %v1213 = vsub.s32 %v1210, %v1212
        %v1214 = vrot.slane %v1164, %v1213
        %v1215 = vcombine.low %v1206, %v1214
        %v1216 = vcombine.high %v1206, %v1214
        %v1218 = vunpack.c.l.s4 1934713408
        %v1219 = vunpack.c.0.s8 %v1218
        %v1220 = vlaneseq
        %v1221 = vshrl.u32 %v1220, 7
        %v1222 = vsub.s32 %v1219, %v1221
        %v1223 = vrot.slane %v1215, %v1222
        %v1225 = vunpack.c.l.s4 1934713408
        %v1226 = vunpack.c.0.s8 %v1225
        %v1227 = vlaneseq
        %v1228 = vshrl.u32 %v1227, 7
        %v1229 = vsub.s32 %v1226, %v1228
        %v1230 = vrot.slane %v1216, %v1229
        %v1231 = vcombine.high %v1223, 0
        %v1232 = vcombine.high %v1230, 0
        %v1233 = vcombine.low %v1189, %v1196
        %v1235 = vunpack.c.l.s4 1983009808
        %v1236 = vunpack.c.0.s8 %v1235
        %v1237 = vlaneseq
        %v1238 = vshrl.u32 %v1237, 7
        %v1239 = vsub.s32 %v1236, %v1238
        %v1240 = vrot.slane %v1233, %v1239
        %v1241 = vcombine.low %v1197, %v1198
        %v1243 = vunpack.c.l.s4 1983009808
        %v1244 = vunpack.c.0.s8 %v1243
        %v1245 = vlaneseq
        %v1246 = vshrl.u32 %v1245, 7
        %v1247 = vsub.s32 %v1244, %v1246
        %v1248 = vrot.slane %v1241, %v1247
        %v1249 = vcombine.low %v1240, %v1248
        %v1251 = vunpack.c.l.s4 1934713408
        %v1252 = vunpack.c.0.s8 %v1251
        %v1253 = vlaneseq
        %v1254 = vshrl.u32 %v1253, 7
        %v1255 = vsub.s32 %v1252, %v1254
        %v1256 = vrot.slane %v1249, %v1255
        %v1257 = vcombine.high %v1256, 0
        %v1258 = vcombine.low %v1223, %v1230
        %v1260 = vunpack.c.l.s4 1983009808
        %v1261 = vunpack.c.0.s8 %v1260
        %v1262 = vlaneseq
        %v1263 = vshrl.u32 %v1262, 7
        %v1264 = vsub.s32 %v1261, %v1263
        %v1265 = vrot.slane %v1258, %v1264
        %v1266 = vcombine.low %v1231, %v1232
        %v1268 = vunpack.c.l.s4 1983009808
        %v1269 = vunpack.c.0.s8 %v1268
        %v1270 = vlaneseq
        %v1271 = vshrl.u32 %v1270, 7
        %v1272 = vsub.s32 %v1269, %v1271
        %v1273 = vrot.slane %v1266, %v1272
        %v1274 = vcombine.low %v1265, %v1273
        %v1276 = vunpack.c.l.s4 1934713408
        %v1277 = vunpack.c.0.s8 %v1276
        %v1278 = vlaneseq
        %v1279 = vshrl.u32 %v1278, 7
        %v1280 = vsub.s32 %v1277, %v1279
        %v1281 = vrot.slane %v1274, %v1280
        %v1282 = vcombine.high %v1281, 0
        %v1285 = vpack.i.b16 %v1281, %v1256
        %v1286 = vshrl.u32 %v1256, 16
        %v1287 = vshrl.u32 %v1281, 16
        %v1288 = vpack.i.b16 %v1287, %v1286
        %v1291 = vpack.i.b16 %v1282, %v1257
        %v1292 = vshrl.u32 %v1257, 16
        %v1293 = vshrl.u32 %v1282, 16
        %v1294 = vpack.i.b16 %v1293, %v1292
        %v1295 = vpack.c.bf16 %v990, %v990
        %v1296 = vpack.c.bf16 %v991, %v991
        %v1297 = vpack.c.bf16 %v992, %v992
        %v1298 = vpack.c.bf16 %v993, %v993
        %vm1299 = vcmask 64512
        %v1301 = vsel %vm1299, %v1295, 0
        %v1304 = vsel %vm1299, %v1134, 0
        %1306 = vmatprep.subr.bf16.mxu0 0
        %1307 = vmatpush1.bf16.xpose.msra.mxu0 %v1304
        %1308 = vmatprep.subr.bf16.mxu0 0
        %1309 = vmatpush1.bf16.xpose.msra.mxu0 0
        %1310 = vmatprep.subr.bf16.mxu0 0
        %1311 = vmatpush1.bf16.xpose.msra.mxu0 0
        %1312 = vmatprep.subr.bf16.mxu0 0
        %1313 = vmatpush1.bf16.xpose.msra.mxu0 0
        %1314 = vmatprep.subr.bf16.mxu0 0
        %1315 = vmatpush1.bf16.xpose.msra.mxu0 0
        %1316 = vmatprep.subr.bf16.mxu0 0
        %1317 = vmatpush1.bf16.xpose.msra.mxu0 0
        %1318 = vmatprep.subr.bf16.mxu0 0
        %1319 = vmatpush1.bf16.xpose.msra.mxu0 0
        %1320 = vmatprep.subr.bf16.mxu0 0
        %1321 = vmatpush1.bf16.xpose.msra.mxu0 0
        %1322 = vmatprep.subr.bf16.mxu0 0
        %1323 = vmatpush1.bf16.xpose.msra.mxu0 0
        %1324 = vmatprep.subr.bf16.mxu0 0
        %1325 = vmatpush1.bf16.xpose.msra.mxu0 0
        %1326 = vmatprep.subr.bf16.mxu0 0
        %1327 = vmatpush1.bf16.xpose.msra.mxu0 0
        %1328 = vmatprep.subr.bf16.mxu0 0
        %1329 = vmatpush1.bf16.xpose.msra.mxu0 0
        %1330 = vmatprep.subr.bf16.mxu0 0
        %1331 = vmatpush1.bf16.xpose.msra.mxu0 0
        %1332 = vmatprep.subr.bf16.mxu0 0
        %1333 = vmatpush1.bf16.xpose.msra.mxu0 0
        %1334 = vmatprep.subr.bf16.mxu0 0
        %1335 = vmatpush1.bf16.xpose.msra.mxu0 0
        %1336 = vmatprep.subr.bf16.mxu0 0
        %1337 = vmatpush1.bf16.xpose.msra.mxu0 0
        %1338 = vmatprep.mubr.bf16.mxu0 0
        %1339 = vmatmul.mubr.bf16.gmra.mrb[0].mxu0 %v1301
        %v1340 = vpop.f32.mrb[0].mxu0
        %v1341 = vadd.f32 0.0, %v1340
        %v1342 = vpop.f32.mrb[0].mxu0
        %v1343 = vpop.f32.mrb[0].mxu0
        %v1344 = vpop.f32.mrb[0].mxu0
        %1345 = vdwg.mxu0
        %v1347 = vsel %vm1299, %v1296, 0
        %v1350 = vsel %vm1299, %v1137, 0
        %1352 = vmatprep.subr.bf16.mxu0 0
        %1353 = vmatpush1.bf16.xpose.msra.mxu0 %v1350
        %1354 = vmatprep.subr.bf16.mxu0 0
        %1355 = vmatpush1.bf16.xpose.msra.mxu0 0
        %1356 = vmatprep.subr.bf16.mxu0 0
        %1357 = vmatpush1.bf16.xpose.msra.mxu0 0
        %1358 = vmatprep.subr.bf16.mxu0 0
        %1359 = vmatpush1.bf16.xpose.msra.mxu0 0
        %1360 = vmatprep.subr.bf16.mxu0 0
        %1361 = vmatpush1.bf16.xpose.msra.mxu0 0
        %1362 = vmatprep.subr.bf16.mxu0 0
        %1363 = vmatpush1.bf16.xpose.msra.mxu0 0
        %1364 = vmatprep.subr.bf16.mxu0 0
        %1365 = vmatpush1.bf16.xpose.msra.mxu0 0
        %1366 = vmatprep.subr.bf16.mxu0 0
        %1367 = vmatpush1.bf16.xpose.msra.mxu0 0
        %1368 = vmatprep.subr.bf16.mxu0 0
        %1369 = vmatpush1.bf16.xpose.msra.mxu0 0
        %1370 = vmatprep.subr.bf16.mxu0 0
        %1371 = vmatpush1.bf16.xpose.msra.mxu0 0
        %1372 = vmatprep.subr.bf16.mxu0 0
        %1373 = vmatpush1.bf16.xpose.msra.mxu0 0
        %1374 = vmatprep.subr.bf16.mxu0 0
        %1375 = vmatpush1.bf16.xpose.msra.mxu0 0
        %1376 = vmatprep.subr.bf16.mxu0 0
        %1377 = vmatpush1.bf16.xpose.msra.mxu0 0
        %1378 = vmatprep.subr.bf16.mxu0 0
        %1379 = vmatpush1.bf16.xpose.msra.mxu0 0
        %1380 = vmatprep.subr.bf16.mxu0 0
        %1381 = vmatpush1.bf16.xpose.msra.mxu0 0
        %1382 = vmatprep.subr.bf16.mxu0 0
        %1383 = vmatpush1.bf16.xpose.msra.mxu0 0
        %1384 = vmatprep.mubr.bf16.mxu0 0
        %1385 = vmatmul.mubr.bf16.gmra.mrb[0].mxu0 %v1347
        %v1386 = vpop.f32.mrb[0].mxu0
        %v1387 = vadd.f32 0.0, %v1386
        %v1388 = vpop.f32.mrb[0].mxu0
        %v1389 = vpop.f32.mrb[0].mxu0
        %v1390 = vpop.f32.mrb[0].mxu0
        %1391 = vdwg.mxu0
        %v1393 = vsel %vm1299, %v1297, 0
        %v1396 = vsel %vm1299, %v1140, 0
        %1398 = vmatprep.subr.bf16.mxu0 0
        %1399 = vmatpush1.bf16.xpose.msra.mxu0 %v1396
        %1400 = vmatprep.subr.bf16.mxu0 0
        %1401 = vmatpush1.bf16.xpose.msra.mxu0 0
        %1402 = vmatprep.subr.bf16.mxu0 0
        %1403 = vmatpush1.bf16.xpose.msra.mxu0 0
        %1404 = vmatprep.subr.bf16.mxu0 0
        %1405 = vmatpush1.bf16.xpose.msra.mxu0 0
        %1406 = vmatprep.subr.bf16.mxu0 0
        %1407 = vmatpush1.bf16.xpose.msra.mxu0 0
        %1408 = vmatprep.subr.bf16.mxu0 0
        %1409 = vmatpush1.bf16.xpose.msra.mxu0 0
        %1410 = vmatprep.subr.bf16.mxu0 0
        %1411 = vmatpush1.bf16.xpose.msra.mxu0 0
        %1412 = vmatprep.subr.bf16.mxu0 0
        %1413 = vmatpush1.bf16.xpose.msra.mxu0 0
        %1414 = vmatprep.subr.bf16.mxu0 0
        %1415 = vmatpush1.bf16.xpose.msra.mxu0 0
        %1416 = vmatprep.subr.bf16.mxu0 0
        %1417 = vmatpush1.bf16.xpose.msra.mxu0 0
        %1418 = vmatprep.subr.bf16.mxu0 0
        %1419 = vmatpush1.bf16.xpose.msra.mxu0 0
        %1420 = vmatprep.subr.bf16.mxu0 0
        %1421 = vmatpush1.bf16.xpose.msra.mxu0 0
        %1422 = vmatprep.subr.bf16.mxu0 0
        %1423 = vmatpush1.bf16.xpose.msra.mxu0 0
        %1424 = vmatprep.subr.bf16.mxu0 0
        %1425 = vmatpush1.bf16.xpose.msra.mxu0 0
        %1426 = vmatprep.subr.bf16.mxu0 0
        %1427 = vmatpush1.bf16.xpose.msra.mxu0 0
        %1428 = vmatprep.subr.bf16.mxu0 0
        %1429 = vmatpush1.bf16.xpose.msra.mxu0 0
        %1430 = vmatprep.mubr.bf16.mxu0 0
        %1431 = vmatmul.mubr.bf16.gmra.mrb[0].mxu0 %v1393
        %v1432 = vpop.f32.mrb[0].mxu0
        %v1433 = vadd.f32 0.0, %v1432
        %v1434 = vpop.f32.mrb[0].mxu0
        %v1435 = vpop.f32.mrb[0].mxu0
        %v1436 = vpop.f32.mrb[0].mxu0
        %1437 = vdwg.mxu0
        %v1439 = vsel %vm1299, %v1298, 0
        %v1442 = vsel %vm1299, %v1143, 0
        %1444 = vmatprep.subr.bf16.mxu0 0
        %1445 = vmatpush1.bf16.xpose.msra.mxu0 %v1442
        %1446 = vmatprep.subr.bf16.mxu0 0
        %1447 = vmatpush1.bf16.xpose.msra.mxu0 0
        %1448 = vmatprep.subr.bf16.mxu0 0
        %1449 = vmatpush1.bf16.xpose.msra.mxu0 0
        %1450 = vmatprep.subr.bf16.mxu0 0
        %1451 = vmatpush1.bf16.xpose.msra.mxu0 0
        %1452 = vmatprep.subr.bf16.mxu0 0
        %1453 = vmatpush1.bf16.xpose.msra.mxu0 0
        %1454 = vmatprep.subr.bf16.mxu0 0
        %1455 = vmatpush1.bf16.xpose.msra.mxu0 0
        %1456 = vmatprep.subr.bf16.mxu0 0
        %1457 = vmatpush1.bf16.xpose.msra.mxu0 0
        %1458 = vmatprep.subr.bf16.mxu0 0
        %1459 = vmatpush1.bf16.xpose.msra.mxu0 0
        %1460 = vmatprep.subr.bf16.mxu0 0
        %1461 = vmatpush1.bf16.xpose.msra.mxu0 0
        %1462 = vmatprep.subr.bf16.mxu0 0
        %1463 = vmatpush1.bf16.xpose.msra.mxu0 0
        %1464 = vmatprep.subr.bf16.mxu0 0
        %1465 = vmatpush1.bf16.xpose.msra.mxu0 0
        %1466 = vmatprep.subr.bf16.mxu0 0
        %1467 = vmatpush1.bf16.xpose.msra.mxu0 0
        %1468 = vmatprep.subr.bf16.mxu0 0
        %1469 = vmatpush1.bf16.xpose.msra.mxu0 0
        %1470 = vmatprep.subr.bf16.mxu0 0
        %1471 = vmatpush1.bf16.xpose.msra.mxu0 0
        %1472 = vmatprep.subr.bf16.mxu0 0
        %1473 = vmatpush1.bf16.xpose.msra.mxu0 0
        %1474 = vmatprep.subr.bf16.mxu0 0
        %1475 = vmatpush1.bf16.xpose.msra.mxu0 0
        %1476 = vmatprep.mubr.bf16.mxu0 0
        %1477 = vmatmul.mubr.bf16.gmra.mrb[0].mxu0 %v1439
        %v1478 = vpop.f32.mrb[0].mxu0
        %v1479 = vadd.f32 0.0, %v1478
        %v1480 = vpop.f32.mrb[0].mxu0
        %v1481 = vpop.f32.mrb[0].mxu0
        %v1482 = vpop.f32.mrb[0].mxu0
        %1483 = vdwg.mxu0
        %v1484 = vld [vmem:[%s544] sm:$0x3]
        %v1485 = vld [vmem:[%s544 + $0x2] sm:$0x3]
        %v1486 = vld [vmem:[%s544 + $0x4] sm:$0x3]
        %v1487 = vld [vmem:[%s544 + $0x6] sm:$0x3]
        %vm1488 = vnez %v1484
        %vm1489 = vnez %v1485
        %vm1490 = vnez %v1486
        %vm1491 = vnez %v1487
        %v1492 = vsel %vm1488, 16843009, 0
        %v1493 = vsel %vm1489, 16843009, 0
        %v1494 = vsel %vm1490, 16843009, 0
        %v1495 = vsel %vm1491, 16843009, 0
        %v1496 = vunpack.c.0.s8 %v1492
        %v1497 = vunpack.c.0.s8 %v1493
        %v1498 = vunpack.c.0.s8 %v1494
        %v1499 = vunpack.c.0.s8 %v1495
        %vm1500 = vcmp.ne.s32.totalorder %v1496, 0
        %vm1501 = vcmp.ne.s32.totalorder %v1497, 0
        %vm1502 = vcmp.ne.s32.totalorder %v1498, 0
        %vm1503 = vcmp.ne.s32.totalorder %v1499, 0
        %v1504 = vsel %vm1500, -1e+09, %v1341
        %v1505 = vsel %vm1501, -1e+09, %v1387
        %v1506 = vsel %vm1502, -1e+09, %v1433
        %v1507 = vsel %vm1503, -1e+09, %v1479
        %v1508 = vsel %vm1299, %v1504, -inf
        %1509 = vmax.xlane.f32.xlu0 %v1508
        %v1510 = vpop.xlane.xlu0 %1509
        %v1511 = vsel %vm1299, %v1505, -inf
        %1512 = vmax.xlane.f32.xlu0 %v1511
        %v1513 = vpop.xlane.xlu0 %1512
        %v1514 = vsel %vm1299, %v1506, -inf
        %1515 = vmax.xlane.f32.xlu0 %v1514
        %v1516 = vpop.xlane.xlu0 %1515
        %v1517 = vsel %vm1299, %v1507, -inf
        %1518 = vmax.xlane.f32.xlu0 %v1517
        %v1519 = vpop.xlane.xlu0 %1518
        %v1520 = vsub.f32 %v1504, %v1510
        %v1521 = vsub.f32 %v1505, %v1513
        %v1522 = vsub.f32 %v1506, %v1516
        %v1523 = vsub.f32 %v1507, %v1519
        %v1524 = vmul.f32 %v1520, 1.442695
        %v1525 = vpow.pop %v1524
        %v1526 = vmul.f32 %v1521, 1.442695
        %v1527 = vpow.pop %v1526
        %v1528 = vmul.f32 %v1522, 1.442695
        %v1529 = vpow.pop %v1528
        %v1530 = vmul.f32 %v1523, 1.442695
        %v1531 = vpow.pop %v1530
        %v1532 = vsel %vm1299, %v1525, 0.0
        %1533 = vadd.xlane.f32.xlu0 %v1532
        %v1534 = vpop.xlane.xlu0 %1533
        %v1535 = vsel %vm1299, %v1527, 0.0
        %1536 = vadd.xlane.f32.xlu0 %v1535
        %v1537 = vpop.xlane.xlu0 %1536
        %v1538 = vsel %vm1299, %v1529, 0.0
        %1539 = vadd.xlane.f32.xlu0 %v1538
        %v1540 = vpop.xlane.xlu0 %1539
        %v1541 = vsel %vm1299, %v1531, 0.0
        %1542 = vadd.xlane.f32.xlu0 %v1541
        %v1543 = vpop.xlane.xlu0 %1542
        %v1544 = vrcp.pop %v1534
        %v1545 = vmul.f32 %v1525, %v1544
        %v1546 = vrcp.pop %v1537
        %v1547 = vmul.f32 %v1527, %v1546
        %v1548 = vrcp.pop %v1540
        %v1549 = vmul.f32 %v1529, %v1548
        %v1550 = vrcp.pop %v1543
        %v1551 = vmul.f32 %v1531, %v1550
        %v1552 = vpack.c.bf16 %v1545, %v1545
        %v1553 = vpack.c.bf16 %v1547, %v1547
        %v1554 = vpack.c.bf16 %v1549, %v1549
        %v1555 = vpack.c.bf16 %v1551, %v1551
        %vm1556 = vcmask 60416
        %1557 = vst.msk [vmem:[%s626] sm:$0xf] %vm1556, %v1552
        %1558 = vst.msk [vmem:[%s626 + $0x4] sm:$0xf] %vm1556, %v1553
        %1559 = vst.msk [vmem:[%s626 + $0x8] sm:$0xf] %vm1556, %v1554
        %1560 = vst.msk [vmem:[%s626 + $0xc] sm:$0xf] %vm1556, %v1555
        %v1562 = vsel %vm1299, %v1552, 0
        %vm1564 = vcmask 1043456
        %v1566 = vsel %vm1564, %v1285, 0
        %1568 = vmatprep.subr.bf16.mxu0 0
        %1569 = vmatpush1.bf16.msra.mxu0 %v1566
        %1570 = vmatprep.subr.bf16.mxu0 0
        %1571 = vmatpush1.bf16.msra.mxu0 0
        %1572 = vmatprep.subr.bf16.mxu0 0
        %1573 = vmatpush1.bf16.msra.mxu0 0
        %1574 = vmatprep.subr.bf16.mxu0 0
        %1575 = vmatpush1.bf16.msra.mxu0 0
        %1576 = vmatprep.subr.bf16.mxu0 0
        %1577 = vmatpush1.bf16.msra.mxu0 0
        %1578 = vmatprep.subr.bf16.mxu0 0
        %1579 = vmatpush1.bf16.msra.mxu0 0
        %1580 = vmatprep.subr.bf16.mxu0 0
        %1581 = vmatpush1.bf16.msra.mxu0 0
        %1582 = vmatprep.subr.bf16.mxu0 0
        %1583 = vmatpush1.bf16.msra.mxu0 0
        %1584 = vmatprep.subr.bf16.mxu0 0
        %1585 = vmatpush1.bf16.msra.mxu0 0
        %1586 = vmatprep.subr.bf16.mxu0 0
        %1587 = vmatpush1.bf16.msra.mxu0 0
        %1588 = vmatprep.subr.bf16.mxu0 0
        %1589 = vmatpush1.bf16.msra.mxu0 0
        %1590 = vmatprep.subr.bf16.mxu0 0
        %1591 = vmatpush1.bf16.msra.mxu0 0
        %1592 = vmatprep.subr.bf16.mxu0 0
        %1593 = vmatpush1.bf16.msra.mxu0 0
        %1594 = vmatprep.subr.bf16.mxu0 0
        %1595 = vmatpush1.bf16.msra.mxu0 0
        %1596 = vmatprep.subr.bf16.mxu0 0
        %1597 = vmatpush1.bf16.msra.mxu0 0
        %1598 = vmatprep.subr.bf16.mxu0 0
        %1599 = vmatpush1.bf16.msra.mxu0 0
        %1600 = vmatprep.mubr.bf16.mxu0 0
        %1601 = vmatmul.mubr.bf16.gmra.mrb[0].mxu0 %v1562
        %v1602 = vpop.f32.mrb[0].mxu0
        %v1603 = vadd.f32 0.0, %v1602
        %v1604 = vpop.f32.mrb[0].mxu0
        %v1605 = vpop.f32.mrb[0].mxu0
        %v1606 = vpop.f32.mrb[0].mxu0
        %1607 = vdwg.mxu0
        %v1609 = vsel %vm1299, %v1553, 0
        %v1612 = vsel %vm1564, %v1288, 0
        %1614 = vmatprep.subr.bf16.mxu0 0
        %1615 = vmatpush1.bf16.msra.mxu0 %v1612
        %1616 = vmatprep.subr.bf16.mxu0 0
        %1617 = vmatpush1.bf16.msra.mxu0 0
        %1618 = vmatprep.subr.bf16.mxu0 0
        %1619 = vmatpush1.bf16.msra.mxu0 0
        %1620 = vmatprep.subr.bf16.mxu0 0
        %1621 = vmatpush1.bf16.msra.mxu0 0
        %1622 = vmatprep.subr.bf16.mxu0 0
        %1623 = vmatpush1.bf16.msra.mxu0 0
        %1624 = vmatprep.subr.bf16.mxu0 0
        %1625 = vmatpush1.bf16.msra.mxu0 0
        %1626 = vmatprep.subr.bf16.mxu0 0
        %1627 = vmatpush1.bf16.msra.mxu0 0
        %1628 = vmatprep.subr.bf16.mxu0 0
        %1629 = vmatpush1.bf16.msra.mxu0 0
        %1630 = vmatprep.subr.bf16.mxu0 0
        %1631 = vmatpush1.bf16.msra.mxu0 0
        %1632 = vmatprep.subr.bf16.mxu0 0
        %1633 = vmatpush1.bf16.msra.mxu0 0
        %1634 = vmatprep.subr.bf16.mxu0 0
        %1635 = vmatpush1.bf16.msra.mxu0 0
        %1636 = vmatprep.subr.bf16.mxu0 0
        %1637 = vmatpush1.bf16.msra.mxu0 0
        %1638 = vmatprep.subr.bf16.mxu0 0
        %1639 = vmatpush1.bf16.msra.mxu0 0
        %1640 = vmatprep.subr.bf16.mxu0 0
        %1641 = vmatpush1.bf16.msra.mxu0 0
        %1642 = vmatprep.subr.bf16.mxu0 0
        %1643 = vmatpush1.bf16.msra.mxu0 0
        %1644 = vmatprep.subr.bf16.mxu0 0
        %1645 = vmatpush1.bf16.msra.mxu0 0
        %1646 = vmatprep.mubr.bf16.mxu0 0
        %1647 = vmatmul.mubr.bf16.gmra.mrb[0].mxu0 %v1609
        %v1648 = vpop.f32.mrb[0].mxu0
        %v1649 = vadd.f32 0.0, %v1648
        %v1650 = vpop.f32.mrb[0].mxu0
        %v1651 = vpop.f32.mrb[0].mxu0
        %v1652 = vpop.f32.mrb[0].mxu0
        %1653 = vdwg.mxu0
        %v1655 = vsel %vm1299, %v1554, 0
        %v1658 = vsel %vm1564, %v1291, 0
        %1660 = vmatprep.subr.bf16.mxu0 0
        %1661 = vmatpush1.bf16.msra.mxu0 %v1658
        %1662 = vmatprep.subr.bf16.mxu0 0
        %1663 = vmatpush1.bf16.msra.mxu0 0
        %1664 = vmatprep.subr.bf16.mxu0 0
        %1665 = vmatpush1.bf16.msra.mxu0 0
        %1666 = vmatprep.subr.bf16.mxu0 0
        %1667 = vmatpush1.bf16.msra.mxu0 0
        %1668 = vmatprep.subr.bf16.mxu0 0
        %1669 = vmatpush1.bf16.msra.mxu0 0
        %1670 = vmatprep.subr.bf16.mxu0 0
        %1671 = vmatpush1.bf16.msra.mxu0 0
        %1672 = vmatprep.subr.bf16.mxu0 0
        %1673 = vmatpush1.bf16.msra.mxu0 0
        %1674 = vmatprep.subr.bf16.mxu0 0
        %1675 = vmatpush1.bf16.msra.mxu0 0
        %1676 = vmatprep.subr.bf16.mxu0 0
        %1677 = vmatpush1.bf16.msra.mxu0 0
        %1678 = vmatprep.subr.bf16.mxu0 0
        %1679 = vmatpush1.bf16.msra.mxu0 0
        %1680 = vmatprep.subr.bf16.mxu0 0
        %1681 = vmatpush1.bf16.msra.mxu0 0
        %1682 = vmatprep.subr.bf16.mxu0 0
        %1683 = vmatpush1.bf16.msra.mxu0 0
        %1684 = vmatprep.subr.bf16.mxu0 0
        %1685 = vmatpush1.bf16.msra.mxu0 0
        %1686 = vmatprep.subr.bf16.mxu0 0
        %1687 = vmatpush1.bf16.msra.mxu0 0
        %1688 = vmatprep.subr.bf16.mxu0 0
        %1689 = vmatpush1.bf16.msra.mxu0 0
        %1690 = vmatprep.subr.bf16.mxu0 0
        %1691 = vmatpush1.bf16.msra.mxu0 0
        %1692 = vmatprep.mubr.bf16.mxu0 0
        %1693 = vmatmul.mubr.bf16.gmra.mrb[0].mxu0 %v1655
        %v1694 = vpop.f32.mrb[0].mxu0
        %v1695 = vadd.f32 0.0, %v1694
        %v1696 = vpop.f32.mrb[0].mxu0
        %v1697 = vpop.f32.mrb[0].mxu0
        %v1698 = vpop.f32.mrb[0].mxu0
        %1699 = vdwg.mxu0
        %v1701 = vsel %vm1299, %v1555, 0
        %v1704 = vsel %vm1564, %v1294, 0
        %1706 = vmatprep.subr.bf16.mxu0 0
        %1707 = vmatpush1.bf16.msra.mxu0 %v1704
        %1708 = vmatprep.subr.bf16.mxu0 0
        %1709 = vmatpush1.bf16.msra.mxu0 0
        %1710 = vmatprep.subr.bf16.mxu0 0
        %1711 = vmatpush1.bf16.msra.mxu0 0
        %1712 = vmatprep.subr.bf16.mxu0 0
        %1713 = vmatpush1.bf16.msra.mxu0 0
        %1714 = vmatprep.subr.bf16.mxu0 0
        %1715 = vmatpush1.bf16.msra.mxu0 0
        %1716 = vmatprep.subr.bf16.mxu0 0
        %1717 = vmatpush1.bf16.msra.mxu0 0
        %1718 = vmatprep.subr.bf16.mxu0 0
        %1719 = vmatpush1.bf16.msra.mxu0 0
        %1720 = vmatprep.subr.bf16.mxu0 0
        %1721 = vmatpush1.bf16.msra.mxu0 0
        %1722 = vmatprep.subr.bf16.mxu0 0
        %1723 = vmatpush1.bf16.msra.mxu0 0
        %1724 = vmatprep.subr.bf16.mxu0 0
        %1725 = vmatpush1.bf16.msra.mxu0 0
        %1726 = vmatprep.subr.bf16.mxu0 0
        %1727 = vmatpush1.bf16.msra.mxu0 0
        %1728 = vmatprep.subr.bf16.mxu0 0
        %1729 = vmatpush1.bf16.msra.mxu0 0
        %1730 = vmatprep.subr.bf16.mxu0 0
        %1731 = vmatpush1.bf16.msra.mxu0 0
        %1732 = vmatprep.subr.bf16.mxu0 0
        %1733 = vmatpush1.bf16.msra.mxu0 0
        %1734 = vmatprep.subr.bf16.mxu0 0
        %1735 = vmatpush1.bf16.msra.mxu0 0
        %1736 = vmatprep.subr.bf16.mxu0 0
        %1737 = vmatpush1.bf16.msra.mxu0 0
        %1738 = vmatprep.mubr.bf16.mxu0 0
        %1739 = vmatmul.mubr.bf16.gmra.mrb[0].mxu0 %v1701
        %v1740 = vpop.f32.mrb[0].mxu0
        %v1741 = vadd.f32 0.0, %v1740
        %v1742 = vpop.f32.mrb[0].mxu0
        %v1743 = vpop.f32.mrb[0].mxu0
        %v1744 = vpop.f32.mrb[0].mxu0
        %1745 = vdwg.mxu0
        %v1746 = vcombine.low %v1603, %v1695
        %v1747 = vcombine.high %v1603, %v1695
        %v1749 = vunpack.c.l.s4 1983009808
        %v1750 = vunpack.c.0.s8 %v1749
        %v1751 = vlaneseq
        %v1752 = vshrl.u32 %v1751, 7
        %v1753 = vsub.s32 %v1750, %v1752
        %v1754 = vrot.slane %v1746, %v1753
        %v1756 = vunpack.c.l.s4 1983009808
        %v1757 = vunpack.c.0.s8 %v1756
        %v1758 = vlaneseq
        %v1759 = vshrl.u32 %v1758, 7
        %v1760 = vsub.s32 %v1757, %v1759
        %v1761 = vrot.slane %v1747, %v1760
        %v1762 = vcombine.low %v1649, %v1741
        %v1763 = vcombine.high %v1649, %v1741
        %v1765 = vunpack.c.l.s4 1983009808
        %v1766 = vunpack.c.0.s8 %v1765
        %v1767 = vlaneseq
        %v1768 = vshrl.u32 %v1767, 7
        %v1769 = vsub.s32 %v1766, %v1768
        %v1770 = vrot.slane %v1762, %v1769
        %v1772 = vunpack.c.l.s4 1983009808
        %v1773 = vunpack.c.0.s8 %v1772
        %v1774 = vlaneseq
        %v1775 = vshrl.u32 %v1774, 7
        %v1776 = vsub.s32 %v1773, %v1775
        %v1777 = vrot.slane %v1763, %v1776
        %v1778 = vcombine.low %v1754, %v1770
        %v1779 = vcombine.high %v1754, %v1770
        %v1781 = vunpack.c.l.s4 1934713408
        %v1782 = vunpack.c.0.s8 %v1781
        %v1783 = vlaneseq
        %v1784 = vshrl.u32 %v1783, 7
        %v1785 = vsub.s32 %v1782, %v1784
        %v1786 = vrot.slane %v1778, %v1785
        %v1788 = vunpack.c.l.s4 1934713408
        %v1789 = vunpack.c.0.s8 %v1788
        %v1790 = vlaneseq
        %v1791 = vshrl.u32 %v1790, 7
        %v1792 = vsub.s32 %v1789, %v1791
        %v1793 = vrot.slane %v1779, %v1792
        %v1794 = vcombine.low %v1761, %v1777
        %v1795 = vcombine.high %v1761, %v1777
        %v1797 = vunpack.c.l.s4 1934713408
        %v1798 = vunpack.c.0.s8 %v1797
        %v1799 = vlaneseq
        %v1800 = vshrl.u32 %v1799, 7
        %v1801 = vsub.s32 %v1798, %v1800
        %v1802 = vrot.slane %v1794, %v1801
        %v1804 = vunpack.c.l.s4 1934713408
        %v1805 = vunpack.c.0.s8 %v1804
        %v1806 = vlaneseq
        %v1807 = vshrl.u32 %v1806, 7
        %v1808 = vsub.s32 %v1805, %v1807
        %v1809 = vrot.slane %v1795, %v1808
        %v1810 = vcombine.high %v1786, 0.0
        %v1811 = vcombine.high %v1793, 0.0
        %v1812 = vcombine.high %v1802, 0.0
        %v1813 = vcombine.high %v1809, 0.0
        %v1814 = vcombine.low %v1786, %v1793
        %v1816 = vunpack.c.l.s4 1983009808
        %v1817 = vunpack.c.0.s8 %v1816
        %v1818 = vlaneseq
        %v1819 = vshrl.u32 %v1818, 7
        %v1820 = vsub.s32 %v1817, %v1819
        %v1821 = vrot.slane %v1814, %v1820
        %v1822 = vcombine.low %v1810, %v1811
        %v1824 = vunpack.c.l.s4 1983009808
        %v1825 = vunpack.c.0.s8 %v1824
        %v1826 = vlaneseq
        %v1827 = vshrl.u32 %v1826, 7
        %v1828 = vsub.s32 %v1825, %v1827
        %v1829 = vrot.slane %v1822, %v1828
        %v1830 = vcombine.low %v1802, %v1809
        %v1832 = vunpack.c.l.s4 1983009808
        %v1833 = vunpack.c.0.s8 %v1832
        %v1834 = vlaneseq
        %v1835 = vshrl.u32 %v1834, 7
        %v1836 = vsub.s32 %v1833, %v1835
        %v1837 = vrot.slane %v1830, %v1836
        %v1838 = vcombine.low %v1812, %v1813
        %v1840 = vunpack.c.l.s4 1983009808
        %v1841 = vunpack.c.0.s8 %v1840
        %v1842 = vlaneseq
        %v1843 = vshrl.u32 %v1842, 7
        %v1844 = vsub.s32 %v1841, %v1843
        %v1845 = vrot.slane %v1838, %v1844
        %v1846 = vcombine.low %v1821, %v1829
        %v1847 = vcombine.high %v1821, %v1829
        %v1849 = vunpack.c.l.s4 1934713408
        %v1850 = vunpack.c.0.s8 %v1849
        %v1851 = vlaneseq
        %v1852 = vshrl.u32 %v1851, 7
        %v1853 = vsub.s32 %v1850, %v1852
        %v1854 = vrot.slane %v1846, %v1853
        %v1856 = vunpack.c.l.s4 1934713408
        %v1857 = vunpack.c.0.s8 %v1856
        %v1858 = vlaneseq
        %v1859 = vshrl.u32 %v1858, 7
        %v1860 = vsub.s32 %v1857, %v1859
        %v1861 = vrot.slane %v1847, %v1860
        %v1862 = vcombine.low %v1837, %v1845
        %v1863 = vcombine.high %v1837, %v1845
        %v1865 = vunpack.c.l.s4 1934713408
        %v1866 = vunpack.c.0.s8 %v1865
        %v1867 = vlaneseq
        %v1868 = vshrl.u32 %v1867, 7
        %v1869 = vsub.s32 %v1866, %v1868
        %v1870 = vrot.slane %v1862, %v1869
        %v1872 = vunpack.c.l.s4 1934713408
        %v1873 = vunpack.c.0.s8 %v1872
        %v1874 = vlaneseq
        %v1875 = vshrl.u32 %v1874, 7
        %v1876 = vsub.s32 %v1873, %v1875
        %v1877 = vrot.slane %v1863, %v1876
        %v1878 = vcombine.low %v1854, %v1870
        %v1879 = vcombine.high %v1854, %v1870
        %v1880 = vcombine.low %v1861, %v1877
        %v1881 = vcombine.high %v1861, %v1877
        %1883 = vrot.lane.b32.xlu0 %v1879, 8
        %v1884 = vpop.permute.xlu0 %1883
        %1887 = vrot.lane.b32.xlu0 %v1880, 16
        %v1888 = vpop.permute.xlu0 %1887
        %1891 = vrot.lane.b32.xlu0 %v1881, 24
        %v1892 = vpop.permute.xlu0 %1891
        %v1894 = vsel %vm1299, %v1878, %v1884
        %vm1895 = vcmask 130048
        %v1896 = vsel %vm1895, %v1894, %v1888
        %vm1897 = vcmask 195584
        %v1898 = vsel %vm1897, %v1896, %v1892
        %v1899 = vpack.c.bf16 %v1898, %v1898
        %v1900 = vld [vmem:[#allocation14] sm:$0xf]
        %v1901 = vld [vmem:[#allocation14 + $0x4] sm:$0xf]
        %v1902 = vld [vmem:[#allocation14 + $0x8] sm:$0xf]
        %v1903 = vld [vmem:[#allocation14 + $0xc] sm:$0xf]
        %v1904 = vld [vmem:[#allocation15] sm:$0x1]
        %v1906 = vlaneseq
        %v1907 = vshrl.u32 %v1906, 7
        %v1908 = vsub.s32 0, %v1907
        %v1909 = vrot.slane %v1904, %v1908
        %v1915 = vunpack.c.l.b16 %v1900
        %v1916 = vunpack.c.l.b16 %v1901
        %v1917 = vunpack.c.l.b16 %v1902
        %v1918 = vunpack.c.l.b16 %v1903
        %v1919 = vpack.c.b16 %v1916, %v1915
        %v1920 = vpack.c.b16 %v1918, %v1917
        %v1924 = vsel %vm804, %v1899, 0
        %1926 = vmatprep.subr.bf16.mxu0 0
        %1927 = vmatpush1.bf16.msra.mxu0 %v1919
        %1928 = vmatprep.subr.bf16.mxu0 0
        %1929 = vmatpush1.bf16.msra.mxu0 %v1920
        %1930 = vmatprep.subr.bf16.mxu0 0
        %1931 = vmatpush1.bf16.msra.mxu0 0
        %1932 = vmatprep.subr.bf16.mxu0 0
        %1933 = vmatpush1.bf16.msra.mxu0 0
        %1934 = vmatprep.subr.bf16.mxu0 0
        %1935 = vmatpush1.bf16.msra.mxu0 0
        %1936 = vmatprep.subr.bf16.mxu0 0
        %1937 = vmatpush1.bf16.msra.mxu0 0
        %1938 = vmatprep.subr.bf16.mxu0 0
        %1939 = vmatpush1.bf16.msra.mxu0 0
        %1940 = vmatprep.subr.bf16.mxu0 0
        %1941 = vmatpush1.bf16.msra.mxu0 0
        %1942 = vmatprep.subr.bf16.mxu0 0
        %1943 = vmatpush1.bf16.msra.mxu0 0
        %1944 = vmatprep.subr.bf16.mxu0 0
        %1945 = vmatpush1.bf16.msra.mxu0 0
        %1946 = vmatprep.subr.bf16.mxu0 0
        %1947 = vmatpush1.bf16.msra.mxu0 0
        %1948 = vmatprep.subr.bf16.mxu0 0
        %1949 = vmatpush1.bf16.msra.mxu0 0
        %1950 = vmatprep.subr.bf16.mxu0 0
        %1951 = vmatpush1.bf16.msra.mxu0 0
        %1952 = vmatprep.subr.bf16.mxu0 0
        %1953 = vmatpush1.bf16.msra.mxu0 0
        %1954 = vmatprep.subr.bf16.mxu0 0
        %1955 = vmatpush1.bf16.msra.mxu0 0
        %1956 = vmatprep.subr.bf16.mxu0 0
        %1957 = vmatpush1.bf16.msra.mxu0 0
        %1958 = vmatprep.mubr.bf16.mxu0 0
        %1959 = vmatmul.mubr.bf16.gmra.mrb[0].mxu0 %v1924
        %v1960 = vpop.f32.mrb[0].mxu0
        %v1961 = vadd.f32 %v1909, %v1960
        %v1962 = vpop.f32.mrb[0].mxu0
        %v1963 = vpop.f32.mrb[0].mxu0
        %v1964 = vpop.f32.mrb[0].mxu0
        %1965 = vdwg.mxu0
        %v1966 = vadd.f32 %v1961, %v779
        %v1967 = vsel %vm804, %v1966, 0.0
        %1968 = vadd.xlane.f32.xlu0 %v1967
        %v1969 = vpop.xlane.xlu0 %1968
        %v1970 = vrcp.pop 32.0
        %v1971 = vmul.f32 %v1969, %v1970
        %v1972 = vsub.f32 %v1966, %v1971
        %v1973 = vmul.f32 %v1972, %v1972
        %v1974 = vsel %vm804, %v1973, 0.0
        %1975 = vadd.xlane.f32.xlu0 %v1974
        %v1976 = vpop.xlane.xlu0 %1975
        %v1977 = vmul.f32 %v1976, %v1970
        %v1978 = vadd.f32 %v1977, 1e-05
        %v1979 = vrsqrt.pop %v1978
        %v1980 = vmul.f32 %v1972, %v1979
        %v1981 = vld [vmem:[#allocation17] sm:$0x1]
        %v1983 = vlaneseq
        %v1984 = vshrl.u32 %v1983, 7
        %v1985 = vsub.s32 0, %v1984
        %v1986 = vrot.slane %v1981, %v1985
        %v1988 = vmul.f32 %v1980, %v1986
        %v1989 = vld [vmem:[#allocation18] sm:$0x1]
        %v1991 = vlaneseq
        %v1992 = vshrl.u32 %v1991, 7
        %v1993 = vsub.s32 0, %v1992
        %v1994 = vrot.slane %v1989, %v1993
        %v1996 = vadd.f32 %v1988, %v1994
        %1997 = vst.msk [vmem:[%s619] sm:$0xff] %vm804, %v1996
        %s1998 = sand.u32 %s297, 1
        %s1999 = scalar_lea.sflag [#allocation5], %s1998
        %s2000 = sand.u32 %s297, 1
        %s2001 = smul.addr %s2000, 8
        %s2002 = scalar_lea.vmem [#allocation20], %s2001
        %s2003 = sand.u32 %s325, 1
        %s2004 = scalar_lea.sflag [#allocation22], %s2003
        %s2005 = sand.u32 %s325, 1
        %s2006 = smul.addr %s2005, 16
        %s2007 = scalar_lea.vmem [#allocation21], %s2006
        // Predicated region
        $region105: #{tpu_custom_call.1} parent=59 // pred_check
          %p2008 = pneg %p307
        $region106: #{tpu_custom_call.1} parent=59 // pred_check_branch
          %2010 = sbr.rel (%p2008) target = $region108
        $region107: #{tpu_custom_call.1} parent=59 // pred_region
          %s2012 = ssub.s32 128, 128
          %2013 = vsyncadd %s1999, %s2012
          %s2014 = sadd.s32 %s46, %s45
          %s2015 = smul.addr %s2014, 128
          %s2016 = scalar_lea.hbm %s10, %s2015
          %s2018 = sshll.u32 %s2002, 4
          %s2019 = int_to_ptr.vmem [resolvable:$true] %s2018
          %2021 = dma.vmem_to_hbm [thread:$0]  %s2019, 128, %s2016, %s1999
        $region108: #{tpu_custom_call.1} parent=59 // pred_fallthru
          _
        // Predicated region
        $region109: #{tpu_custom_call.1} parent=59 // pred_check
          %p2022 = pneg %p335
        $region110: #{tpu_custom_call.1} parent=59 // pred_check_branch
          %2024 = sbr.rel (%p2022) target = $region112
        $region111: #{tpu_custom_call.1} parent=59 // pred_region
          %s2026 = ssub.s32 256, 256
          %2027 = vsyncadd %s2004, %s2026
          %s2028 = smul.addr %s45, 4
          %s2029 = sadd.s32 %s46, %s2028
          %s2030 = smul.addr %s2029, 64
          %s2031 = scalar_lea.hbm %s11, %s2030
          %s2032 = sshll.u32 %s2007, 4
          %s2033 = int_to_ptr.vmem [resolvable:$true] %s2032
          %2038 = dma.vmem_to_hbm [thread:$0]  %s2033, 256, %s2031, %s2004, 64, 64, 4
        $region112: #{tpu_custom_call.1} parent=59 // pred_fallthru
          _
      $region60: #{tpu_custom_call.1} parent=5 // pred_fallthru
        _
      %p2039 = scmp.le.s32.totalorder 2, %s36
      // Predicated region
      $region113: #{tpu_custom_call.1} parent=5 // pred_check
        %p2040 = pneg %p2039
      $region114: #{tpu_custom_call.1} parent=5 // pred_check_branch
        %2042 = sbr.rel (%p2040) target = $region116
      $region115: #{tpu_custom_call.1} parent=5 // pred_region
        %s2043 = ssub.s32 %s36, 2
        // Predicated region
        $region117: #{tpu_custom_call.1} parent=115 // pred_check
          %p2044 = pneg %p313
        $region118: #{tpu_custom_call.1} parent=115 // pred_check_branch
          %2046 = sbr.rel (%p2044) target = $region120
        $region119: #{tpu_custom_call.1} parent=115 // pred_region
          %s2047 = sand.u32 %s298, 1
          %s2048 = scalar_lea.sflag [#allocation5], %s2047
          %s2049 = sand.u32 %s298, 1
          %s2050 = smul.addr %s2049, 8
          %s2051 = scalar_lea.vmem [#allocation20], %s2050
          %2052 = dma.done %s2048, 128
        $region120: #{tpu_custom_call.1} parent=115 // pred_fallthru
          _
        // Predicated region
        $region121: #{tpu_custom_call.1} parent=115 // pred_check
          %p2053 = pneg %p341
        $region122: #{tpu_custom_call.1} parent=115 // pred_check_branch
          %2055 = sbr.rel (%p2053) target = $region124
        $region123: #{tpu_custom_call.1} parent=115 // pred_region
          %s2056 = sand.u32 %s326, 1
          %s2057 = scalar_lea.sflag [#allocation22], %s2056
          %s2058 = sand.u32 %s326, 1
          %s2059 = smul.addr %s2058, 16
          %s2060 = scalar_lea.vmem [#allocation21], %s2059
          %2061 = dma.done %s2057, 256
        $region124: #{tpu_custom_call.1} parent=115 // pred_fallthru
          _
      $region116: #{tpu_custom_call.1} parent=5 // pred_fallthru
        _
    $region6: #{tpu_custom_call.1} parent=1 // loop_footer
      %s40 = sadd.s32 1, %s36
    $region7: #{tpu_custom_call.1} parent=1 // loop_footer_branch
      %35 = sbr.rel target = $region3
    $region8: #{tpu_custom_call.1} parent=1 // loop_exit
      _
    %2062 = vsyncpa [#allocation4], 1
    %s2063 = scalar_lea.sflag [#allocation4], 1
    %2064 = vsyncpa %s2063, 1
    %2065 = vsyncpa [#allocation7], 1
    %s2066 = scalar_lea.sflag [#allocation7], 1
    %2067 = vsyncpa %s2066, 1
    %2068 = vsyncpa [#allocation10], 1
    %s2069 = scalar_lea.sflag [#allocation10], 1
    %2070 = vsyncpa %s2069, 1
    %2071 = vsyncpa [#allocation13], 1
    %2072 = vsyncpa [#allocation16], 1
    %2073 = vsyncpa [#allocation19], 1
    %2074 = vsyncpa [#allocation5], 1
    %s2075 = scalar_lea.sflag [#allocation5], 1
    %2076 = vsyncpa %s2075, 1
    %2077 = vsyncpa [#allocation22], 1
    %s2078 = scalar_lea.sflag [#allocation22], 1
    %2079 = vsyncpa %s2078, 1

</llo_original>
